<compile_context>
chip_gen: v6e
topology: v6e:2x2x1
jax: 0.10.0
libtpu: 0.0.40
codegen_flags: <defaults>
</compile_context>

<pallas_src>
import functools

import jax
import jax.numpy as jnp
from jax.experimental import pallas as pl
from jax.experimental.pallas import tpu as pltpu


def _round_up(n, m):
    return ((n + m - 1) // m) * m


def _rnn_chunk_kernel(x_ref, h0_ref, wx_ref, wh_ref, b_ref, wo2_ref, bo2_ref,
                      logp_ref, h_ref, *, t_chunk, hp):
    """Processes `t_chunk` timesteps per grid iteration (grid axis 0 = chunks)."""
    c = pl.program_id(0)

    # Resident hidden block; initialise from h0 on the first chunk only.
    @pl.when(c == 0)
    def _init():
        h_ref[...] = h0_ref[...]

    bp = h_ref.shape[0]
    # Hoist bias loads + broadcasts out of the per-timestep loop.
    b = jnp.broadcast_to(b_ref[...], (bp, b_ref.shape[1]))       # (BP, 2*HP)
    bo2 = jnp.broadcast_to(bo2_ref[...], (bp, bo2_ref.shape[1]))  # (BP, OP)

    h = h_ref[...]                                                # (BP, HP)

    # Static (fully unrolled) loop over the chunk: t_chunk is small and
    # compile-time, so static ref indices keep every access lane/sublane dense
    # and give the LLO scheduler full visibility of the serial h->h chain.
    for t in range(t_chunk):
        x = x_ref[t]                                              # (BP, I)

        # Fused i2h / i2o heads: lanes [0, HP) -> hidden head,
        # lanes [HP, 2*HP) -> output head.  Two MXU dots per step.
        zh = (jnp.dot(x, wx_ref[...], preferred_element_type=jnp.float32)
              + jnp.dot(h, wh_ref[...], preferred_element_type=jnp.float32)
              + b)                                                # (BP, 2*HP)
        h_new = zh[:, :hp]                                        # lane-aligned
        out = zh[:, hp:]                                          # lane-aligned

        # Classifier head; pad columns of bo2 are -1e30 so padded logits are
        # exactly -1e30 (wo2 pad columns are zero) -> no per-step masking.
        logits = (jnp.dot(out, wo2_ref[...],
                          preferred_element_type=jnp.float32) + bo2)  # (BP, OP)

        # Numerically-stable LogSoftmax (pad lanes contribute exp(-1e30-m)=0).
        m = jnp.max(logits, axis=-1, keepdims=True)
        lse = jnp.log(jnp.sum(jnp.exp(logits - m), axis=-1, keepdims=True)) + m
        logp_ref[t] = logits - lse

        h = h_new

    h_ref[...] = h


def prepare_params(params, input_size, hidden_size, output_size):
    """One-time repack of the nn.Linear parameters (do NOT call per step).

    Splits the cat-Linears into x / h parts, transposes to (in, out), stacks
    the i2h / i2o heads along the output (lane) dim, pads the hidden and
    output lane dims up to 128-multiples (zero weights), and bakes the
    invalid-class mask into the padded classifier bias (-1e30).
    """
    I, H, O = input_size, hidden_size, output_size
    HP = _round_up(H, 128)
    OP = _round_up(O, 128)

    w_i2h, b_i2h = params["i2h"]      # (H, I+H), (H,)
    w_i2o, b_i2o = params["i2o"]      # (H, I+H), (H,)
    w_i2o2, b_i2o2 = params["i2o_2"]  # (O, H),  (O,)

    wxh = jnp.transpose(w_i2h[:, :I])   # (I, H)
    whh = jnp.transpose(w_i2h[:, I:])   # (H, H)
    wxo = jnp.transpose(w_i2o[:, :I])   # (I, H)
    who = jnp.transpose(w_i2o[:, I:])   # (H, H)

    wx = (jnp.zeros((I, 2 * HP), jnp.float32)
          .at[:, :H].set(wxh)
          .at[:, HP:HP + H].set(wxo))
    wh = (jnp.zeros((HP, 2 * HP), jnp.float32)
          .at[:H, :H].set(whh)
          .at[:H, HP:HP + H].set(who))
    b = (jnp.zeros((1, 2 * HP), jnp.float32)
         .at[0, :H].set(b_i2h)
         .at[0, HP:HP + H].set(b_i2o))

    wo2 = jnp.zeros((HP, OP), jnp.float32).at[:H, :O].set(jnp.transpose(w_i2o2))
    # Finite -1e30 sentinel on pad columns (keeps max / lse well-defined).
    bo2 = jnp.full((1, OP), -1e30, jnp.float32).at[0, :O].set(b_i2o2)

    return {"wx": wx, "wh": wh, "b": b, "wo2": wo2, "bo2": bo2}


@functools.partial(jax.jit,
                   static_argnames=("hidden_size", "output_size", "t_chunk"))
def rnn_multi_1layer_sequence(xs, h0, packed, *, hidden_size, output_size,
                              t_chunk=None):
    """Run the full recurrence over a sequence in one pallas_call.

    xs: (T, B, input_size) f32, h0: (B, hidden_size) f32.
    Returns (log_probs (T, B, output_size), final_hidden (B, hidden_size)).
    Each timestep reproduces RNN_multi_1ayer.forward exactly.
    """
    T, B, I = xs.shape
    HP = packed["wh"].shape[0]
    HP2 = packed["wx"].shape[1]
    OP = packed["wo2"].shape[1]
    BP = _round_up(B, 8)            # sublane-dense batch

    # Timesteps per grid step: whole sequence if small, else the largest
    # divisor of T that keeps the unrolled chunk modest.
    if t_chunk is None:
        if T <= 32:
            tt = T
        else:
            tt = 1
            for d in range(2, 33):
                if T % d == 0:
                    tt = d
    else:
        tt = t_chunk
    assert T % tt == 0, "t_chunk must divide the sequence length"

    xs_p = jnp.zeros((T, BP, I), jnp.float32).at[:, :B, :].set(xs)
    h0p = jnp.zeros((BP, HP), jnp.float32).at[:B, :hidden_size].set(h0)

    kernel = functools.partial(_rnn_chunk_kernel, t_chunk=tt, hp=HP)

    grid_spec = pltpu.PrefetchScalarGridSpec(
        num_scalar_prefetch=0,
        grid=(T // tt,),
        in_specs=[
            pl.BlockSpec((tt, BP, I), lambda c: (c, 0, 0)),   # x chunk (streamed)
            pl.BlockSpec((BP, HP), lambda c: (0, 0)),         # h0      (resident)
            pl.BlockSpec((I, HP2), lambda c: (0, 0)),         # Wx      (resident)
            pl.BlockSpec((HP, HP2), lambda c: (0, 0)),        # Wh      (resident)
            pl.BlockSpec((1, HP2), lambda c: (0, 0)),         # b       (resident)
            pl.BlockSpec((HP, OP), lambda c: (0, 0)),         # Wo2     (resident)
            pl.BlockSpec((1, OP), lambda c: (0, 0)),          # bo2     (resident)
        ],
        out_specs=(
            pl.BlockSpec((tt, BP, OP), lambda c: (c, 0, 0)),  # logp chunk (streamed)
            pl.BlockSpec((BP, HP), lambda c: (0, 0)),         # hidden     (resident)
        ),
    )

    logp_pad, h_pad = pl.pallas_call(
        kernel,
        out_shape=(
            jax.ShapeDtypeStruct((T, BP, OP), jnp.float32),
            jax.ShapeDtypeStruct((BP, HP), jnp.float32),
        ),
        grid_spec=grid_spec,
        input_output_aliases={1: 1},   # h0p buffer donated to the hidden output
        compiler_params=pltpu.CompilerParams(
            dimension_semantics=("arbitrary",)),   # h->h recurrence is serial
    )(xs_p, h0p, packed["wx"], packed["wh"], packed["b"],
      packed["wo2"], packed["bo2"])

    return logp_pad[:, :B, :output_size], h_pad[:B, :hidden_size]


def rnn_multi_1layer_forward(x, h, packed, *, hidden_size, output_size):
    """Single step, matching RNN_multi_1ayer.forward(input, hidden)."""
    logp, h_new = rnn_multi_1layer_sequence(
        x[None], h, packed, hidden_size=hidden_size, output_size=output_size)
    return logp[0], h_new


def init_params(key, input_size, hidden_size, output_size):
    """Deterministic synthetic parameters matching nn.Linear shapes."""
    ks = jax.random.split(key, 6)

    def linear(kw, kb, fan_in, fan_out):
        bound = 1.0 / jnp.sqrt(jnp.float32(fan_in))
        w = jax.random.uniform(kw, (fan_out, fan_in), jnp.float32, -bound, bound)
        b = jax.random.uniform(kb, (fan_out,), jnp.float32, -bound, bound)
        return w, b

    return {
        "i2h": linear(ks[0], ks[1], input_size + hidden_size, hidden_size),
        "i2o": linear(ks[2], ks[3], input_size + hidden_size, hidden_size),
        "i2o_2": linear(ks[4], ks[5], hidden_size, output_size),
    }


def _reference_forward(x, h, params):
    """Pure-JAX reference mirroring the PyTorch module exactly (one step)."""
    w_i2h, b_i2h = params["i2h"]
    w_i2o, b_i2o = params["i2o"]
    w_i2o2, b_i2o2 = params["i2o_2"]
    combined = jnp.concatenate([x, h], axis=1)
    hidden = combined @ w_i2h.T + b_i2h
    output = combined @ w_i2o.T + b_i2o
    logits = output @ w_i2o2.T + b_i2o2
    return jax.nn.log_softmax(logits, axis=1), hidden


if __name__ == "__main__":
    B, INPUT_SIZE, HIDDEN_SIZE, OUTPUT_SIZE, SEQ_LEN = 2, 16, 32, 8, 8

    key = jax.random.PRNGKey(0)
    kx, kp = jax.random.split(key, 2)
    xs = jax.random.normal(kx, (SEQ_LEN, B, INPUT_SIZE), jnp.float32)
    h0 = jnp.zeros((B, HIDDEN_SIZE), jnp.float32)  # module.initHidden() semantics
    params = init_params(kp, INPUT_SIZE, HIDDEN_SIZE, OUTPUT_SIZE)

    # One-time parameter repack (hoisted out of the per-step path).
    packed = prepare_params(params, INPUT_SIZE, HIDDEN_SIZE, OUTPUT_SIZE)

    # Whole-sequence recurrence in a single pallas_call (one grid step here).
    logp_seq, h_final = rnn_multi_1layer_sequence(
        xs, h0, packed, hidden_size=HIDDEN_SIZE, output_size=OUTPUT_SIZE)
    jax.block_until_ready((logp_seq, h_final))

    # Reference: unrolled per-step module forward.
    ref_logps = []
    h_ref = h0
    for t in range(SEQ_LEN):
        lp, h_ref = _reference_forward(xs[t], h_ref, params)
        ref_logps.append(lp)
    ref_logp_seq = jnp.stack(ref_logps, axis=0)

    assert logp_seq.shape == (SEQ_LEN, B, OUTPUT_SIZE)
    assert h_final.shape == (B, HIDDEN_SIZE)
    assert jnp.allclose(logp_seq, ref_logp_seq, atol=1e-5, rtol=1e-5)
    assert jnp.allclose(h_final, h_ref, atol=1e-5, rtol=1e-5)

    # Single-step API (exact RNN_multi_1ayer.forward signature semantics).
    logp1, h1 = rnn_multi_1layer_forward(
        xs[0], h0, packed, hidden_size=HIDDEN_SIZE, output_size=OUTPUT_SIZE)
    ref_logp1, ref_h1 = _reference_forward(xs[0], h0, params)
    assert jnp.allclose(logp1, ref_logp1, atol=1e-5, rtol=1e-5)
    assert jnp.allclose(h1, ref_h1, atol=1e-5, rtol=1e-5)

    print("KERNEL_OK")
</pallas_src>

<mosaic_0001>
module attributes {stable_mosaic.version = 11 : i64} {
  func.func @_rnn_chunk_kernel(%arg0: i32, %arg1: memref<8x8x16xf32, #tpu.memory_space<vmem>>, %arg2: memref<8x128xf32, #tpu.memory_space<vmem>>, %arg3: memref<16x256xf32, #tpu.memory_space<vmem>>, %arg4: memref<128x256xf32, #tpu.memory_space<vmem>>, %arg5: memref<1x256xf32, #tpu.memory_space<vmem>>, %arg6: memref<128x128xf32, #tpu.memory_space<vmem>>, %arg7: memref<1x128xf32, #tpu.memory_space<vmem>>, %arg8: memref<8x8x128xf32, #tpu.memory_space<vmem>>, %arg9: memref<8x128xf32, #tpu.memory_space<vmem>>) attributes {dimension_semantics = [#tpu.dimension_semantics<arbitrary>], iteration_bounds = array<i64: 1>, scalar_prefetch = 0 : i64, scratch_operands = 0 : i64, tpu.core_type = #tpu.core_type<tc>, window_params = [{transform_indices = @transform_0, window_bounds = array<i64: 8, 8, 16>}, {pipeline_mode = #tpu.pipeline_mode<synchronous>, transform_indices = @transform_1, window_bounds = array<i64: 8, 128>}, {pipeline_mode = #tpu.pipeline_mode<synchronous>, transform_indices = @transform_2, window_bounds = array<i64: 16, 256>}, {pipeline_mode = #tpu.pipeline_mode<synchronous>, transform_indices = @transform_3, window_bounds = array<i64: 128, 256>}, {pipeline_mode = #tpu.pipeline_mode<synchronous>, transform_indices = @transform_4, window_bounds = array<i64: 1, 256>}, {pipeline_mode = #tpu.pipeline_mode<synchronous>, transform_indices = @transform_5, window_bounds = array<i64: 128, 128>}, {pipeline_mode = #tpu.pipeline_mode<synchronous>, transform_indices = @transform_6, window_bounds = array<i64: 1, 128>}, {transform_indices = @transform_7, window_bounds = array<i64: 8, 8, 128>}, {pipeline_mode = #tpu.pipeline_mode<synchronous>, transform_indices = @transform_8, window_bounds = array<i64: 8, 128>}]} {
    %c0_i32 = arith.constant 0 : i32
    %0 = arith.cmpi eq, %arg0, %c0_i32 : i32
    %1 = arith.extui %0 : i1 to i32
    %c0_i32_0 = arith.constant 0 : i32
    %2 = arith.cmpi ne, %1, %c0_i32_0 : i32
    scf.if %2 {
      %c0_136 = arith.constant 0 : index
      %c0_137 = arith.constant 0 : index
      %227 = vector.load %arg2[%c0_136, %c0_137] : memref<8x128xf32, #tpu.memory_space<vmem>>, vector<8x128xf32>
      %c0_138 = arith.constant 0 : index
      %c0_139 = arith.constant 0 : index
      %228 = vector.load %arg9[%c0_138, %c0_139] : memref<8x128xf32, #tpu.memory_space<vmem>>, vector<8x128xf32>
      tpu.vector_store %arg9[%c0_138, %c0_139], %227 {strides = array<i32>} : memref<8x128xf32, #tpu.memory_space<vmem>>, vector<8x128xf32>,
    } else {
    }
    %c0 = arith.constant 0 : index
    %c0_1 = arith.constant 0 : index
    %3 = vector.load %arg5[%c0, %c0_1] : memref<1x256xf32, #tpu.memory_space<vmem>>, vector<1x256xf32>
    %4 = vector.shape_cast %3 : vector<1x256xf32> to vector<1x256xf32>
    %5 = vector.broadcast %4 : vector<1x256xf32> to vector<8x256xf32>
    %c0_2 = arith.constant 0 : index
    %c0_3 = arith.constant 0 : index
    %6 = vector.load %arg7[%c0_2, %c0_3] : memref<1x128xf32, #tpu.memory_space<vmem>>, vector<1x128xf32>
    %7 = vector.shape_cast %6 : vector<1x128xf32> to vector<1x128xf32>
    %8 = vector.broadcast %7 : vector<1x128xf32> to vector<8x128xf32>
    %c0_4 = arith.constant 0 : index
    %c0_5 = arith.constant 0 : index
    %9 = vector.load %arg9[%c0_4, %c0_5] : memref<8x128xf32, #tpu.memory_space<vmem>>, vector<8x128xf32>
    %c0_6 = arith.constant 0 : index
    %c0_7 = arith.constant 0 : index
    %c0_8 = arith.constant 0 : index
    %10 = vector.load %arg1[%c0_6, %c0_7, %c0_8] : memref<8x8x16xf32, #tpu.memory_space<vmem>>, vector<1x8x16xf32>
    %11 = vector.shape_cast %10 : vector<1x8x16xf32> to vector<8x16xf32>
    %c0_9 = arith.constant 0 : index
    %c0_10 = arith.constant 0 : index
    %12 = vector.load %arg3[%c0_9, %c0_10] : memref<16x256xf32, #tpu.memory_space<vmem>>, vector<16x256xf32>
    %cst = arith.constant dense<0.000000e+00> : vector<8x256xf32>
    %13 = tpu.matmul %11, %12, %cst {dimension_numbers = #tpu.dot_dimension_numbers<[1], [0], [0], [1], [0, 0, 1, 1], [], []>} : vector<8x16xf32>, vector<16x256xf32>, vector<8x256xf32> -> vector<8x256xf32>
    %c0_11 = arith.constant 0 : index
    %c0_12 = arith.constant 0 : index
    %14 = vector.load %arg4[%c0_11, %c0_12] : memref<128x256xf32, #tpu.memory_space<vmem>>, vector<128x256xf32>
    %cst_13 = arith.constant dense<0.000000e+00> : vector<8x256xf32>
    %15 = tpu.matmul %9, %14, %cst_13 {dimension_numbers = #tpu.dot_dimension_numbers<[1], [0], [0], [1], [0, 0, 1, 1], [], []>} : vector<8x128xf32>, vector<128x256xf32>, vector<8x256xf32> -> vector<8x256xf32>
    %16 = arith.addf %13, %15 : vector<8x256xf32>
    %17 = arith.addf %16, %5 : vector<8x256xf32>
    %18 = vector.extract_strided_slice %17 {offsets = [0, 0], sizes = [8, 128], strides = [1, 1]} : vector<8x256xf32> to vector<8x128xf32>
    %19 = vector.extract_strided_slice %17 {offsets = [0, 128], sizes = [8, 128], strides = [1, 1]} : vector<8x256xf32> to vector<8x128xf32>
    %c0_14 = arith.constant 0 : index
    %c0_15 = arith.constant 0 : index
    %20 = vector.load %arg6[%c0_14, %c0_15] : memref<128x128xf32, #tpu.memory_space<vmem>>, vector<128x128xf32>
    %cst_16 = arith.constant dense<0.000000e+00> : vector<8x128xf32>
    %21 = tpu.matmul %19, %20, %cst_16 {dimension_numbers = #tpu.dot_dimension_numbers<[1], [0], [0], [1], [0, 0, 1, 1], [], []>} : vector<8x128xf32>, vector<128x128xf32>, vector<8x128xf32> -> vector<8x128xf32>
    %22 = arith.addf %21, %8 : vector<8x128xf32>
    %cst_17 = arith.constant dense<0xFF800000> : vector<8xf32>
    %23 = vector.multi_reduction <maximumf>, %22, %cst_17 [1] : vector<8x128xf32> to vector<8xf32>
    %24 = vector.shape_cast %23 : vector<8xf32> to vector<8x1xf32>
    %25 = vector.broadcast %24 : vector<8x1xf32> to vector<8x128xf32>
    %26 = arith.subf %22, %25 : vector<8x128xf32>
    %27 = math.exp %26 : vector<8x128xf32>
    %cst_18 = arith.constant dense<0.000000e+00> : vector<8xf32>
    %28 = vector.multi_reduction <add>, %27, %cst_18 [1] : vector<8x128xf32> to vector<8xf32>
    %29 = vector.shape_cast %28 : vector<8xf32> to vector<8x1xf32>
    %30 = math.log %29 : vector<8x1xf32>
    %31 = arith.addf %30, %24 : vector<8x1xf32>
    %32 = vector.broadcast %31 : vector<8x1xf32> to vector<8x128xf32>
    %33 = arith.subf %22, %32 : vector<8x128xf32>
    %c0_19 = arith.constant 0 : index
    %c0_20 = arith.constant 0 : index
    %c0_21 = arith.constant 0 : index
    %34 = vector.load %arg8[%c0_19, %c0_20, %c0_21] : memref<8x8x128xf32, #tpu.memory_space<vmem>>, vector<1x8x128xf32>
    %35 = vector.shape_cast %34 : vector<1x8x128xf32> to vector<8x128xf32>
    %36 = vector.shape_cast %33 : vector<8x128xf32> to vector<1x8x128xf32>
    tpu.vector_store %arg8[%c0_19, %c0_20, %c0_21], %36 {strides = array<i32>} : memref<8x8x128xf32, #tpu.memory_space<vmem>>, vector<1x8x128xf32>,
    %c1 = arith.constant 1 : index
    %c0_22 = arith.constant 0 : index
    %c0_23 = arith.constant 0 : index
    %37 = vector.load %arg1[%c1, %c0_22, %c0_23] : memref<8x8x16xf32, #tpu.memory_space<vmem>>, vector<1x8x16xf32>
    %38 = vector.shape_cast %37 : vector<1x8x16xf32> to vector<8x16xf32>
    %c0_24 = arith.constant 0 : index
    %c0_25 = arith.constant 0 : index
    %39 = vector.load %arg3[%c0_24, %c0_25] : memref<16x256xf32, #tpu.memory_space<vmem>>, vector<16x256xf32>
    %cst_26 = arith.constant dense<0.000000e+00> : vector<8x256xf32>
    %40 = tpu.matmul %38, %39, %cst_26 {dimension_numbers = #tpu.dot_dimension_numbers<[1], [0], [0], [1], [0, 0, 1, 1], [], []>} : vector<8x16xf32>, vector<16x256xf32>, vector<8x256xf32> -> vector<8x256xf32>
    %c0_27 = arith.constant 0 : index
    %c0_28 = arith.constant 0 : index
    %41 = vector.load %arg4[%c0_27, %c0_28] : memref<128x256xf32, #tpu.memory_space<vmem>>, vector<128x256xf32>
    %cst_29 = arith.constant dense<0.000000e+00> : vector<8x256xf32>
    %42 = tpu.matmul %18, %41, %cst_29 {dimension_numbers = #tpu.dot_dimension_numbers<[1], [0], [0], [1], [0, 0, 1, 1], [], []>} : vector<8x128xf32>, vector<128x256xf32>, vector<8x256xf32> -> vector<8x256xf32>
    %43 = arith.addf %40, %42 : vector<8x256xf32>
    %44 = arith.addf %43, %5 : vector<8x256xf32>
    %45 = vector.extract_strided_slice %44 {offsets = [0, 0], sizes = [8, 128], strides = [1, 1]} : vector<8x256xf32> to vector<8x128xf32>
    %46 = vector.extract_strided_slice %44 {offsets = [0, 128], sizes = [8, 128], strides = [1, 1]} : vector<8x256xf32> to vector<8x128xf32>
    %c0_30 = arith.constant 0 : index
    %c0_31 = arith.constant 0 : index
    %47 = vector.load %arg6[%c0_30, %c0_31] : memref<128x128xf32, #tpu.memory_space<vmem>>, vector<128x128xf32>
    %cst_32 = arith.constant dense<0.000000e+00> : vector<8x128xf32>
    %48 = tpu.matmul %46, %47, %cst_32 {dimension_numbers = #tpu.dot_dimension_numbers<[1], [0], [0], [1], [0, 0, 1, 1], [], []>} : vector<8x128xf32>, vector<128x128xf32>, vector<8x128xf32> -> vector<8x128xf32>
    %49 = arith.addf %48, %8 : vector<8x128xf32>
    %cst_33 = arith.constant dense<0xFF800000> : vector<8xf32>
    %50 = vector.multi_reduction <maximumf>, %49, %cst_33 [1] : vector<8x128xf32> to vector<8xf32>
    %51 = vector.shape_cast %50 : vector<8xf32> to vector<8x1xf32>
    %52 = vector.broadcast %51 : vector<8x1xf32> to vector<8x128xf32>
    %53 = arith.subf %49, %52 : vector<8x128xf32>
    %54 = math.exp %53 : vector<8x128xf32>
    %cst_34 = arith.constant dense<0.000000e+00> : vector<8xf32>
    %55 = vector.multi_reduction <add>, %54, %cst_34 [1] : vector<8x128xf32> to vector<8xf32>
    %56 = vector.shape_cast %55 : vector<8xf32> to vector<8x1xf32>
    %57 = math.log %56 : vector<8x1xf32>
    %58 = arith.addf %57, %51 : vector<8x1xf32>
    %59 = vector.broadcast %58 : vector<8x1xf32> to vector<8x128xf32>
    %60 = arith.subf %49, %59 : vector<8x128xf32>
    %c1_35 = arith.constant 1 : index
    %c0_36 = arith.constant 0 : index
    %c0_37 = arith.constant 0 : index
    %61 = vector.load %arg8[%c1_35, %c0_36, %c0_37] : memref<8x8x128xf32, #tpu.memory_space<vmem>>, vector<1x8x128xf32>
    %62 = vector.shape_cast %61 : vector<1x8x128xf32> to vector<8x128xf32>
    %63 = vector.shape_cast %60 : vector<8x128xf32> to vector<1x8x128xf32>
    tpu.vector_store %arg8[%c1_35, %c0_36, %c0_37], %63 {strides = array<i32>} : memref<8x8x128xf32, #tpu.memory_space<vmem>>, vector<1x8x128xf32>,
    %c2 = arith.constant 2 : index
    %c0_38 = arith.constant 0 : index
    %c0_39 = arith.constant 0 : index
    %64 = vector.load %arg1[%c2, %c0_38, %c0_39] : memref<8x8x16xf32, #tpu.memory_space<vmem>>, vector<1x8x16xf32>
    %65 = vector.shape_cast %64 : vector<1x8x16xf32> to vector<8x16xf32>
    %c0_40 = arith.constant 0 : index
    %c0_41 = arith.constant 0 : index
    %66 = vector.load %arg3[%c0_40, %c0_41] : memref<16x256xf32, #tpu.memory_space<vmem>>, vector<16x256xf32>
    %cst_42 = arith.constant dense<0.000000e+00> : vector<8x256xf32>
    %67 = tpu.matmul %65, %66, %cst_42 {dimension_numbers = #tpu.dot_dimension_numbers<[1], [0], [0], [1], [0, 0, 1, 1], [], []>} : vector<8x16xf32>, vector<16x256xf32>, vector<8x256xf32> -> vector<8x256xf32>
    %c0_43 = arith.constant 0 : index
    %c0_44 = arith.constant 0 : index
    %68 = vector.load %arg4[%c0_43, %c0_44] : memref<128x256xf32, #tpu.memory_space<vmem>>, vector<128x256xf32>
    %cst_45 = arith.constant dense<0.000000e+00> : vector<8x256xf32>
    %69 = tpu.matmul %45, %68, %cst_45 {dimension_numbers = #tpu.dot_dimension_numbers<[1], [0], [0], [1], [0, 0, 1, 1], [], []>} : vector<8x128xf32>, vector<128x256xf32>, vector<8x256xf32> -> vector<8x256xf32>
    %70 = arith.addf %67, %69 : vector<8x256xf32>
    %71 = arith.addf %70, %5 : vector<8x256xf32>
    %72 = vector.extract_strided_slice %71 {offsets = [0, 0], sizes = [8, 128], strides = [1, 1]} : vector<8x256xf32> to vector<8x128xf32>
    %73 = vector.extract_strided_slice %71 {offsets = [0, 128], sizes = [8, 128], strides = [1, 1]} : vector<8x256xf32> to vector<8x128xf32>
    %c0_46 = arith.constant 0 : index
    %c0_47 = arith.constant 0 : index
    %74 = vector.load %arg6[%c0_46, %c0_47] : memref<128x128xf32, #tpu.memory_space<vmem>>, vector<128x128xf32>
    %cst_48 = arith.constant dense<0.000000e+00> : vector<8x128xf32>
    %75 = tpu.matmul %73, %74, %cst_48 {dimension_numbers = #tpu.dot_dimension_numbers<[1], [0], [0], [1], [0, 0, 1, 1], [], []>} : vector<8x128xf32>, vector<128x128xf32>, vector<8x128xf32> -> vector<8x128xf32>
    %76 = arith.addf %75, %8 : vector<8x128xf32>
    %cst_49 = arith.constant dense<0xFF800000> : vector<8xf32>
    %77 = vector.multi_reduction <maximumf>, %76, %cst_49 [1] : vector<8x128xf32> to vector<8xf32>
    %78 = vector.shape_cast %77 : vector<8xf32> to vector<8x1xf32>
    %79 = vector.broadcast %78 : vector<8x1xf32> to vector<8x128xf32>
    %80 = arith.subf %76, %79 : vector<8x128xf32>
    %81 = math.exp %80 : vector<8x128xf32>
    %cst_50 = arith.constant dense<0.000000e+00> : vector<8xf32>
    %82 = vector.multi_reduction <add>, %81, %cst_50 [1] : vector<8x128xf32> to vector<8xf32>
    %83 = vector.shape_cast %82 : vector<8xf32> to vector<8x1xf32>
    %84 = math.log %83 : vector<8x1xf32>
    %85 = arith.addf %84, %78 : vector<8x1xf32>
    %86 = vector.broadcast %85 : vector<8x1xf32> to vector<8x128xf32>
    %87 = arith.subf %76, %86 : vector<8x128xf32>
    %c2_51 = arith.constant 2 : index
    %c0_52 = arith.constant 0 : index
    %c0_53 = arith.constant 0 : index
    %88 = vector.load %arg8[%c2_51, %c0_52, %c0_53] : memref<8x8x128xf32, #tpu.memory_space<vmem>>, vector<1x8x128xf32>
    %89 = vector.shape_cast %88 : vector<1x8x128xf32> to vector<8x128xf32>
    %90 = vector.shape_cast %87 : vector<8x128xf32> to vector<1x8x128xf32>
    tpu.vector_store %arg8[%c2_51, %c0_52, %c0_53], %90 {strides = array<i32>} : memref<8x8x128xf32, #tpu.memory_space<vmem>>, vector<1x8x128xf32>,
    %c3 = arith.constant 3 : index
    %c0_54 = arith.constant 0 : index
    %c0_55 = arith.constant 0 : index
    %91 = vector.load %arg1[%c3, %c0_54, %c0_55] : memref<8x8x16xf32, #tpu.memory_space<vmem>>, vector<1x8x16xf32>
    %92 = vector.shape_cast %91 : vector<1x8x16xf32> to vector<8x16xf32>
    %c0_56 = arith.constant 0 : index
    %c0_57 = arith.constant 0 : index
    %93 = vector.load %arg3[%c0_56, %c0_57] : memref<16x256xf32, #tpu.memory_space<vmem>>, vector<16x256xf32>
    %cst_58 = arith.constant dense<0.000000e+00> : vector<8x256xf32>
    %94 = tpu.matmul %92, %93, %cst_58 {dimension_numbers = #tpu.dot_dimension_numbers<[1], [0], [0], [1], [0, 0, 1, 1], [], []>} : vector<8x16xf32>, vector<16x256xf32>, vector<8x256xf32> -> vector<8x256xf32>
    %c0_59 = arith.constant 0 : index
    %c0_60 = arith.constant 0 : index
    %95 = vector.load %arg4[%c0_59, %c0_60] : memref<128x256xf32, #tpu.memory_space<vmem>>, vector<128x256xf32>
    %cst_61 = arith.constant dense<0.000000e+00> : vector<8x256xf32>
    %96 = tpu.matmul %72, %95, %cst_61 {dimension_numbers = #tpu.dot_dimension_numbers<[1], [0], [0], [1], [0, 0, 1, 1], [], []>} : vector<8x128xf32>, vector<128x256xf32>, vector<8x256xf32> -> vector<8x256xf32>
    %97 = arith.addf %94, %96 : vector<8x256xf32>
    %98 = arith.addf %97, %5 : vector<8x256xf32>
    %99 = vector.extract_strided_slice %98 {offsets = [0, 0], sizes = [8, 128], strides = [1, 1]} : vector<8x256xf32> to vector<8x128xf32>
    %100 = vector.extract_strided_slice %98 {offsets = [0, 128], sizes = [8, 128], strides = [1, 1]} : vector<8x256xf32> to vector<8x128xf32>
    %c0_62 = arith.constant 0 : index
    %c0_63 = arith.constant 0 : index
    %101 = vector.load %arg6[%c0_62, %c0_63] : memref<128x128xf32, #tpu.memory_space<vmem>>, vector<128x128xf32>
    %cst_64 = arith.constant dense<0.000000e+00> : vector<8x128xf32>
    %102 = tpu.matmul %100, %101, %cst_64 {dimension_numbers = #tpu.dot_dimension_numbers<[1], [0], [0], [1], [0, 0, 1, 1], [], []>} : vector<8x128xf32>, vector<128x128xf32>, vector<8x128xf32> -> vector<8x128xf32>
    %103 = arith.addf %102, %8 : vector<8x128xf32>
    %cst_65 = arith.constant dense<0xFF800000> : vector<8xf32>
    %104 = vector.multi_reduction <maximumf>, %103, %cst_65 [1] : vector<8x128xf32> to vector<8xf32>
    %105 = vector.shape_cast %104 : vector<8xf32> to vector<8x1xf32>
    %106 = vector.broadcast %105 : vector<8x1xf32> to vector<8x128xf32>
    %107 = arith.subf %103, %106 : vector<8x128xf32>
    %108 = math.exp %107 : vector<8x128xf32>
    %cst_66 = arith.constant dense<0.000000e+00> : vector<8xf32>
    %109 = vector.multi_reduction <add>, %108, %cst_66 [1] : vector<8x128xf32> to vector<8xf32>
    %110 = vector.shape_cast %109 : vector<8xf32> to vector<8x1xf32>
    %111 = math.log %110 : vector<8x1xf32>
    %112 = arith.addf %111, %105 : vector<8x1xf32>
    %113 = vector.broadcast %112 : vector<8x1xf32> to vector<8x128xf32>
    %114 = arith.subf %103, %113 : vector<8x128xf32>
    %c3_67 = arith.constant 3 : index
    %c0_68 = arith.constant 0 : index
    %c0_69 = arith.constant 0 : index
    %115 = vector.load %arg8[%c3_67, %c0_68, %c0_69] : memref<8x8x128xf32, #tpu.memory_space<vmem>>, vector<1x8x128xf32>
    %116 = vector.shape_cast %115 : vector<1x8x128xf32> to vector<8x128xf32>
    %117 = vector.shape_cast %114 : vector<8x128xf32> to vector<1x8x128xf32>
    tpu.vector_store %arg8[%c3_67, %c0_68, %c0_69], %117 {strides = array<i32>} : memref<8x8x128xf32, #tpu.memory_space<vmem>>, vector<1x8x128xf32>,
    %c4 = arith.constant 4 : index
    %c0_70 = arith.constant 0 : index
    %c0_71 = arith.constant 0 : index
    %118 = vector.load %arg1[%c4, %c0_70, %c0_71] : memref<8x8x16xf32, #tpu.memory_space<vmem>>, vector<1x8x16xf32>
    %119 = vector.shape_cast %118 : vector<1x8x16xf32> to vector<8x16xf32>
    %c0_72 = arith.constant 0 : index
    %c0_73 = arith.constant 0 : index
    %120 = vector.load %arg3[%c0_72, %c0_73] : memref<16x256xf32, #tpu.memory_space<vmem>>, vector<16x256xf32>
    %cst_74 = arith.constant dense<0.000000e+00> : vector<8x256xf32>
    %121 = tpu.matmul %119, %120, %cst_74 {dimension_numbers = #tpu.dot_dimension_numbers<[1], [0], [0], [1], [0, 0, 1, 1], [], []>} : vector<8x16xf32>, vector<16x256xf32>, vector<8x256xf32> -> vector<8x256xf32>
    %c0_75 = arith.constant 0 : index
    %c0_76 = arith.constant 0 : index
    %122 = vector.load %arg4[%c0_75, %c0_76] : memref<128x256xf32, #tpu.memory_space<vmem>>, vector<128x256xf32>
    %cst_77 = arith.constant dense<0.000000e+00> : vector<8x256xf32>
    %123 = tpu.matmul %99, %122, %cst_77 {dimension_numbers = #tpu.dot_dimension_numbers<[1], [0], [0], [1], [0, 0, 1, 1], [], []>} : vector<8x128xf32>, vector<128x256xf32>, vector<8x256xf32> -> vector<8x256xf32>
    %124 = arith.addf %121, %123 : vector<8x256xf32>
    %125 = arith.addf %124, %5 : vector<8x256xf32>
    %126 = vector.extract_strided_slice %125 {offsets = [0, 0], sizes = [8, 128], strides = [1, 1]} : vector<8x256xf32> to vector<8x128xf32>
    %127 = vector.extract_strided_slice %125 {offsets = [0, 128], sizes = [8, 128], strides = [1, 1]} : vector<8x256xf32> to vector<8x128xf32>
    %c0_78 = arith.constant 0 : index
    %c0_79 = arith.constant 0 : index
    %128 = vector.load %arg6[%c0_78, %c0_79] : memref<128x128xf32, #tpu.memory_space<vmem>>, vector<128x128xf32>
    %cst_80 = arith.constant dense<0.000000e+00> : vector<8x128xf32>
    %129 = tpu.matmul %127, %128, %cst_80 {dimension_numbers = #tpu.dot_dimension_numbers<[1], [0], [0], [1], [0, 0, 1, 1], [], []>} : vector<8x128xf32>, vector<128x128xf32>, vector<8x128xf32> -> vector<8x128xf32>
    %130 = arith.addf %129, %8 : vector<8x128xf32>
    %cst_81 = arith.constant dense<0xFF800000> : vector<8xf32>
    %131 = vector.multi_reduction <maximumf>, %130, %cst_81 [1] : vector<8x128xf32> to vector<8xf32>
    %132 = vector.shape_cast %131 : vector<8xf32> to vector<8x1xf32>
    %133 = vector.broadcast %132 : vector<8x1xf32> to vector<8x128xf32>
    %134 = arith.subf %130, %133 : vector<8x128xf32>
    %135 = math.exp %134 : vector<8x128xf32>
    %cst_82 = arith.constant dense<0.000000e+00> : vector<8xf32>
    %136 = vector.multi_reduction <add>, %135, %cst_82 [1] : vector<8x128xf32> to vector<8xf32>
    %137 = vector.shape_cast %136 : vector<8xf32> to vector<8x1xf32>
    %138 = math.log %137 : vector<8x1xf32>
    %139 = arith.addf %138, %132 : vector<8x1xf32>
    %140 = vector.broadcast %139 : vector<8x1xf32> to vector<8x128xf32>
    %141 = arith.subf %130, %140 : vector<8x128xf32>
    %c4_83 = arith.constant 4 : index
    %c0_84 = arith.constant 0 : index
    %c0_85 = arith.constant 0 : index
    %142 = vector.load %arg8[%c4_83, %c0_84, %c0_85] : memref<8x8x128xf32, #tpu.memory_space<vmem>>, vector<1x8x128xf32>
    %143 = vector.shape_cast %142 : vector<1x8x128xf32> to vector<8x128xf32>
    %144 = vector.shape_cast %141 : vector<8x128xf32> to vector<1x8x128xf32>
    tpu.vector_store %arg8[%c4_83, %c0_84, %c0_85], %144 {strides = array<i32>} : memref<8x8x128xf32, #tpu.memory_space<vmem>>, vector<1x8x128xf32>,
    %c5 = arith.constant 5 : index
    %c0_86 = arith.constant 0 : index
    %c0_87 = arith.constant 0 : index
    %145 = vector.load %arg1[%c5, %c0_86, %c0_87] : memref<8x8x16xf32, #tpu.memory_space<vmem>>, vector<1x8x16xf32>
    %146 = vector.shape_cast %145 : vector<1x8x16xf32> to vector<8x16xf32>
    %c0_88 = arith.constant 0 : index
    %c0_89 = arith.constant 0 : index
    %147 = vector.load %arg3[%c0_88, %c0_89] : memref<16x256xf32, #tpu.memory_space<vmem>>, vector<16x256xf32>
    %cst_90 = arith.constant dense<0.000000e+00> : vector<8x256xf32>
    %148 = tpu.matmul %146, %147, %cst_90 {dimension_numbers = #tpu.dot_dimension_numbers<[1], [0], [0], [1], [0, 0, 1, 1], [], []>} : vector<8x16xf32>, vector<16x256xf32>, vector<8x256xf32> -> vector<8x256xf32>
    %c0_91 = arith.constant 0 : index
    %c0_92 = arith.constant 0 : index
    %149 = vector.load %arg4[%c0_91, %c0_92] : memref<128x256xf32, #tpu.memory_space<vmem>>, vector<128x256xf32>
    %cst_93 = arith.constant dense<0.000000e+00> : vector<8x256xf32>
    %150 = tpu.matmul %126, %149, %cst_93 {dimension_numbers = #tpu.dot_dimension_numbers<[1], [0], [0], [1], [0, 0, 1, 1], [], []>} : vector<8x128xf32>, vector<128x256xf32>, vector<8x256xf32> -> vector<8x256xf32>
    %151 = arith.addf %148, %150 : vector<8x256xf32>
    %152 = arith.addf %151, %5 : vector<8x256xf32>
    %153 = vector.extract_strided_slice %152 {offsets = [0, 0], sizes = [8, 128], strides = [1, 1]} : vector<8x256xf32> to vector<8x128xf32>
    %154 = vector.extract_strided_slice %152 {offsets = [0, 128], sizes = [8, 128], strides = [1, 1]} : vector<8x256xf32> to vector<8x128xf32>
    %c0_94 = arith.constant 0 : index
    %c0_95 = arith.constant 0 : index
    %155 = vector.load %arg6[%c0_94, %c0_95] : memref<128x128xf32, #tpu.memory_space<vmem>>, vector<128x128xf32>
    %cst_96 = arith.constant dense<0.000000e+00> : vector<8x128xf32>
    %156 = tpu.matmul %154, %155, %cst_96 {dimension_numbers = #tpu.dot_dimension_numbers<[1], [0], [0], [1], [0, 0, 1, 1], [], []>} : vector<8x128xf32>, vector<128x128xf32>, vector<8x128xf32> -> vector<8x128xf32>
    %157 = arith.addf %156, %8 : vector<8x128xf32>
    %cst_97 = arith.constant dense<0xFF800000> : vector<8xf32>
    %158 = vector.multi_reduction <maximumf>, %157, %cst_97 [1] : vector<8x128xf32> to vector<8xf32>
    %159 = vector.shape_cast %158 : vector<8xf32> to vector<8x1xf32>
    %160 = vector.broadcast %159 : vector<8x1xf32> to vector<8x128xf32>
    %161 = arith.subf %157, %160 : vector<8x128xf32>
    %162 = math.exp %161 : vector<8x128xf32>
    %cst_98 = arith.constant dense<0.000000e+00> : vector<8xf32>
    %163 = vector.multi_reduction <add>, %162, %cst_98 [1] : vector<8x128xf32> to vector<8xf32>
    %164 = vector.shape_cast %163 : vector<8xf32> to vector<8x1xf32>
    %165 = math.log %164 : vector<8x1xf32>
    %166 = arith.addf %165, %159 : vector<8x1xf32>
    %167 = vector.broadcast %166 : vector<8x1xf32> to vector<8x128xf32>
    %168 = arith.subf %157, %167 : vector<8x128xf32>
    %c5_99 = arith.constant 5 : index
    %c0_100 = arith.constant 0 : index
    %c0_101 = arith.constant 0 : index
    %169 = vector.load %arg8[%c5_99, %c0_100, %c0_101] : memref<8x8x128xf32, #tpu.memory_space<vmem>>, vector<1x8x128xf32>
    %170 = vector.shape_cast %169 : vector<1x8x128xf32> to vector<8x128xf32>
    %171 = vector.shape_cast %168 : vector<8x128xf32> to vector<1x8x128xf32>
    tpu.vector_store %arg8[%c5_99, %c0_100, %c0_101], %171 {strides = array<i32>} : memref<8x8x128xf32, #tpu.memory_space<vmem>>, vector<1x8x128xf32>,
    %c6 = arith.constant 6 : index
    %c0_102 = arith.constant 0 : index
    %c0_103 = arith.constant 0 : index
    %172 = vector.load %arg1[%c6, %c0_102, %c0_103] : memref<8x8x16xf32, #tpu.memory_space<vmem>>, vector<1x8x16xf32>
    %173 = vector.shape_cast %172 : vector<1x8x16xf32> to vector<8x16xf32>
    %c0_104 = arith.constant 0 : index
    %c0_105 = arith.constant 0 : index
    %174 = vector.load %arg3[%c0_104, %c0_105] : memref<16x256xf32, #tpu.memory_space<vmem>>, vector<16x256xf32>
    %cst_106 = arith.constant dense<0.000000e+00> : vector<8x256xf32>
    %175 = tpu.matmul %173, %174, %cst_106 {dimension_numbers = #tpu.dot_dimension_numbers<[1], [0], [0], [1], [0, 0, 1, 1], [], []>} : vector<8x16xf32>, vector<16x256xf32>, vector<8x256xf32> -> vector<8x256xf32>
    %c0_107 = arith.constant 0 : index
    %c0_108 = arith.constant 0 : index
    %176 = vector.load %arg4[%c0_107, %c0_108] : memref<128x256xf32, #tpu.memory_space<vmem>>, vector<128x256xf32>
    %cst_109 = arith.constant dense<0.000000e+00> : vector<8x256xf32>
    %177 = tpu.matmul %153, %176, %cst_109 {dimension_numbers = #tpu.dot_dimension_numbers<[1], [0], [0], [1], [0, 0, 1, 1], [], []>} : vector<8x128xf32>, vector<128x256xf32>, vector<8x256xf32> -> vector<8x256xf32>
    %178 = arith.addf %175, %177 : vector<8x256xf32>
    %179 = arith.addf %178, %5 : vector<8x256xf32>
    %180 = vector.extract_strided_slice %179 {offsets = [0, 0], sizes = [8, 128], strides = [1, 1]} : vector<8x256xf32> to vector<8x128xf32>
    %181 = vector.extract_strided_slice %179 {offsets = [0, 128], sizes = [8, 128], strides = [1, 1]} : vector<8x256xf32> to vector<8x128xf32>
    %c0_110 = arith.constant 0 : index
    %c0_111 = arith.constant 0 : index
    %182 = vector.load %arg6[%c0_110, %c0_111] : memref<128x128xf32, #tpu.memory_space<vmem>>, vector<128x128xf32>
    %cst_112 = arith.constant dense<0.000000e+00> : vector<8x128xf32>
    %183 = tpu.matmul %181, %182, %cst_112 {dimension_numbers = #tpu.dot_dimension_numbers<[1], [0], [0], [1], [0, 0, 1, 1], [], []>} : vector<8x128xf32>, vector<128x128xf32>, vector<8x128xf32> -> vector<8x128xf32>
    %184 = arith.addf %183, %8 : vector<8x128xf32>
    %cst_113 = arith.constant dense<0xFF800000> : vector<8xf32>
    %185 = vector.multi_reduction <maximumf>, %184, %cst_113 [1] : vector<8x128xf32> to vector<8xf32>
    %186 = vector.shape_cast %185 : vector<8xf32> to vector<8x1xf32>
    %187 = vector.broadcast %186 : vector<8x1xf32> to vector<8x128xf32>
    %188 = arith.subf %184, %187 : vector<8x128xf32>
    %189 = math.exp %188 : vector<8x128xf32>
    %cst_114 = arith.constant dense<0.000000e+00> : vector<8xf32>
    %190 = vector.multi_reduction <add>, %189, %cst_114 [1] : vector<8x128xf32> to vector<8xf32>
    %191 = vector.shape_cast %190 : vector<8xf32> to vector<8x1xf32>
    %192 = math.log %191 : vector<8x1xf32>
    %193 = arith.addf %192, %186 : vector<8x1xf32>
    %194 = vector.broadcast %193 : vector<8x1xf32> to vector<8x128xf32>
    %195 = arith.subf %184, %194 : vector<8x128xf32>
    %c6_115 = arith.constant 6 : index
    %c0_116 = arith.constant 0 : index
    %c0_117 = arith.constant 0 : index
    %196 = vector.load %arg8[%c6_115, %c0_116, %c0_117] : memref<8x8x128xf32, #tpu.memory_space<vmem>>, vector<1x8x128xf32>
    %197 = vector.shape_cast %196 : vector<1x8x128xf32> to vector<8x128xf32>
    %198 = vector.shape_cast %195 : vector<8x128xf32> to vector<1x8x128xf32>
    tpu.vector_store %arg8[%c6_115, %c0_116, %c0_117], %198 {strides = array<i32>} : memref<8x8x128xf32, #tpu.memory_space<vmem>>, vector<1x8x128xf32>,
    %c7 = arith.constant 7 : index
    %c0_118 = arith.constant 0 : index
    %c0_119 = arith.constant 0 : index
    %199 = vector.load %arg1[%c7, %c0_118, %c0_119] : memref<8x8x16xf32, #tpu.memory_space<vmem>>, vector<1x8x16xf32>
    %200 = vector.shape_cast %199 : vector<1x8x16xf32> to vector<8x16xf32>
    %c0_120 = arith.constant 0 : index
    %c0_121 = arith.constant 0 : index
    %201 = vector.load %arg3[%c0_120, %c0_121] : memref<16x256xf32, #tpu.memory_space<vmem>>, vector<16x256xf32>
    %cst_122 = arith.constant dense<0.000000e+00> : vector<8x256xf32>
    %202 = tpu.matmul %200, %201, %cst_122 {dimension_numbers = #tpu.dot_dimension_numbers<[1], [0], [0], [1], [0, 0, 1, 1], [], []>} : vector<8x16xf32>, vector<16x256xf32>, vector<8x256xf32> -> vector<8x256xf32>
    %c0_123 = arith.constant 0 : index
    %c0_124 = arith.constant 0 : index
    %203 = vector.load %arg4[%c0_123, %c0_124] : memref<128x256xf32, #tpu.memory_space<vmem>>, vector<128x256xf32>
    %cst_125 = arith.constant dense<0.000000e+00> : vector<8x256xf32>
    %204 = tpu.matmul %180, %203, %cst_125 {dimension_numbers = #tpu.dot_dimension_numbers<[1], [0], [0], [1], [0, 0, 1, 1], [], []>} : vector<8x128xf32>, vector<128x256xf32>, vector<8x256xf32> -> vector<8x256xf32>
    %205 = arith.addf %202, %204 : vector<8x256xf32>
    %206 = arith.addf %205, %5 : vector<8x256xf32>
    %207 = vector.extract_strided_slice %206 {offsets = [0, 0], sizes = [8, 128], strides = [1, 1]} : vector<8x256xf32> to vector<8x128xf32>
    %208 = vector.extract_strided_slice %206 {offsets = [0, 128], sizes = [8, 128], strides = [1, 1]} : vector<8x256xf32> to vector<8x128xf32>
    %c0_126 = arith.constant 0 : index
    %c0_127 = arith.constant 0 : index
    %209 = vector.load %arg6[%c0_126, %c0_127] : memref<128x128xf32, #tpu.memory_space<vmem>>, vector<128x128xf32>
    %cst_128 = arith.constant dense<0.000000e+00> : vector<8x128xf32>
    %210 = tpu.matmul %208, %209, %cst_128 {dimension_numbers = #tpu.dot_dimension_numbers<[1], [0], [0], [1], [0, 0, 1, 1], [], []>} : vector<8x128xf32>, vector<128x128xf32>, vector<8x128xf32> -> vector<8x128xf32>
    %211 = arith.addf %210, %8 : vector<8x128xf32>
    %cst_129 = arith.constant dense<0xFF800000> : vector<8xf32>
    %212 = vector.multi_reduction <maximumf>, %211, %cst_129 [1] : vector<8x128xf32> to vector<8xf32>
    %213 = vector.shape_cast %212 : vector<8xf32> to vector<8x1xf32>
    %214 = vector.broadcast %213 : vector<8x1xf32> to vector<8x128xf32>
    %215 = arith.subf %211, %214 : vector<8x128xf32>
    %216 = math.exp %215 : vector<8x128xf32>
    %cst_130 = arith.constant dense<0.000000e+00> : vector<8xf32>
    %217 = vector.multi_reduction <add>, %216, %cst_130 [1] : vector<8x128xf32> to vector<8xf32>
    %218 = vector.shape_cast %217 : vector<8xf32> to vector<8x1xf32>
    %219 = math.log %218 : vector<8x1xf32>
    %220 = arith.addf %219, %213 : vector<8x1xf32>
    %221 = vector.broadcast %220 : vector<8x1xf32> to vector<8x128xf32>
    %222 = arith.subf %211, %221 : vector<8x128xf32>
    %c7_131 = arith.constant 7 : index
    %c0_132 = arith.constant 0 : index
    %c0_133 = arith.constant 0 : index
    %223 = vector.load %arg8[%c7_131, %c0_132, %c0_133] : memref<8x8x128xf32, #tpu.memory_space<vmem>>, vector<1x8x128xf32>
    %224 = vector.shape_cast %223 : vector<1x8x128xf32> to vector<8x128xf32>
    %225 = vector.shape_cast %222 : vector<8x128xf32> to vector<1x8x128xf32>
    tpu.vector_store %arg8[%c7_131, %c0_132, %c0_133], %225 {strides = array<i32>} : memref<8x8x128xf32, #tpu.memory_space<vmem>>, vector<1x8x128xf32>,
    %c0_134 = arith.constant 0 : index
    %c0_135 = arith.constant 0 : index
    %226 = vector.load %arg9[%c0_134, %c0_135] : memref<8x128xf32, #tpu.memory_space<vmem>>, vector<8x128xf32>
    tpu.vector_store %arg9[%c0_134, %c0_135], %207 {strides = array<i32>} : memref<8x128xf32, #tpu.memory_space<vmem>>, vector<8x128xf32>,
    return
  }
  func.func @transform_0(%arg0: i32) -> (i32, i32, i32) {
    %c0_i32 = arith.constant 0 : i32
    %c0_i32_0 = arith.constant 0 : i32
    %c0_i32_1 = arith.constant 0 : i32
    return %arg0, %c0_i32, %c0_i32_0 : i32, i32, i32
  }
  func.func @transform_1(%arg0: i32) -> (i32, i32) {
    %c0_i32 = arith.constant 0 : i32
    %c0_i32_0 = arith.constant 0 : i32
    %c0_i32_1 = arith.constant 0 : i32
    return %c0_i32, %c0_i32_0 : i32, i32
  }
  func.func @transform_2(%arg0: i32) -> (i32, i32) {
    %c0_i32 = arith.constant 0 : i32
    %c0_i32_0 = arith.constant 0 : i32
    %c0_i32_1 = arith.constant 0 : i32
    return %c0_i32, %c0_i32_0 : i32, i32
  }
  func.func @transform_3(%arg0: i32) -> (i32, i32) {
    %c0_i32 = arith.constant 0 : i32
    %c0_i32_0 = arith.constant 0 : i32
    %c0_i32_1 = arith.constant 0 : i32
    return %c0_i32, %c0_i32_0 : i32, i32
  }
  func.func @transform_4(%arg0: i32) -> (i32, i32) {
    %c0_i32 = arith.constant 0 : i32
    %c0_i32_0 = arith.constant 0 : i32
    %c0_i32_1 = arith.constant 0 : i32
    return %c0_i32, %c0_i32_0 : i32, i32
  }
  func.func @transform_5(%arg0: i32) -> (i32, i32) {
    %c0_i32 = arith.constant 0 : i32
    %c0_i32_0 = arith.constant 0 : i32
    %c0_i32_1 = arith.constant 0 : i32
    return %c0_i32, %c0_i32_0 : i32, i32
  }
  func.func @transform_6(%arg0: i32) -> (i32, i32) {
    %c0_i32 = arith.constant 0 : i32
    %c0_i32_0 = arith.constant 0 : i32
    %c0_i32_1 = arith.constant 0 : i32
    return %c0_i32, %c0_i32_0 : i32, i32
  }
  func.func @transform_7(%arg0: i32) -> (i32, i32, i32) {
    %c0_i32 = arith.constant 0 : i32
    %c0_i32_0 = arith.constant 0 : i32
    %c0_i32_1 = arith.constant 0 : i32
    return %arg0, %c0_i32, %c0_i32_0 : i32, i32, i32
  }
  func.func @transform_8(%arg0: i32) -> (i32, i32) {
    %c0_i32 = arith.constant 0 : i32
    %c0_i32_0 = arith.constant 0 : i32
    %c0_i32_1 = arith.constant 0 : i32
    return %c0_i32, %c0_i32_0 : i32, i32
  }
}

</mosaic_0001>

<llo_original>
// kernel: rnn_multi_1layer_sequence.1
$region0: #{rnn_multi_1layer_sequence.1}
  #allocation0 [shape = 'u32[]', space=smem, size = 0x4, offset = 0x4, fixed_abs, tag = 'smem constant byte address 0x4 - core index']
  #allocation1 [shape = 'u32[144,128]{1,0:T(1,128)}', space=vmem, size = 0x12000, scoped, tag = 'internal scratch']
  %s0 = inlined_call_operand.vmem [shape: f32[8,8,16], index: 0, kind: input, shape index: {}]
  %s1 = inlined_call_operand.vmem [shape: f32[8,128], index: 1, kind: input, shape index: {}, may-alias: {1,8}]
  %s2 = inlined_call_operand.vmem [shape: f32[16,256], index: 2, kind: input, shape index: {}]
  %s3 = inlined_call_operand.hbm [shape: f32[128,256], index: 3, kind: input, shape index: {}]
  %s4 = inlined_call_operand.vmem [shape: f32[1,256], index: 4, kind: input, shape index: {}]
  %s5 = inlined_call_operand.hbm [shape: f32[128,128], index: 5, kind: input, shape index: {}]
  %s6 = inlined_call_operand.vmem [shape: f32[1,128], index: 6, kind: input, shape index: {}]
  %s7 = inlined_call_operand.vmem [shape: f32[8,8,128], index: 7, kind: output, shape index: {0}]
  %s8 = inlined_call_operand.vmem [shape: f32[8,128], index: 8, kind: output, shape index: {1}, may-alias: {1,8}]
  %9 = xla_tuple %s7, %s8
  %s10 = sld [smem:[#allocation0]]
  $region58: #{rnn_multi_1layer_sequence.1} parent=0
    _
  %s12 = ssub.s32 1, %s10
  %s13 = scalar_select 0, %s12, %s10
  $region1: #{rnn_multi_1layer_sequence.1} parent=0
    #allocation2 [shape = 'u8[131072]{0}', space=vmem, size = 0x20000, scoped, tag = 'input window, operand 3, single buffered']
    #allocation3 [shape = 's32[1]{0}', space=sflag, size = 0x4, scoped, tag = 'scoped memory for rnn_multi_1layer_sequence.1']
    #allocation4 [shape = 'u8[65536]{0}', space=vmem, size = 0x10000, scoped, tag = 'input window, operand 5, single buffered']
    #allocation5 [shape = 's32[1]{0}', space=sflag, size = 0x4, scoped, tag = 'scoped memory for rnn_multi_1layer_sequence.1']
    %14 = vsyncpa [#allocation3], 0
    %15 = vsyncpa [#allocation5], 0
    // Predicated region
    $region2: #{rnn_multi_1layer_sequence.1} parent=1 // pred_check
      _
    $region3: #{rnn_multi_1layer_sequence.1} parent=1 // pred_check_branch
      %17 = sbr.rel (0) target = $region5
    $region4: #{rnn_multi_1layer_sequence.1} parent=1 // pred_region
      _
    $region5: #{rnn_multi_1layer_sequence.1} parent=1 // pred_fallthru
      _
    // Predicated region
    $region6: #{rnn_multi_1layer_sequence.1} parent=1 // pred_check
      _
    $region7: #{rnn_multi_1layer_sequence.1} parent=1 // pred_check_branch
      %19 = sbr.rel (0) target = $region9
    $region8: #{rnn_multi_1layer_sequence.1} parent=1 // pred_region
      _
    $region9: #{rnn_multi_1layer_sequence.1} parent=1 // pred_fallthru
      _
    // Predicated region
    $region10: #{rnn_multi_1layer_sequence.1} parent=1 // pred_check
      _
    $region11: #{rnn_multi_1layer_sequence.1} parent=1 // pred_check_branch
      %21 = sbr.rel (0) target = $region13
    $region12: #{rnn_multi_1layer_sequence.1} parent=1 // pred_region
      _
    $region13: #{rnn_multi_1layer_sequence.1} parent=1 // pred_fallthru
      _
    // Predicated region
    $region14: #{rnn_multi_1layer_sequence.1} parent=1 // pred_check
      _
    $region15: #{rnn_multi_1layer_sequence.1} parent=1 // pred_check_branch
      %23 = sbr.rel (0) target = $region17
    $region16: #{rnn_multi_1layer_sequence.1} parent=1 // pred_region
      %s25 = ssub.s32 4096, 4096
      %26 = vsyncadd [#allocation3], %s25
      %s27 = sshll.u32 [#allocation2], 4
      %s28 = int_to_ptr.vmem [resolvable:$true] %s27
      %33 = dma.hbm_to_vmem [thread:$0]  %s3, 4096, %s28, [#allocation3], 256, 256, 16
    $region17: #{rnn_multi_1layer_sequence.1} parent=1 // pred_fallthru
      _
    // Predicated region
    $region18: #{rnn_multi_1layer_sequence.1} parent=1 // pred_check
      _
    $region19: #{rnn_multi_1layer_sequence.1} parent=1 // pred_check_branch
      %35 = sbr.rel (0) target = $region21
    $region20: #{rnn_multi_1layer_sequence.1} parent=1 // pred_region
      _
    $region21: #{rnn_multi_1layer_sequence.1} parent=1 // pred_fallthru
      _
    // Predicated region
    $region22: #{rnn_multi_1layer_sequence.1} parent=1 // pred_check
      _
    $region23: #{rnn_multi_1layer_sequence.1} parent=1 // pred_check_branch
      %37 = sbr.rel (0) target = $region25
    $region24: #{rnn_multi_1layer_sequence.1} parent=1 // pred_region
      %s39 = ssub.s32 2048, 2048
      %40 = vsyncadd [#allocation5], %s39
      %s41 = sshll.u32 [#allocation4], 4
      %s42 = int_to_ptr.vmem [resolvable:$true] %s41
      %47 = dma.hbm_to_vmem [thread:$0]  %s5, 2048, %s42, [#allocation5], 128, 128, 8
    $region25: #{rnn_multi_1layer_sequence.1} parent=1 // pred_fallthru
      _
    // Predicated region
    $region26: #{rnn_multi_1layer_sequence.1} parent=1 // pred_check
      _
    $region27: #{rnn_multi_1layer_sequence.1} parent=1 // pred_check_branch
      %49 = sbr.rel (0) target = $region29
    $region28: #{rnn_multi_1layer_sequence.1} parent=1 // pred_region
      _
    $region29: #{rnn_multi_1layer_sequence.1} parent=1 // pred_fallthru
      _
    // Predicated region
    $region30: #{rnn_multi_1layer_sequence.1} parent=1 // pred_check
      _
    $region31: #{rnn_multi_1layer_sequence.1} parent=1 // pred_check_branch
      %51 = sbr.rel (0) target = $region33
    $region32: #{rnn_multi_1layer_sequence.1} parent=1 // pred_region
      %52 = dma.done [#allocation3], 4096
    $region33: #{rnn_multi_1layer_sequence.1} parent=1 // pred_fallthru
      _
    // Predicated region
    $region34: #{rnn_multi_1layer_sequence.1} parent=1 // pred_check
      _
    $region35: #{rnn_multi_1layer_sequence.1} parent=1 // pred_check_branch
      %54 = sbr.rel (0) target = $region37
    $region36: #{rnn_multi_1layer_sequence.1} parent=1 // pred_region
      %55 = dma.done [#allocation5], 2048
    $region37: #{rnn_multi_1layer_sequence.1} parent=1 // pred_fallthru
      _
    %p56 = scmp.eq.s32.totalorder 0, 0
    // Predicated region
    $region38: #{rnn_multi_1layer_sequence.1} parent=1 // pred_check
      %p57 = pneg %p56
    $region39: #{rnn_multi_1layer_sequence.1} parent=1 // pred_check_branch
      %59 = sbr.rel (%p57) target = $region41
    $region40: #{rnn_multi_1layer_sequence.1} parent=1 // pred_region
      %v60 = vld [vmem:[%s1] sm:$0xff]
      %61 = vst [vmem:[%s8] sm:$0xff] %v60
    $region41: #{rnn_multi_1layer_sequence.1} parent=1 // pred_fallthru
      _
    %v62 = vld [vmem:[%s4] sm:$0x3]
    %v64 = vlaneseq
    %v65 = vshrl.u32 %v64, 7
    %v66 = vsub.s32 0, %v65
    %v67 = vrot.slane %v62, %v66
    %v68 = vlaneseq
    %v69 = vshrl.u32 %v68, 7
    %v70 = vsub.s32 1, %v69
    %v71 = vrot.slane %v62, %v70
    %v74 = vld [vmem:[%s6] sm:$0x1]
    %v76 = vlaneseq
    %v77 = vshrl.u32 %v76, 7
    %v78 = vsub.s32 0, %v77
    %v79 = vrot.slane %v74, %v78
    %v81 = vld [vmem:[%s8] sm:$0xff]
    %v82 = vld [vmem:[%s0] sm:$0xff]
    %v83 = vld [vmem:[%s2] sm:$0xff]
    %v84 = vld [vmem:[%s2 + $0x8] sm:$0xff]
    %v85 = vld [vmem:[%s2 + $0x10] sm:$0xff]
    %v86 = vld [vmem:[%s2 + $0x18] sm:$0xff]
    %v87 = vld [vmem:[#allocation2] sm:$0xff]
    %v88 = vld [vmem:[#allocation2 + $0x8] sm:$0xff]
    %v89 = vld [vmem:[#allocation2 + $0x10] sm:$0xff]
    %v90 = vld [vmem:[#allocation2 + $0x18] sm:$0xff]
    %v91 = vld [vmem:[#allocation2 + $0x20] sm:$0xff]
    %v92 = vld [vmem:[#allocation2 + $0x28] sm:$0xff]
    %v93 = vld [vmem:[#allocation2 + $0x30] sm:$0xff]
    %v94 = vld [vmem:[#allocation2 + $0x38] sm:$0xff]
    %v95 = vld [vmem:[#allocation2 + $0x40] sm:$0xff]
    %v96 = vld [vmem:[#allocation2 + $0x48] sm:$0xff]
    %v97 = vld [vmem:[#allocation2 + $0x50] sm:$0xff]
    %v98 = vld [vmem:[#allocation2 + $0x58] sm:$0xff]
    %v99 = vld [vmem:[#allocation2 + $0x60] sm:$0xff]
    %v100 = vld [vmem:[#allocation2 + $0x68] sm:$0xff]
    %v101 = vld [vmem:[#allocation2 + $0x70] sm:$0xff]
    %v102 = vld [vmem:[#allocation2 + $0x78] sm:$0xff]
    %v103 = vld [vmem:[#allocation2 + $0x80] sm:$0xff]
    %v104 = vld [vmem:[#allocation2 + $0x88] sm:$0xff]
    %v105 = vld [vmem:[#allocation2 + $0x90] sm:$0xff]
    %v106 = vld [vmem:[#allocation2 + $0x98] sm:$0xff]
    %v107 = vld [vmem:[#allocation2 + $0xa0] sm:$0xff]
    %v108 = vld [vmem:[#allocation2 + $0xa8] sm:$0xff]
    %v109 = vld [vmem:[#allocation2 + $0xb0] sm:$0xff]
    %v110 = vld [vmem:[#allocation2 + $0xb8] sm:$0xff]
    %v111 = vld [vmem:[#allocation2 + $0xc0] sm:$0xff]
    %v112 = vld [vmem:[#allocation2 + $0xc8] sm:$0xff]
    %v113 = vld [vmem:[#allocation2 + $0xd0] sm:$0xff]
    %v114 = vld [vmem:[#allocation2 + $0xd8] sm:$0xff]
    %v115 = vld [vmem:[#allocation2 + $0xe0] sm:$0xff]
    %v116 = vld [vmem:[#allocation2 + $0xe8] sm:$0xff]
    %v117 = vld [vmem:[#allocation2 + $0xf0] sm:$0xff]
    %v118 = vld [vmem:[#allocation2 + $0xf8] sm:$0xff]
    %119 = vmatprep.subr.mxu0 %v118
    %120 = vmatpush1.msra.mxu0 %v117
    %121 = vmatprep.subr.mxu0 %v116
    %122 = vmatpush1.msra.mxu0 %v115
    %123 = vmatprep.subr.mxu0 %v114
    %124 = vmatpush1.msra.mxu0 %v113
    %125 = vmatprep.subr.mxu0 %v112
    %126 = vmatpush1.msra.mxu0 %v111
    %127 = vmatprep.subr.mxu0 %v110
    %128 = vmatpush1.msra.mxu0 %v109
    %129 = vmatprep.subr.mxu0 %v108
    %130 = vmatpush1.msra.mxu0 %v107
    %131 = vmatprep.subr.mxu0 %v106
    %132 = vmatpush1.msra.mxu0 %v105
    %133 = vmatprep.subr.mxu0 %v104
    %134 = vmatpush1.msra.mxu0 %v103
    %135 = vmatprep.subr.mxu0 %v102
    %136 = vmatpush1.msra.mxu0 %v101
    %137 = vmatprep.subr.mxu0 %v100
    %138 = vmatpush1.msra.mxu0 %v99
    %139 = vmatprep.subr.mxu0 %v98
    %140 = vmatpush1.msra.mxu0 %v97
    %141 = vmatprep.subr.mxu0 %v96
    %142 = vmatpush1.msra.mxu0 %v95
    %143 = vmatprep.subr.mxu0 %v94
    %144 = vmatpush1.msra.mxu0 %v93
    %145 = vmatprep.subr.mxu0 %v92
    %146 = vmatpush1.msra.mxu0 %v91
    %147 = vmatprep.subr.mxu0 %v90
    %148 = vmatpush1.msra.mxu0 %v89
    %149 = vmatprep.subr.mxu0 %v88
    %150 = vmatpush1.msra.mxu0 %v87
    %151 = vmatprep.subr.mxu0 0.0
    %152 = vmatpush2.msra.mxu0 0.0
    %153 = vmatprep.subr.mxu0 0.0
    %154 = vmatpush2.msra.mxu0 0.0
    %155 = vmatprep.subr.mxu0 0.0
    %156 = vmatpush2.msra.mxu0 0.0
    %157 = vmatprep.subr.mxu0 0.0
    %158 = vmatpush2.msra.mxu0 0.0
    %159 = vmatprep.subr.mxu0 0.0
    %160 = vmatpush2.msra.mxu0 0.0
    %161 = vmatprep.subr.mxu0 0.0
    %162 = vmatpush2.msra.mxu0 0.0
    %163 = vmatprep.subr.mxu0 0.0
    %164 = vmatpush2.msra.mxu0 0.0
    %165 = vmatprep.subr.mxu0 0.0
    %166 = vmatpush2.msra.mxu0 0.0
    %167 = vmatprep.subr.mxu0 0.0
    %168 = vmatpush2.msra.mxu0 0.0
    %169 = vmatprep.subr.mxu0 0.0
    %170 = vmatpush2.msra.mxu0 0.0
    %171 = vmatprep.subr.mxu0 0.0
    %172 = vmatpush2.msra.mxu0 0.0
    %173 = vmatprep.subr.mxu0 0.0
    %174 = vmatpush2.msra.mxu0 0.0
    %175 = vmatprep.subr.mxu0 0.0
    %176 = vmatpush2.msra.mxu0 0.0
    %177 = vmatprep.subr.mxu0 0.0
    %178 = vmatpush2.msra.mxu0 0.0
    %179 = vmatprep.subr.mxu0 0.0
    %180 = vmatpush2.msra.mxu0 0.0
    %181 = vmatprep.subr.mxu0 0.0
    %182 = vmatpush2.msra.mxu0 0.0
    %183 = vmatprep.mubr.f32.mxu0 0.0
    %184 = vmatmul.mubr.f32.gmra.mxu0 %v81
    %v185 = vpop.f32.mrf.mxu0
    %v186 = vadd.f32 0.0, %v185
    %v187 = vpop.f32.mrf.mxu0
    %v188 = vadd.f32 0.0, %v187
    %189 = vdwg.mxu0
    %vm190 = vcmask 130048
    %v192 = vsel %vm190, %v82, 0
    %194 = vmatprep.subr.mxu0 0.0
    %195 = vmatpush1.msra.mxu0 0.0
    %196 = vmatprep.subr.mxu0 0.0
    %197 = vmatpush1.msra.mxu0 0.0
    %198 = vmatprep.subr.mxu0 0.0
    %199 = vmatpush1.msra.mxu0 0.0
    %200 = vmatprep.subr.mxu0 0.0
    %201 = vmatpush1.msra.mxu0 0.0
    %202 = vmatprep.subr.mxu0 0.0
    %203 = vmatpush1.msra.mxu0 0.0
    %204 = vmatprep.subr.mxu0 0.0
    %205 = vmatpush1.msra.mxu0 0.0
    %206 = vmatprep.subr.mxu0 0.0
    %207 = vmatpush1.msra.mxu0 0.0
    %208 = vmatprep.subr.mxu0 0.0
    %209 = vmatpush1.msra.mxu0 0.0
    %210 = vmatprep.subr.mxu0 0.0
    %211 = vmatpush1.msra.mxu0 0.0
    %212 = vmatprep.subr.mxu0 0.0
    %213 = vmatpush1.msra.mxu0 0.0
    %214 = vmatprep.subr.mxu0 0.0
    %215 = vmatpush1.msra.mxu0 0.0
    %216 = vmatprep.subr.mxu0 0.0
    %217 = vmatpush1.msra.mxu0 0.0
    %218 = vmatprep.subr.mxu0 0.0
    %219 = vmatpush1.msra.mxu0 0.0
    %220 = vmatprep.subr.mxu0 0.0
    %221 = vmatpush1.msra.mxu0 0.0
    %222 = vmatprep.subr.mxu0 %v86
    %223 = vmatpush1.msra.mxu0 %v85
    %224 = vmatprep.subr.mxu0 %v84
    %225 = vmatpush1.msra.mxu0 %v83
    %226 = vmatprep.subr.mxu0 0.0
    %227 = vmatpush2.msra.mxu0 0.0
    %228 = vmatprep.subr.mxu0 0.0
    %229 = vmatpush2.msra.mxu0 0.0
    %230 = vmatprep.subr.mxu0 0.0
    %231 = vmatpush2.msra.mxu0 0.0
    %232 = vmatprep.subr.mxu0 0.0
    %233 = vmatpush2.msra.mxu0 0.0
    %234 = vmatprep.subr.mxu0 0.0
    %235 = vmatpush2.msra.mxu0 0.0
    %236 = vmatprep.subr.mxu0 0.0
    %237 = vmatpush2.msra.mxu0 0.0
    %238 = vmatprep.subr.mxu0 0.0
    %239 = vmatpush2.msra.mxu0 0.0
    %240 = vmatprep.subr.mxu0 0.0
    %241 = vmatpush2.msra.mxu0 0.0
    %242 = vmatprep.subr.mxu0 0.0
    %243 = vmatpush2.msra.mxu0 0.0
    %244 = vmatprep.subr.mxu0 0.0
    %245 = vmatpush2.msra.mxu0 0.0
    %246 = vmatprep.subr.mxu0 0.0
    %247 = vmatpush2.msra.mxu0 0.0
    %248 = vmatprep.subr.mxu0 0.0
    %249 = vmatpush2.msra.mxu0 0.0
    %250 = vmatprep.subr.mxu0 0.0
    %251 = vmatpush2.msra.mxu0 0.0
    %252 = vmatprep.subr.mxu0 0.0
    %253 = vmatpush2.msra.mxu0 0.0
    %254 = vmatprep.subr.mxu0 0.0
    %255 = vmatpush2.msra.mxu0 0.0
    %256 = vmatprep.subr.mxu0 0.0
    %257 = vmatpush2.msra.mxu0 0.0
    %258 = vmatprep.mubr.f32.mxu0 0.0
    %259 = vmatmul.mubr.f32.gmra.mxu0 %v192
    %v260 = vpop.f32.mrf.mxu0
    %v261 = vadd.f32 %v186, %v260
    %v262 = vpop.f32.mrf.mxu0
    %v263 = vadd.f32 %v188, %v262
    %264 = vdwg.mxu0
    %v265 = vadd.f32 %v261, %v67
    %v266 = vadd.f32 %v263, %v71
    %v267 = vld [vmem:[#allocation4] sm:$0xff]
    %v268 = vld [vmem:[#allocation4 + $0x8] sm:$0xff]
    %v269 = vld [vmem:[#allocation4 + $0x10] sm:$0xff]
    %v270 = vld [vmem:[#allocation4 + $0x18] sm:$0xff]
    %v271 = vld [vmem:[#allocation4 + $0x20] sm:$0xff]
    %v272 = vld [vmem:[#allocation4 + $0x28] sm:$0xff]
    %v273 = vld [vmem:[#allocation4 + $0x30] sm:$0xff]
    %v274 = vld [vmem:[#allocation4 + $0x38] sm:$0xff]
    %v275 = vld [vmem:[#allocation4 + $0x40] sm:$0xff]
    %v276 = vld [vmem:[#allocation4 + $0x48] sm:$0xff]
    %v277 = vld [vmem:[#allocation4 + $0x50] sm:$0xff]
    %v278 = vld [vmem:[#allocation4 + $0x58] sm:$0xff]
    %v279 = vld [vmem:[#allocation4 + $0x60] sm:$0xff]
    %v280 = vld [vmem:[#allocation4 + $0x68] sm:$0xff]
    %v281 = vld [vmem:[#allocation4 + $0x70] sm:$0xff]
    %v282 = vld [vmem:[#allocation4 + $0x78] sm:$0xff]
    %283 = vmatprep.subr.mxu0 0.0
    %284 = vmatpush1.msra.mxu0 %v282
    %285 = vmatprep.subr.mxu0 0.0
    %286 = vmatpush1.msra.mxu0 %v281
    %287 = vmatprep.subr.mxu0 0.0
    %288 = vmatpush1.msra.mxu0 %v280
    %289 = vmatprep.subr.mxu0 0.0
    %290 = vmatpush1.msra.mxu0 %v279
    %291 = vmatprep.subr.mxu0 0.0
    %292 = vmatpush1.msra.mxu0 %v278
    %293 = vmatprep.subr.mxu0 0.0
    %294 = vmatpush1.msra.mxu0 %v277
    %295 = vmatprep.subr.mxu0 0.0
    %296 = vmatpush1.msra.mxu0 %v276
    %297 = vmatprep.subr.mxu0 0.0
    %298 = vmatpush1.msra.mxu0 %v275
    %299 = vmatprep.subr.mxu0 0.0
    %300 = vmatpush1.msra.mxu0 %v274
    %301 = vmatprep.subr.mxu0 0.0
    %302 = vmatpush1.msra.mxu0 %v273
    %303 = vmatprep.subr.mxu0 0.0
    %304 = vmatpush1.msra.mxu0 %v272
    %305 = vmatprep.subr.mxu0 0.0
    %306 = vmatpush1.msra.mxu0 %v271
    %307 = vmatprep.subr.mxu0 0.0
    %308 = vmatpush1.msra.mxu0 %v270
    %309 = vmatprep.subr.mxu0 0.0
    %310 = vmatpush1.msra.mxu0 %v269
    %311 = vmatprep.subr.mxu0 0.0
    %312 = vmatpush1.msra.mxu0 %v268
    %313 = vmatprep.subr.mxu0 0.0
    %314 = vmatpush1.msra.mxu0 %v267
    %315 = vmatprep.subr.mxu0 0.0
    %316 = vmatpush2.msra.mxu0 0.0
    %317 = vmatprep.subr.mxu0 0.0
    %318 = vmatpush2.msra.mxu0 0.0
    %319 = vmatprep.subr.mxu0 0.0
    %320 = vmatpush2.msra.mxu0 0.0
    %321 = vmatprep.subr.mxu0 0.0
    %322 = vmatpush2.msra.mxu0 0.0
    %323 = vmatprep.subr.mxu0 0.0
    %324 = vmatpush2.msra.mxu0 0.0
    %325 = vmatprep.subr.mxu0 0.0
    %326 = vmatpush2.msra.mxu0 0.0
    %327 = vmatprep.subr.mxu0 0.0
    %328 = vmatpush2.msra.mxu0 0.0
    %329 = vmatprep.subr.mxu0 0.0
    %330 = vmatpush2.msra.mxu0 0.0
    %331 = vmatprep.subr.mxu0 0.0
    %332 = vmatpush2.msra.mxu0 0.0
    %333 = vmatprep.subr.mxu0 0.0
    %334 = vmatpush2.msra.mxu0 0.0
    %335 = vmatprep.subr.mxu0 0.0
    %336 = vmatpush2.msra.mxu0 0.0
    %337 = vmatprep.subr.mxu0 0.0
    %338 = vmatpush2.msra.mxu0 0.0
    %339 = vmatprep.subr.mxu0 0.0
    %340 = vmatpush2.msra.mxu0 0.0
    %341 = vmatprep.subr.mxu0 0.0
    %342 = vmatpush2.msra.mxu0 0.0
    %343 = vmatprep.subr.mxu0 0.0
    %344 = vmatpush2.msra.mxu0 0.0
    %345 = vmatprep.subr.mxu0 0.0
    %346 = vmatpush2.msra.mxu0 0.0
    %347 = vmatprep.mubr.f32.mxu0 0.0
    %348 = vmatmul.mubr.f32.gmra.mxu0 %v266
    %v349 = vpop.f32.mrf.mxu0
    %v350 = vadd.f32 %v79, %v349
    %v351 = vpop.f32.mrf.mxu0
    %352 = vdwg.mxu0
    %353 = vmax.xlane.f32.xlu0 %v350
    %v354 = vpop.xlane.xlu0 %353
    %v355 = vsub.f32 %v350, %v354
    %v356 = vmul.f32 %v355, 1.442695
    %v357 = vpow.pop %v356
    %358 = vadd.xlane.f32.xlu0 %v357
    %v359 = vpop.xlane.xlu0 %358
    %v360 = vlog2.pop %v359
    %v361 = vmul.f32 %v360, 0.6931472
    %v362 = vadd.f32 %v361, %v354
    %v363 = vsub.f32 %v350, %v362
    %364 = vst [vmem:[%s7] sm:$0xff] %v363
    %s365 = scalar_lea.vmem %s0, 8
    %v366 = vld [vmem:[%s365] sm:$0xff]
    %v367 = vld [vmem:[%s2] sm:$0xff]
    %v368 = vld [vmem:[%s2 + $0x8] sm:$0xff]
    %v369 = vld [vmem:[%s2 + $0x10] sm:$0xff]
    %v370 = vld [vmem:[%s2 + $0x18] sm:$0xff]
    %v371 = vld [vmem:[#allocation2] sm:$0xff]
    %v372 = vld [vmem:[#allocation2 + $0x8] sm:$0xff]
    %v373 = vld [vmem:[#allocation2 + $0x10] sm:$0xff]
    %v374 = vld [vmem:[#allocation2 + $0x18] sm:$0xff]
    %v375 = vld [vmem:[#allocation2 + $0x20] sm:$0xff]
    %v376 = vld [vmem:[#allocation2 + $0x28] sm:$0xff]
    %v377 = vld [vmem:[#allocation2 + $0x30] sm:$0xff]
    %v378 = vld [vmem:[#allocation2 + $0x38] sm:$0xff]
    %v379 = vld [vmem:[#allocation2 + $0x40] sm:$0xff]
    %v380 = vld [vmem:[#allocation2 + $0x48] sm:$0xff]
    %v381 = vld [vmem:[#allocation2 + $0x50] sm:$0xff]
    %v382 = vld [vmem:[#allocation2 + $0x58] sm:$0xff]
    %v383 = vld [vmem:[#allocation2 + $0x60] sm:$0xff]
    %v384 = vld [vmem:[#allocation2 + $0x68] sm:$0xff]
    %v385 = vld [vmem:[#allocation2 + $0x70] sm:$0xff]
    %v386 = vld [vmem:[#allocation2 + $0x78] sm:$0xff]
    %v387 = vld [vmem:[#allocation2 + $0x80] sm:$0xff]
    %v388 = vld [vmem:[#allocation2 + $0x88] sm:$0xff]
    %v389 = vld [vmem:[#allocation2 + $0x90] sm:$0xff]
    %v390 = vld [vmem:[#allocation2 + $0x98] sm:$0xff]
    %v391 = vld [vmem:[#allocation2 + $0xa0] sm:$0xff]
    %v392 = vld [vmem:[#allocation2 + $0xa8] sm:$0xff]
    %v393 = vld [vmem:[#allocation2 + $0xb0] sm:$0xff]
    %v394 = vld [vmem:[#allocation2 + $0xb8] sm:$0xff]
    %v395 = vld [vmem:[#allocation2 + $0xc0] sm:$0xff]
    %v396 = vld [vmem:[#allocation2 + $0xc8] sm:$0xff]
    %v397 = vld [vmem:[#allocation2 + $0xd0] sm:$0xff]
    %v398 = vld [vmem:[#allocation2 + $0xd8] sm:$0xff]
    %v399 = vld [vmem:[#allocation2 + $0xe0] sm:$0xff]
    %v400 = vld [vmem:[#allocation2 + $0xe8] sm:$0xff]
    %v401 = vld [vmem:[#allocation2 + $0xf0] sm:$0xff]
    %v402 = vld [vmem:[#allocation2 + $0xf8] sm:$0xff]
    %403 = vmatprep.subr.mxu0 %v402
    %404 = vmatpush1.msra.mxu0 %v401
    %405 = vmatprep.subr.mxu0 %v400
    %406 = vmatpush1.msra.mxu0 %v399
    %407 = vmatprep.subr.mxu0 %v398
    %408 = vmatpush1.msra.mxu0 %v397
    %409 = vmatprep.subr.mxu0 %v396
    %410 = vmatpush1.msra.mxu0 %v395
    %411 = vmatprep.subr.mxu0 %v394
    %412 = vmatpush1.msra.mxu0 %v393
    %413 = vmatprep.subr.mxu0 %v392
    %414 = vmatpush1.msra.mxu0 %v391
    %415 = vmatprep.subr.mxu0 %v390
    %416 = vmatpush1.msra.mxu0 %v389
    %417 = vmatprep.subr.mxu0 %v388
    %418 = vmatpush1.msra.mxu0 %v387
    %419 = vmatprep.subr.mxu0 %v386
    %420 = vmatpush1.msra.mxu0 %v385
    %421 = vmatprep.subr.mxu0 %v384
    %422 = vmatpush1.msra.mxu0 %v383
    %423 = vmatprep.subr.mxu0 %v382
    %424 = vmatpush1.msra.mxu0 %v381
    %425 = vmatprep.subr.mxu0 %v380
    %426 = vmatpush1.msra.mxu0 %v379
    %427 = vmatprep.subr.mxu0 %v378
    %428 = vmatpush1.msra.mxu0 %v377
    %429 = vmatprep.subr.mxu0 %v376
    %430 = vmatpush1.msra.mxu0 %v375
    %431 = vmatprep.subr.mxu0 %v374
    %432 = vmatpush1.msra.mxu0 %v373
    %433 = vmatprep.subr.mxu0 %v372
    %434 = vmatpush1.msra.mxu0 %v371
    %435 = vmatprep.subr.mxu0 0.0
    %436 = vmatpush2.msra.mxu0 0.0
    %437 = vmatprep.subr.mxu0 0.0
    %438 = vmatpush2.msra.mxu0 0.0
    %439 = vmatprep.subr.mxu0 0.0
    %440 = vmatpush2.msra.mxu0 0.0
    %441 = vmatprep.subr.mxu0 0.0
    %442 = vmatpush2.msra.mxu0 0.0
    %443 = vmatprep.subr.mxu0 0.0
    %444 = vmatpush2.msra.mxu0 0.0
    %445 = vmatprep.subr.mxu0 0.0
    %446 = vmatpush2.msra.mxu0 0.0
    %447 = vmatprep.subr.mxu0 0.0
    %448 = vmatpush2.msra.mxu0 0.0
    %449 = vmatprep.subr.mxu0 0.0
    %450 = vmatpush2.msra.mxu0 0.0
    %451 = vmatprep.subr.mxu0 0.0
    %452 = vmatpush2.msra.mxu0 0.0
    %453 = vmatprep.subr.mxu0 0.0
    %454 = vmatpush2.msra.mxu0 0.0
    %455 = vmatprep.subr.mxu0 0.0
    %456 = vmatpush2.msra.mxu0 0.0
    %457 = vmatprep.subr.mxu0 0.0
    %458 = vmatpush2.msra.mxu0 0.0
    %459 = vmatprep.subr.mxu0 0.0
    %460 = vmatpush2.msra.mxu0 0.0
    %461 = vmatprep.subr.mxu0 0.0
    %462 = vmatpush2.msra.mxu0 0.0
    %463 = vmatprep.subr.mxu0 0.0
    %464 = vmatpush2.msra.mxu0 0.0
    %465 = vmatprep.subr.mxu0 0.0
    %466 = vmatpush2.msra.mxu0 0.0
    %467 = vmatprep.mubr.f32.mxu0 0.0
    %468 = vmatmul.mubr.f32.gmra.mxu0 %v265
    %v469 = vpop.f32.mrf.mxu0
    %v470 = vadd.f32 0.0, %v469
    %v471 = vpop.f32.mrf.mxu0
    %v472 = vadd.f32 0.0, %v471
    %473 = vdwg.mxu0
    %v475 = vsel %vm190, %v366, 0
    %477 = vmatprep.subr.mxu0 0.0
    %478 = vmatpush1.msra.mxu0 0.0
    %479 = vmatprep.subr.mxu0 0.0
    %480 = vmatpush1.msra.mxu0 0.0
    %481 = vmatprep.subr.mxu0 0.0
    %482 = vmatpush1.msra.mxu0 0.0
    %483 = vmatprep.subr.mxu0 0.0
    %484 = vmatpush1.msra.mxu0 0.0
    %485 = vmatprep.subr.mxu0 0.0
    %486 = vmatpush1.msra.mxu0 0.0
    %487 = vmatprep.subr.mxu0 0.0
    %488 = vmatpush1.msra.mxu0 0.0
    %489 = vmatprep.subr.mxu0 0.0
    %490 = vmatpush1.msra.mxu0 0.0
    %491 = vmatprep.subr.mxu0 0.0
    %492 = vmatpush1.msra.mxu0 0.0
    %493 = vmatprep.subr.mxu0 0.0
    %494 = vmatpush1.msra.mxu0 0.0
    %495 = vmatprep.subr.mxu0 0.0
    %496 = vmatpush1.msra.mxu0 0.0
    %497 = vmatprep.subr.mxu0 0.0
    %498 = vmatpush1.msra.mxu0 0.0
    %499 = vmatprep.subr.mxu0 0.0
    %500 = vmatpush1.msra.mxu0 0.0
    %501 = vmatprep.subr.mxu0 0.0
    %502 = vmatpush1.msra.mxu0 0.0
    %503 = vmatprep.subr.mxu0 0.0
    %504 = vmatpush1.msra.mxu0 0.0
    %505 = vmatprep.subr.mxu0 %v370
    %506 = vmatpush1.msra.mxu0 %v369
    %507 = vmatprep.subr.mxu0 %v368
    %508 = vmatpush1.msra.mxu0 %v367
    %509 = vmatprep.subr.mxu0 0.0
    %510 = vmatpush2.msra.mxu0 0.0
    %511 = vmatprep.subr.mxu0 0.0
    %512 = vmatpush2.msra.mxu0 0.0
    %513 = vmatprep.subr.mxu0 0.0
    %514 = vmatpush2.msra.mxu0 0.0
    %515 = vmatprep.subr.mxu0 0.0
    %516 = vmatpush2.msra.mxu0 0.0
    %517 = vmatprep.subr.mxu0 0.0
    %518 = vmatpush2.msra.mxu0 0.0
    %519 = vmatprep.subr.mxu0 0.0
    %520 = vmatpush2.msra.mxu0 0.0
    %521 = vmatprep.subr.mxu0 0.0
    %522 = vmatpush2.msra.mxu0 0.0
    %523 = vmatprep.subr.mxu0 0.0
    %524 = vmatpush2.msra.mxu0 0.0
    %525 = vmatprep.subr.mxu0 0.0
    %526 = vmatpush2.msra.mxu0 0.0
    %527 = vmatprep.subr.mxu0 0.0
    %528 = vmatpush2.msra.mxu0 0.0
    %529 = vmatprep.subr.mxu0 0.0
    %530 = vmatpush2.msra.mxu0 0.0
    %531 = vmatprep.subr.mxu0 0.0
    %532 = vmatpush2.msra.mxu0 0.0
    %533 = vmatprep.subr.mxu0 0.0
    %534 = vmatpush2.msra.mxu0 0.0
    %535 = vmatprep.subr.mxu0 0.0
    %536 = vmatpush2.msra.mxu0 0.0
    %537 = vmatprep.subr.mxu0 0.0
    %538 = vmatpush2.msra.mxu0 0.0
    %539 = vmatprep.subr.mxu0 0.0
    %540 = vmatpush2.msra.mxu0 0.0
    %541 = vmatprep.mubr.f32.mxu0 0.0
    %542 = vmatmul.mubr.f32.gmra.mxu0 %v475
    %v543 = vpop.f32.mrf.mxu0
    %v544 = vadd.f32 %v470, %v543
    %v545 = vpop.f32.mrf.mxu0
    %v546 = vadd.f32 %v472, %v545
    %547 = vdwg.mxu0
    %v548 = vadd.f32 %v544, %v67
    %v549 = vadd.f32 %v546, %v71
    %v550 = vld [vmem:[#allocation4] sm:$0xff]
    %v551 = vld [vmem:[#allocation4 + $0x8] sm:$0xff]
    %v552 = vld [vmem:[#allocation4 + $0x10] sm:$0xff]
    %v553 = vld [vmem:[#allocation4 + $0x18] sm:$0xff]
    %v554 = vld [vmem:[#allocation4 + $0x20] sm:$0xff]
    %v555 = vld [vmem:[#allocation4 + $0x28] sm:$0xff]
    %v556 = vld [vmem:[#allocation4 + $0x30] sm:$0xff]
    %v557 = vld [vmem:[#allocation4 + $0x38] sm:$0xff]
    %v558 = vld [vmem:[#allocation4 + $0x40] sm:$0xff]
    %v559 = vld [vmem:[#allocation4 + $0x48] sm:$0xff]
    %v560 = vld [vmem:[#allocation4 + $0x50] sm:$0xff]
    %v561 = vld [vmem:[#allocation4 + $0x58] sm:$0xff]
    %v562 = vld [vmem:[#allocation4 + $0x60] sm:$0xff]
    %v563 = vld [vmem:[#allocation4 + $0x68] sm:$0xff]
    %v564 = vld [vmem:[#allocation4 + $0x70] sm:$0xff]
    %v565 = vld [vmem:[#allocation4 + $0x78] sm:$0xff]
    %566 = vmatprep.subr.mxu0 0.0
    %567 = vmatpush1.msra.mxu0 %v565
    %568 = vmatprep.subr.mxu0 0.0
    %569 = vmatpush1.msra.mxu0 %v564
    %570 = vmatprep.subr.mxu0 0.0
    %571 = vmatpush1.msra.mxu0 %v563
    %572 = vmatprep.subr.mxu0 0.0
    %573 = vmatpush1.msra.mxu0 %v562
    %574 = vmatprep.subr.mxu0 0.0
    %575 = vmatpush1.msra.mxu0 %v561
    %576 = vmatprep.subr.mxu0 0.0
    %577 = vmatpush1.msra.mxu0 %v560
    %578 = vmatprep.subr.mxu0 0.0
    %579 = vmatpush1.msra.mxu0 %v559
    %580 = vmatprep.subr.mxu0 0.0
    %581 = vmatpush1.msra.mxu0 %v558
    %582 = vmatprep.subr.mxu0 0.0
    %583 = vmatpush1.msra.mxu0 %v557
    %584 = vmatprep.subr.mxu0 0.0
    %585 = vmatpush1.msra.mxu0 %v556
    %586 = vmatprep.subr.mxu0 0.0
    %587 = vmatpush1.msra.mxu0 %v555
    %588 = vmatprep.subr.mxu0 0.0
    %589 = vmatpush1.msra.mxu0 %v554
    %590 = vmatprep.subr.mxu0 0.0
    %591 = vmatpush1.msra.mxu0 %v553
    %592 = vmatprep.subr.mxu0 0.0
    %593 = vmatpush1.msra.mxu0 %v552
    %594 = vmatprep.subr.mxu0 0.0
    %595 = vmatpush1.msra.mxu0 %v551
    %596 = vmatprep.subr.mxu0 0.0
    %597 = vmatpush1.msra.mxu0 %v550
    %598 = vmatprep.subr.mxu0 0.0
    %599 = vmatpush2.msra.mxu0 0.0
    %600 = vmatprep.subr.mxu0 0.0
    %601 = vmatpush2.msra.mxu0 0.0
    %602 = vmatprep.subr.mxu0 0.0
    %603 = vmatpush2.msra.mxu0 0.0
    %604 = vmatprep.subr.mxu0 0.0
    %605 = vmatpush2.msra.mxu0 0.0
    %606 = vmatprep.subr.mxu0 0.0
    %607 = vmatpush2.msra.mxu0 0.0
    %608 = vmatprep.subr.mxu0 0.0
    %609 = vmatpush2.msra.mxu0 0.0
    %610 = vmatprep.subr.mxu0 0.0
    %611 = vmatpush2.msra.mxu0 0.0
    %612 = vmatprep.subr.mxu0 0.0
    %613 = vmatpush2.msra.mxu0 0.0
    %614 = vmatprep.subr.mxu0 0.0
    %615 = vmatpush2.msra.mxu0 0.0
    %616 = vmatprep.subr.mxu0 0.0
    %617 = vmatpush2.msra.mxu0 0.0
    %618 = vmatprep.subr.mxu0 0.0
    %619 = vmatpush2.msra.mxu0 0.0
    %620 = vmatprep.subr.mxu0 0.0
    %621 = vmatpush2.msra.mxu0 0.0
    %622 = vmatprep.subr.mxu0 0.0
    %623 = vmatpush2.msra.mxu0 0.0
    %624 = vmatprep.subr.mxu0 0.0
    %625 = vmatpush2.msra.mxu0 0.0
    %626 = vmatprep.subr.mxu0 0.0
    %627 = vmatpush2.msra.mxu0 0.0
    %628 = vmatprep.subr.mxu0 0.0
    %629 = vmatpush2.msra.mxu0 0.0
    %630 = vmatprep.mubr.f32.mxu0 0.0
    %631 = vmatmul.mubr.f32.gmra.mxu0 %v549
    %v632 = vpop.f32.mrf.mxu0
    %v633 = vadd.f32 %v79, %v632
    %v634 = vpop.f32.mrf.mxu0
    %635 = vdwg.mxu0
    %636 = vmax.xlane.f32.xlu0 %v633
    %v637 = vpop.xlane.xlu0 %636
    %v638 = vsub.f32 %v633, %v637
    %v639 = vmul.f32 %v638, 1.442695
    %v640 = vpow.pop %v639
    %641 = vadd.xlane.f32.xlu0 %v640
    %v642 = vpop.xlane.xlu0 %641
    %v643 = vlog2.pop %v642
    %v644 = vmul.f32 %v643, 0.6931472
    %v645 = vadd.f32 %v644, %v637
    %v646 = vsub.f32 %v633, %v645
    %s647 = scalar_lea.vmem %s7, 8
    %648 = vst [vmem:[%s647] sm:$0xff] %v646
    %s649 = scalar_lea.vmem %s0, 16
    %v650 = vld [vmem:[%s649] sm:$0xff]
    %v651 = vld [vmem:[%s2] sm:$0xff]
    %v652 = vld [vmem:[%s2 + $0x8] sm:$0xff]
    %v653 = vld [vmem:[%s2 + $0x10] sm:$0xff]
    %v654 = vld [vmem:[%s2 + $0x18] sm:$0xff]
    %v655 = vld [vmem:[#allocation2] sm:$0xff]
    %v656 = vld [vmem:[#allocation2 + $0x8] sm:$0xff]
    %v657 = vld [vmem:[#allocation2 + $0x10] sm:$0xff]
    %v658 = vld [vmem:[#allocation2 + $0x18] sm:$0xff]
    %v659 = vld [vmem:[#allocation2 + $0x20] sm:$0xff]
    %v660 = vld [vmem:[#allocation2 + $0x28] sm:$0xff]
    %v661 = vld [vmem:[#allocation2 + $0x30] sm:$0xff]
    %v662 = vld [vmem:[#allocation2 + $0x38] sm:$0xff]
    %v663 = vld [vmem:[#allocation2 + $0x40] sm:$0xff]
    %v664 = vld [vmem:[#allocation2 + $0x48] sm:$0xff]
    %v665 = vld [vmem:[#allocation2 + $0x50] sm:$0xff]
    %v666 = vld [vmem:[#allocation2 + $0x58] sm:$0xff]
    %v667 = vld [vmem:[#allocation2 + $0x60] sm:$0xff]
    %v668 = vld [vmem:[#allocation2 + $0x68] sm:$0xff]
    %v669 = vld [vmem:[#allocation2 + $0x70] sm:$0xff]
    %v670 = vld [vmem:[#allocation2 + $0x78] sm:$0xff]
    %v671 = vld [vmem:[#allocation2 + $0x80] sm:$0xff]
    %v672 = vld [vmem:[#allocation2 + $0x88] sm:$0xff]
    %v673 = vld [vmem:[#allocation2 + $0x90] sm:$0xff]
    %v674 = vld [vmem:[#allocation2 + $0x98] sm:$0xff]
    %v675 = vld [vmem:[#allocation2 + $0xa0] sm:$0xff]
    %v676 = vld [vmem:[#allocation2 + $0xa8] sm:$0xff]
    %v677 = vld [vmem:[#allocation2 + $0xb0] sm:$0xff]
    %v678 = vld [vmem:[#allocation2 + $0xb8] sm:$0xff]
    %v679 = vld [vmem:[#allocation2 + $0xc0] sm:$0xff]
    %v680 = vld [vmem:[#allocation2 + $0xc8] sm:$0xff]
    %v681 = vld [vmem:[#allocation2 + $0xd0] sm:$0xff]
    %v682 = vld [vmem:[#allocation2 + $0xd8] sm:$0xff]
    %v683 = vld [vmem:[#allocation2 + $0xe0] sm:$0xff]
    %v684 = vld [vmem:[#allocation2 + $0xe8] sm:$0xff]
    %v685 = vld [vmem:[#allocation2 + $0xf0] sm:$0xff]
    %v686 = vld [vmem:[#allocation2 + $0xf8] sm:$0xff]
    %687 = vmatprep.subr.mxu0 %v686
    %688 = vmatpush1.msra.mxu0 %v685
    %689 = vmatprep.subr.mxu0 %v684
    %690 = vmatpush1.msra.mxu0 %v683
    %691 = vmatprep.subr.mxu0 %v682
    %692 = vmatpush1.msra.mxu0 %v681
    %693 = vmatprep.subr.mxu0 %v680
    %694 = vmatpush1.msra.mxu0 %v679
    %695 = vmatprep.subr.mxu0 %v678
    %696 = vmatpush1.msra.mxu0 %v677
    %697 = vmatprep.subr.mxu0 %v676
    %698 = vmatpush1.msra.mxu0 %v675
    %699 = vmatprep.subr.mxu0 %v674
    %700 = vmatpush1.msra.mxu0 %v673
    %701 = vmatprep.subr.mxu0 %v672
    %702 = vmatpush1.msra.mxu0 %v671
    %703 = vmatprep.subr.mxu0 %v670
    %704 = vmatpush1.msra.mxu0 %v669
    %705 = vmatprep.subr.mxu0 %v668
    %706 = vmatpush1.msra.mxu0 %v667
    %707 = vmatprep.subr.mxu0 %v666
    %708 = vmatpush1.msra.mxu0 %v665
    %709 = vmatprep.subr.mxu0 %v664
    %710 = vmatpush1.msra.mxu0 %v663
    %711 = vmatprep.subr.mxu0 %v662
    %712 = vmatpush1.msra.mxu0 %v661
    %713 = vmatprep.subr.mxu0 %v660
    %714 = vmatpush1.msra.mxu0 %v659
    %715 = vmatprep.subr.mxu0 %v658
    %716 = vmatpush1.msra.mxu0 %v657
    %717 = vmatprep.subr.mxu0 %v656
    %718 = vmatpush1.msra.mxu0 %v655
    %719 = vmatprep.subr.mxu0 0.0
    %720 = vmatpush2.msra.mxu0 0.0
    %721 = vmatprep.subr.mxu0 0.0
    %722 = vmatpush2.msra.mxu0 0.0
    %723 = vmatprep.subr.mxu0 0.0
    %724 = vmatpush2.msra.mxu0 0.0
    %725 = vmatprep.subr.mxu0 0.0
    %726 = vmatpush2.msra.mxu0 0.0
    %727 = vmatprep.subr.mxu0 0.0
    %728 = vmatpush2.msra.mxu0 0.0
    %729 = vmatprep.subr.mxu0 0.0
    %730 = vmatpush2.msra.mxu0 0.0
    %731 = vmatprep.subr.mxu0 0.0
    %732 = vmatpush2.msra.mxu0 0.0
    %733 = vmatprep.subr.mxu0 0.0
    %734 = vmatpush2.msra.mxu0 0.0
    %735 = vmatprep.subr.mxu0 0.0
    %736 = vmatpush2.msra.mxu0 0.0
    %737 = vmatprep.subr.mxu0 0.0
    %738 = vmatpush2.msra.mxu0 0.0
    %739 = vmatprep.subr.mxu0 0.0
    %740 = vmatpush2.msra.mxu0 0.0
    %741 = vmatprep.subr.mxu0 0.0
    %742 = vmatpush2.msra.mxu0 0.0
    %743 = vmatprep.subr.mxu0 0.0
    %744 = vmatpush2.msra.mxu0 0.0
    %745 = vmatprep.subr.mxu0 0.0
    %746 = vmatpush2.msra.mxu0 0.0
    %747 = vmatprep.subr.mxu0 0.0
    %748 = vmatpush2.msra.mxu0 0.0
    %749 = vmatprep.subr.mxu0 0.0
    %750 = vmatpush2.msra.mxu0 0.0
    %751 = vmatprep.mubr.f32.mxu0 0.0
    %752 = vmatmul.mubr.f32.gmra.mxu0 %v548
    %v753 = vpop.f32.mrf.mxu0
    %v754 = vadd.f32 0.0, %v753
    %v755 = vpop.f32.mrf.mxu0
    %v756 = vadd.f32 0.0, %v755
    %757 = vdwg.mxu0
    %v759 = vsel %vm190, %v650, 0
    %761 = vmatprep.subr.mxu0 0.0
    %762 = vmatpush1.msra.mxu0 0.0
    %763 = vmatprep.subr.mxu0 0.0
    %764 = vmatpush1.msra.mxu0 0.0
    %765 = vmatprep.subr.mxu0 0.0
    %766 = vmatpush1.msra.mxu0 0.0
    %767 = vmatprep.subr.mxu0 0.0
    %768 = vmatpush1.msra.mxu0 0.0
    %769 = vmatprep.subr.mxu0 0.0
    %770 = vmatpush1.msra.mxu0 0.0
    %771 = vmatprep.subr.mxu0 0.0
    %772 = vmatpush1.msra.mxu0 0.0
    %773 = vmatprep.subr.mxu0 0.0
    %774 = vmatpush1.msra.mxu0 0.0
    %775 = vmatprep.subr.mxu0 0.0
    %776 = vmatpush1.msra.mxu0 0.0
    %777 = vmatprep.subr.mxu0 0.0
    %778 = vmatpush1.msra.mxu0 0.0
    %779 = vmatprep.subr.mxu0 0.0
    %780 = vmatpush1.msra.mxu0 0.0
    %781 = vmatprep.subr.mxu0 0.0
    %782 = vmatpush1.msra.mxu0 0.0
    %783 = vmatprep.subr.mxu0 0.0
    %784 = vmatpush1.msra.mxu0 0.0
    %785 = vmatprep.subr.mxu0 0.0
    %786 = vmatpush1.msra.mxu0 0.0
    %787 = vmatprep.subr.mxu0 0.0
    %788 = vmatpush1.msra.mxu0 0.0
    %789 = vmatprep.subr.mxu0 %v654
    %790 = vmatpush1.msra.mxu0 %v653
    %791 = vmatprep.subr.mxu0 %v652
    %792 = vmatpush1.msra.mxu0 %v651
    %793 = vmatprep.subr.mxu0 0.0
    %794 = vmatpush2.msra.mxu0 0.0
    %795 = vmatprep.subr.mxu0 0.0
    %796 = vmatpush2.msra.mxu0 0.0
    %797 = vmatprep.subr.mxu0 0.0
    %798 = vmatpush2.msra.mxu0 0.0
    %799 = vmatprep.subr.mxu0 0.0
    %800 = vmatpush2.msra.mxu0 0.0
    %801 = vmatprep.subr.mxu0 0.0
    %802 = vmatpush2.msra.mxu0 0.0
    %803 = vmatprep.subr.mxu0 0.0
    %804 = vmatpush2.msra.mxu0 0.0
    %805 = vmatprep.subr.mxu0 0.0
    %806 = vmatpush2.msra.mxu0 0.0
    %807 = vmatprep.subr.mxu0 0.0
    %808 = vmatpush2.msra.mxu0 0.0
    %809 = vmatprep.subr.mxu0 0.0
    %810 = vmatpush2.msra.mxu0 0.0
    %811 = vmatprep.subr.mxu0 0.0
    %812 = vmatpush2.msra.mxu0 0.0
    %813 = vmatprep.subr.mxu0 0.0
    %814 = vmatpush2.msra.mxu0 0.0
    %815 = vmatprep.subr.mxu0 0.0
    %816 = vmatpush2.msra.mxu0 0.0
    %817 = vmatprep.subr.mxu0 0.0
    %818 = vmatpush2.msra.mxu0 0.0
    %819 = vmatprep.subr.mxu0 0.0
    %820 = vmatpush2.msra.mxu0 0.0
    %821 = vmatprep.subr.mxu0 0.0
    %822 = vmatpush2.msra.mxu0 0.0
    %823 = vmatprep.subr.mxu0 0.0
    %824 = vmatpush2.msra.mxu0 0.0
    %825 = vmatprep.mubr.f32.mxu0 0.0
    %826 = vmatmul.mubr.f32.gmra.mxu0 %v759
    %v827 = vpop.f32.mrf.mxu0
    %v828 = vadd.f32 %v754, %v827
    %v829 = vpop.f32.mrf.mxu0
    %v830 = vadd.f32 %v756, %v829
    %831 = vdwg.mxu0
    %v832 = vadd.f32 %v828, %v67
    %v833 = vadd.f32 %v830, %v71
    %v834 = vld [vmem:[#allocation4] sm:$0xff]
    %v835 = vld [vmem:[#allocation4 + $0x8] sm:$0xff]
    %v836 = vld [vmem:[#allocation4 + $0x10] sm:$0xff]
    %v837 = vld [vmem:[#allocation4 + $0x18] sm:$0xff]
    %v838 = vld [vmem:[#allocation4 + $0x20] sm:$0xff]
    %v839 = vld [vmem:[#allocation4 + $0x28] sm:$0xff]
    %v840 = vld [vmem:[#allocation4 + $0x30] sm:$0xff]
    %v841 = vld [vmem:[#allocation4 + $0x38] sm:$0xff]
    %v842 = vld [vmem:[#allocation4 + $0x40] sm:$0xff]
    %v843 = vld [vmem:[#allocation4 + $0x48] sm:$0xff]
    %v844 = vld [vmem:[#allocation4 + $0x50] sm:$0xff]
    %v845 = vld [vmem:[#allocation4 + $0x58] sm:$0xff]
    %v846 = vld [vmem:[#allocation4 + $0x60] sm:$0xff]
    %v847 = vld [vmem:[#allocation4 + $0x68] sm:$0xff]
    %v848 = vld [vmem:[#allocation4 + $0x70] sm:$0xff]
    %v849 = vld [vmem:[#allocation4 + $0x78] sm:$0xff]
    %850 = vmatprep.subr.mxu0 0.0
    %851 = vmatpush1.msra.mxu0 %v849
    %852 = vmatprep.subr.mxu0 0.0
    %853 = vmatpush1.msra.mxu0 %v848
    %854 = vmatprep.subr.mxu0 0.0
    %855 = vmatpush1.msra.mxu0 %v847
    %856 = vmatprep.subr.mxu0 0.0
    %857 = vmatpush1.msra.mxu0 %v846
    %858 = vmatprep.subr.mxu0 0.0
    %859 = vmatpush1.msra.mxu0 %v845
    %860 = vmatprep.subr.mxu0 0.0
    %861 = vmatpush1.msra.mxu0 %v844
    %862 = vmatprep.subr.mxu0 0.0
    %863 = vmatpush1.msra.mxu0 %v843
    %864 = vmatprep.subr.mxu0 0.0
    %865 = vmatpush1.msra.mxu0 %v842
    %866 = vmatprep.subr.mxu0 0.0
    %867 = vmatpush1.msra.mxu0 %v841
    %868 = vmatprep.subr.mxu0 0.0
    %869 = vmatpush1.msra.mxu0 %v840
    %870 = vmatprep.subr.mxu0 0.0
    %871 = vmatpush1.msra.mxu0 %v839
    %872 = vmatprep.subr.mxu0 0.0
    %873 = vmatpush1.msra.mxu0 %v838
    %874 = vmatprep.subr.mxu0 0.0
    %875 = vmatpush1.msra.mxu0 %v837
    %876 = vmatprep.subr.mxu0 0.0
    %877 = vmatpush1.msra.mxu0 %v836
    %878 = vmatprep.subr.mxu0 0.0
    %879 = vmatpush1.msra.mxu0 %v835
    %880 = vmatprep.subr.mxu0 0.0
    %881 = vmatpush1.msra.mxu0 %v834
    %882 = vmatprep.subr.mxu0 0.0
    %883 = vmatpush2.msra.mxu0 0.0
    %884 = vmatprep.subr.mxu0 0.0
    %885 = vmatpush2.msra.mxu0 0.0
    %886 = vmatprep.subr.mxu0 0.0
    %887 = vmatpush2.msra.mxu0 0.0
    %888 = vmatprep.subr.mxu0 0.0
    %889 = vmatpush2.msra.mxu0 0.0
    %890 = vmatprep.subr.mxu0 0.0
    %891 = vmatpush2.msra.mxu0 0.0
    %892 = vmatprep.subr.mxu0 0.0
    %893 = vmatpush2.msra.mxu0 0.0
    %894 = vmatprep.subr.mxu0 0.0
    %895 = vmatpush2.msra.mxu0 0.0
    %896 = vmatprep.subr.mxu0 0.0
    %897 = vmatpush2.msra.mxu0 0.0
    %898 = vmatprep.subr.mxu0 0.0
    %899 = vmatpush2.msra.mxu0 0.0
    %900 = vmatprep.subr.mxu0 0.0
    %901 = vmatpush2.msra.mxu0 0.0
    %902 = vmatprep.subr.mxu0 0.0
    %903 = vmatpush2.msra.mxu0 0.0
    %904 = vmatprep.subr.mxu0 0.0
    %905 = vmatpush2.msra.mxu0 0.0
    %906 = vmatprep.subr.mxu0 0.0
    %907 = vmatpush2.msra.mxu0 0.0
    %908 = vmatprep.subr.mxu0 0.0
    %909 = vmatpush2.msra.mxu0 0.0
    %910 = vmatprep.subr.mxu0 0.0
    %911 = vmatpush2.msra.mxu0 0.0
    %912 = vmatprep.subr.mxu0 0.0
    %913 = vmatpush2.msra.mxu0 0.0
    %914 = vmatprep.mubr.f32.mxu0 0.0
    %915 = vmatmul.mubr.f32.gmra.mxu0 %v833
    %v916 = vpop.f32.mrf.mxu0
    %v917 = vadd.f32 %v79, %v916
    %v918 = vpop.f32.mrf.mxu0
    %919 = vdwg.mxu0
    %920 = vmax.xlane.f32.xlu0 %v917
    %v921 = vpop.xlane.xlu0 %920
    %v922 = vsub.f32 %v917, %v921
    %v923 = vmul.f32 %v922, 1.442695
    %v924 = vpow.pop %v923
    %925 = vadd.xlane.f32.xlu0 %v924
    %v926 = vpop.xlane.xlu0 %925
    %v927 = vlog2.pop %v926
    %v928 = vmul.f32 %v927, 0.6931472
    %v929 = vadd.f32 %v928, %v921
    %v930 = vsub.f32 %v917, %v929
    %s931 = scalar_lea.vmem %s7, 16
    %932 = vst [vmem:[%s931] sm:$0xff] %v930
    %s933 = scalar_lea.vmem %s0, 24
    %v934 = vld [vmem:[%s933] sm:$0xff]
    %v935 = vld [vmem:[%s2] sm:$0xff]
    %v936 = vld [vmem:[%s2 + $0x8] sm:$0xff]
    %v937 = vld [vmem:[%s2 + $0x10] sm:$0xff]
    %v938 = vld [vmem:[%s2 + $0x18] sm:$0xff]
    %v939 = vld [vmem:[#allocation2] sm:$0xff]
    %v940 = vld [vmem:[#allocation2 + $0x8] sm:$0xff]
    %v941 = vld [vmem:[#allocation2 + $0x10] sm:$0xff]
    %v942 = vld [vmem:[#allocation2 + $0x18] sm:$0xff]
    %v943 = vld [vmem:[#allocation2 + $0x20] sm:$0xff]
    %v944 = vld [vmem:[#allocation2 + $0x28] sm:$0xff]
    %v945 = vld [vmem:[#allocation2 + $0x30] sm:$0xff]
    %v946 = vld [vmem:[#allocation2 + $0x38] sm:$0xff]
    %v947 = vld [vmem:[#allocation2 + $0x40] sm:$0xff]
    %v948 = vld [vmem:[#allocation2 + $0x48] sm:$0xff]
    %v949 = vld [vmem:[#allocation2 + $0x50] sm:$0xff]
    %v950 = vld [vmem:[#allocation2 + $0x58] sm:$0xff]
    %v951 = vld [vmem:[#allocation2 + $0x60] sm:$0xff]
    %v952 = vld [vmem:[#allocation2 + $0x68] sm:$0xff]
    %v953 = vld [vmem:[#allocation2 + $0x70] sm:$0xff]
    %v954 = vld [vmem:[#allocation2 + $0x78] sm:$0xff]
    %v955 = vld [vmem:[#allocation2 + $0x80] sm:$0xff]
    %v956 = vld [vmem:[#allocation2 + $0x88] sm:$0xff]
    %v957 = vld [vmem:[#allocation2 + $0x90] sm:$0xff]
    %v958 = vld [vmem:[#allocation2 + $0x98] sm:$0xff]
    %v959 = vld [vmem:[#allocation2 + $0xa0] sm:$0xff]
    %v960 = vld [vmem:[#allocation2 + $0xa8] sm:$0xff]
    %v961 = vld [vmem:[#allocation2 + $0xb0] sm:$0xff]
    %v962 = vld [vmem:[#allocation2 + $0xb8] sm:$0xff]
    %v963 = vld [vmem:[#allocation2 + $0xc0] sm:$0xff]
    %v964 = vld [vmem:[#allocation2 + $0xc8] sm:$0xff]
    %v965 = vld [vmem:[#allocation2 + $0xd0] sm:$0xff]
    %v966 = vld [vmem:[#allocation2 + $0xd8] sm:$0xff]
    %v967 = vld [vmem:[#allocation2 + $0xe0] sm:$0xff]
    %v968 = vld [vmem:[#allocation2 + $0xe8] sm:$0xff]
    %v969 = vld [vmem:[#allocation2 + $0xf0] sm:$0xff]
    %v970 = vld [vmem:[#allocation2 + $0xf8] sm:$0xff]
    %971 = vmatprep.subr.mxu0 %v970
    %972 = vmatpush1.msra.mxu0 %v969
    %973 = vmatprep.subr.mxu0 %v968
    %974 = vmatpush1.msra.mxu0 %v967
    %975 = vmatprep.subr.mxu0 %v966
    %976 = vmatpush1.msra.mxu0 %v965
    %977 = vmatprep.subr.mxu0 %v964
    %978 = vmatpush1.msra.mxu0 %v963
    %979 = vmatprep.subr.mxu0 %v962
    %980 = vmatpush1.msra.mxu0 %v961
    %981 = vmatprep.subr.mxu0 %v960
    %982 = vmatpush1.msra.mxu0 %v959
    %983 = vmatprep.subr.mxu0 %v958
    %984 = vmatpush1.msra.mxu0 %v957
    %985 = vmatprep.subr.mxu0 %v956
    %986 = vmatpush1.msra.mxu0 %v955
    %987 = vmatprep.subr.mxu0 %v954
    %988 = vmatpush1.msra.mxu0 %v953
    %989 = vmatprep.subr.mxu0 %v952
    %990 = vmatpush1.msra.mxu0 %v951
    %991 = vmatprep.subr.mxu0 %v950
    %992 = vmatpush1.msra.mxu0 %v949
    %993 = vmatprep.subr.mxu0 %v948
    %994 = vmatpush1.msra.mxu0 %v947
    %995 = vmatprep.subr.mxu0 %v946
    %996 = vmatpush1.msra.mxu0 %v945
    %997 = vmatprep.subr.mxu0 %v944
    %998 = vmatpush1.msra.mxu0 %v943
    %999 = vmatprep.subr.mxu0 %v942
    %1000 = vmatpush1.msra.mxu0 %v941
    %1001 = vmatprep.subr.mxu0 %v940
    %1002 = vmatpush1.msra.mxu0 %v939
    %1003 = vmatprep.subr.mxu0 0.0
    %1004 = vmatpush2.msra.mxu0 0.0
    %1005 = vmatprep.subr.mxu0 0.0
    %1006 = vmatpush2.msra.mxu0 0.0
    %1007 = vmatprep.subr.mxu0 0.0
    %1008 = vmatpush2.msra.mxu0 0.0
    %1009 = vmatprep.subr.mxu0 0.0
    %1010 = vmatpush2.msra.mxu0 0.0
    %1011 = vmatprep.subr.mxu0 0.0
    %1012 = vmatpush2.msra.mxu0 0.0
    %1013 = vmatprep.subr.mxu0 0.0
    %1014 = vmatpush2.msra.mxu0 0.0
    %1015 = vmatprep.subr.mxu0 0.0
    %1016 = vmatpush2.msra.mxu0 0.0
    %1017 = vmatprep.subr.mxu0 0.0
    %1018 = vmatpush2.msra.mxu0 0.0
    %1019 = vmatprep.subr.mxu0 0.0
    %1020 = vmatpush2.msra.mxu0 0.0
    %1021 = vmatprep.subr.mxu0 0.0
    %1022 = vmatpush2.msra.mxu0 0.0
    %1023 = vmatprep.subr.mxu0 0.0
    %1024 = vmatpush2.msra.mxu0 0.0
    %1025 = vmatprep.subr.mxu0 0.0
    %1026 = vmatpush2.msra.mxu0 0.0
    %1027 = vmatprep.subr.mxu0 0.0
    %1028 = vmatpush2.msra.mxu0 0.0
    %1029 = vmatprep.subr.mxu0 0.0
    %1030 = vmatpush2.msra.mxu0 0.0
    %1031 = vmatprep.subr.mxu0 0.0
    %1032 = vmatpush2.msra.mxu0 0.0
    %1033 = vmatprep.subr.mxu0 0.0
    %1034 = vmatpush2.msra.mxu0 0.0
    %1035 = vmatprep.mubr.f32.mxu0 0.0
    %1036 = vmatmul.mubr.f32.gmra.mxu0 %v832
    %v1037 = vpop.f32.mrf.mxu0
    %v1038 = vadd.f32 0.0, %v1037
    %v1039 = vpop.f32.mrf.mxu0
    %v1040 = vadd.f32 0.0, %v1039
    %1041 = vdwg.mxu0
    %v1043 = vsel %vm190, %v934, 0
    %1045 = vmatprep.subr.mxu0 0.0
    %1046 = vmatpush1.msra.mxu0 0.0
    %1047 = vmatprep.subr.mxu0 0.0
    %1048 = vmatpush1.msra.mxu0 0.0
    %1049 = vmatprep.subr.mxu0 0.0
    %1050 = vmatpush1.msra.mxu0 0.0
    %1051 = vmatprep.subr.mxu0 0.0
    %1052 = vmatpush1.msra.mxu0 0.0
    %1053 = vmatprep.subr.mxu0 0.0
    %1054 = vmatpush1.msra.mxu0 0.0
    %1055 = vmatprep.subr.mxu0 0.0
    %1056 = vmatpush1.msra.mxu0 0.0
    %1057 = vmatprep.subr.mxu0 0.0
    %1058 = vmatpush1.msra.mxu0 0.0
    %1059 = vmatprep.subr.mxu0 0.0
    %1060 = vmatpush1.msra.mxu0 0.0
    %1061 = vmatprep.subr.mxu0 0.0
    %1062 = vmatpush1.msra.mxu0 0.0
    %1063 = vmatprep.subr.mxu0 0.0
    %1064 = vmatpush1.msra.mxu0 0.0
    %1065 = vmatprep.subr.mxu0 0.0
    %1066 = vmatpush1.msra.mxu0 0.0
    %1067 = vmatprep.subr.mxu0 0.0
    %1068 = vmatpush1.msra.mxu0 0.0
    %1069 = vmatprep.subr.mxu0 0.0
    %1070 = vmatpush1.msra.mxu0 0.0
    %1071 = vmatprep.subr.mxu0 0.0
    %1072 = vmatpush1.msra.mxu0 0.0
    %1073 = vmatprep.subr.mxu0 %v938
    %1074 = vmatpush1.msra.mxu0 %v937
    %1075 = vmatprep.subr.mxu0 %v936
    %1076 = vmatpush1.msra.mxu0 %v935
    %1077 = vmatprep.subr.mxu0 0.0
    %1078 = vmatpush2.msra.mxu0 0.0
    %1079 = vmatprep.subr.mxu0 0.0
    %1080 = vmatpush2.msra.mxu0 0.0
    %1081 = vmatprep.subr.mxu0 0.0
    %1082 = vmatpush2.msra.mxu0 0.0
    %1083 = vmatprep.subr.mxu0 0.0
    %1084 = vmatpush2.msra.mxu0 0.0
    %1085 = vmatprep.subr.mxu0 0.0
    %1086 = vmatpush2.msra.mxu0 0.0
    %1087 = vmatprep.subr.mxu0 0.0
    %1088 = vmatpush2.msra.mxu0 0.0
    %1089 = vmatprep.subr.mxu0 0.0
    %1090 = vmatpush2.msra.mxu0 0.0
    %1091 = vmatprep.subr.mxu0 0.0
    %1092 = vmatpush2.msra.mxu0 0.0
    %1093 = vmatprep.subr.mxu0 0.0
    %1094 = vmatpush2.msra.mxu0 0.0
    %1095 = vmatprep.subr.mxu0 0.0
    %1096 = vmatpush2.msra.mxu0 0.0
    %1097 = vmatprep.subr.mxu0 0.0
    %1098 = vmatpush2.msra.mxu0 0.0
    %1099 = vmatprep.subr.mxu0 0.0
    %1100 = vmatpush2.msra.mxu0 0.0
    %1101 = vmatprep.subr.mxu0 0.0
    %1102 = vmatpush2.msra.mxu0 0.0
    %1103 = vmatprep.subr.mxu0 0.0
    %1104 = vmatpush2.msra.mxu0 0.0
    %1105 = vmatprep.subr.mxu0 0.0
    %1106 = vmatpush2.msra.mxu0 0.0
    %1107 = vmatprep.subr.mxu0 0.0
    %1108 = vmatpush2.msra.mxu0 0.0
    %1109 = vmatprep.mubr.f32.mxu0 0.0
    %1110 = vmatmul.mubr.f32.gmra.mxu0 %v1043
    %v1111 = vpop.f32.mrf.mxu0
    %v1112 = vadd.f32 %v1038, %v1111
    %v1113 = vpop.f32.mrf.mxu0
    %v1114 = vadd.f32 %v1040, %v1113
    %1115 = vdwg.mxu0
    %v1116 = vadd.f32 %v1112, %v67
    %v1117 = vadd.f32 %v1114, %v71
    %v1118 = vld [vmem:[#allocation4] sm:$0xff]
    %v1119 = vld [vmem:[#allocation4 + $0x8] sm:$0xff]
    %v1120 = vld [vmem:[#allocation4 + $0x10] sm:$0xff]
    %v1121 = vld [vmem:[#allocation4 + $0x18] sm:$0xff]
    %v1122 = vld [vmem:[#allocation4 + $0x20] sm:$0xff]
    %v1123 = vld [vmem:[#allocation4 + $0x28] sm:$0xff]
    %v1124 = vld [vmem:[#allocation4 + $0x30] sm:$0xff]
    %v1125 = vld [vmem:[#allocation4 + $0x38] sm:$0xff]
    %v1126 = vld [vmem:[#allocation4 + $0x40] sm:$0xff]
    %v1127 = vld [vmem:[#allocation4 + $0x48] sm:$0xff]
    %v1128 = vld [vmem:[#allocation4 + $0x50] sm:$0xff]
    %v1129 = vld [vmem:[#allocation4 + $0x58] sm:$0xff]
    %v1130 = vld [vmem:[#allocation4 + $0x60] sm:$0xff]
    %v1131 = vld [vmem:[#allocation4 + $0x68] sm:$0xff]
    %v1132 = vld [vmem:[#allocation4 + $0x70] sm:$0xff]
    %v1133 = vld [vmem:[#allocation4 + $0x78] sm:$0xff]
    %1134 = vmatprep.subr.mxu0 0.0
    %1135 = vmatpush1.msra.mxu0 %v1133
    %1136 = vmatprep.subr.mxu0 0.0
    %1137 = vmatpush1.msra.mxu0 %v1132
    %1138 = vmatprep.subr.mxu0 0.0
    %1139 = vmatpush1.msra.mxu0 %v1131
    %1140 = vmatprep.subr.mxu0 0.0
    %1141 = vmatpush1.msra.mxu0 %v1130
    %1142 = vmatprep.subr.mxu0 0.0
    %1143 = vmatpush1.msra.mxu0 %v1129
    %1144 = vmatprep.subr.mxu0 0.0
    %1145 = vmatpush1.msra.mxu0 %v1128
    %1146 = vmatprep.subr.mxu0 0.0
    %1147 = vmatpush1.msra.mxu0 %v1127
    %1148 = vmatprep.subr.mxu0 0.0
    %1149 = vmatpush1.msra.mxu0 %v1126
    %1150 = vmatprep.subr.mxu0 0.0
    %1151 = vmatpush1.msra.mxu0 %v1125
    %1152 = vmatprep.subr.mxu0 0.0
    %1153 = vmatpush1.msra.mxu0 %v1124
    %1154 = vmatprep.subr.mxu0 0.0
    %1155 = vmatpush1.msra.mxu0 %v1123
    %1156 = vmatprep.subr.mxu0 0.0
    %1157 = vmatpush1.msra.mxu0 %v1122
    %1158 = vmatprep.subr.mxu0 0.0
    %1159 = vmatpush1.msra.mxu0 %v1121
    %1160 = vmatprep.subr.mxu0 0.0
    %1161 = vmatpush1.msra.mxu0 %v1120
    %1162 = vmatprep.subr.mxu0 0.0
    %1163 = vmatpush1.msra.mxu0 %v1119
    %1164 = vmatprep.subr.mxu0 0.0
    %1165 = vmatpush1.msra.mxu0 %v1118
    %1166 = vmatprep.subr.mxu0 0.0
    %1167 = vmatpush2.msra.mxu0 0.0
    %1168 = vmatprep.subr.mxu0 0.0
    %1169 = vmatpush2.msra.mxu0 0.0
    %1170 = vmatprep.subr.mxu0 0.0
    %1171 = vmatpush2.msra.mxu0 0.0
    %1172 = vmatprep.subr.mxu0 0.0
    %1173 = vmatpush2.msra.mxu0 0.0
    %1174 = vmatprep.subr.mxu0 0.0
    %1175 = vmatpush2.msra.mxu0 0.0
    %1176 = vmatprep.subr.mxu0 0.0
    %1177 = vmatpush2.msra.mxu0 0.0
    %1178 = vmatprep.subr.mxu0 0.0
    %1179 = vmatpush2.msra.mxu0 0.0
    %1180 = vmatprep.subr.mxu0 0.0
    %1181 = vmatpush2.msra.mxu0 0.0
    %1182 = vmatprep.subr.mxu0 0.0
    %1183 = vmatpush2.msra.mxu0 0.0
    %1184 = vmatprep.subr.mxu0 0.0
    %1185 = vmatpush2.msra.mxu0 0.0
    %1186 = vmatprep.subr.mxu0 0.0
    %1187 = vmatpush2.msra.mxu0 0.0
    %1188 = vmatprep.subr.mxu0 0.0
    %1189 = vmatpush2.msra.mxu0 0.0
    %1190 = vmatprep.subr.mxu0 0.0
    %1191 = vmatpush2.msra.mxu0 0.0
    %1192 = vmatprep.subr.mxu0 0.0
    %1193 = vmatpush2.msra.mxu0 0.0
    %1194 = vmatprep.subr.mxu0 0.0
    %1195 = vmatpush2.msra.mxu0 0.0
    %1196 = vmatprep.subr.mxu0 0.0
    %1197 = vmatpush2.msra.mxu0 0.0
    %1198 = vmatprep.mubr.f32.mxu0 0.0
    %1199 = vmatmul.mubr.f32.gmra.mxu0 %v1117
    %v1200 = vpop.f32.mrf.mxu0
    %v1201 = vadd.f32 %v79, %v1200
    %v1202 = vpop.f32.mrf.mxu0
    %1203 = vdwg.mxu0
    %1204 = vmax.xlane.f32.xlu0 %v1201
    %v1205 = vpop.xlane.xlu0 %1204
    %v1206 = vsub.f32 %v1201, %v1205
    %v1207 = vmul.f32 %v1206, 1.442695
    %v1208 = vpow.pop %v1207
    %1209 = vadd.xlane.f32.xlu0 %v1208
    %v1210 = vpop.xlane.xlu0 %1209
    %v1211 = vlog2.pop %v1210
    %v1212 = vmul.f32 %v1211, 0.6931472
    %v1213 = vadd.f32 %v1212, %v1205
    %v1214 = vsub.f32 %v1201, %v1213
    %s1215 = scalar_lea.vmem %s7, 24
    %1216 = vst [vmem:[%s1215] sm:$0xff] %v1214
    %s1217 = scalar_lea.vmem %s0, 32
    %v1218 = vld [vmem:[%s1217] sm:$0xff]
    %v1219 = vld [vmem:[%s2] sm:$0xff]
    %v1220 = vld [vmem:[%s2 + $0x8] sm:$0xff]
    %v1221 = vld [vmem:[%s2 + $0x10] sm:$0xff]
    %v1222 = vld [vmem:[%s2 + $0x18] sm:$0xff]
    %v1223 = vld [vmem:[#allocation2] sm:$0xff]
    %v1224 = vld [vmem:[#allocation2 + $0x8] sm:$0xff]
    %v1225 = vld [vmem:[#allocation2 + $0x10] sm:$0xff]
    %v1226 = vld [vmem:[#allocation2 + $0x18] sm:$0xff]
    %v1227 = vld [vmem:[#allocation2 + $0x20] sm:$0xff]
    %v1228 = vld [vmem:[#allocation2 + $0x28] sm:$0xff]
    %v1229 = vld [vmem:[#allocation2 + $0x30] sm:$0xff]
    %v1230 = vld [vmem:[#allocation2 + $0x38] sm:$0xff]
    %v1231 = vld [vmem:[#allocation2 + $0x40] sm:$0xff]
    %v1232 = vld [vmem:[#allocation2 + $0x48] sm:$0xff]
    %v1233 = vld [vmem:[#allocation2 + $0x50] sm:$0xff]
    %v1234 = vld [vmem:[#allocation2 + $0x58] sm:$0xff]
    %v1235 = vld [vmem:[#allocation2 + $0x60] sm:$0xff]
    %v1236 = vld [vmem:[#allocation2 + $0x68] sm:$0xff]
    %v1237 = vld [vmem:[#allocation2 + $0x70] sm:$0xff]
    %v1238 = vld [vmem:[#allocation2 + $0x78] sm:$0xff]
    %v1239 = vld [vmem:[#allocation2 + $0x80] sm:$0xff]
    %v1240 = vld [vmem:[#allocation2 + $0x88] sm:$0xff]
    %v1241 = vld [vmem:[#allocation2 + $0x90] sm:$0xff]
    %v1242 = vld [vmem:[#allocation2 + $0x98] sm:$0xff]
    %v1243 = vld [vmem:[#allocation2 + $0xa0] sm:$0xff]
    %v1244 = vld [vmem:[#allocation2 + $0xa8] sm:$0xff]
    %v1245 = vld [vmem:[#allocation2 + $0xb0] sm:$0xff]
    %v1246 = vld [vmem:[#allocation2 + $0xb8] sm:$0xff]
    %v1247 = vld [vmem:[#allocation2 + $0xc0] sm:$0xff]
    %v1248 = vld [vmem:[#allocation2 + $0xc8] sm:$0xff]
    %v1249 = vld [vmem:[#allocation2 + $0xd0] sm:$0xff]
    %v1250 = vld [vmem:[#allocation2 + $0xd8] sm:$0xff]
    %v1251 = vld [vmem:[#allocation2 + $0xe0] sm:$0xff]
    %v1252 = vld [vmem:[#allocation2 + $0xe8] sm:$0xff]
    %v1253 = vld [vmem:[#allocation2 + $0xf0] sm:$0xff]
    %v1254 = vld [vmem:[#allocation2 + $0xf8] sm:$0xff]
    %1255 = vmatprep.subr.mxu0 %v1254
    %1256 = vmatpush1.msra.mxu0 %v1253
    %1257 = vmatprep.subr.mxu0 %v1252
    %1258 = vmatpush1.msra.mxu0 %v1251
    %1259 = vmatprep.subr.mxu0 %v1250
    %1260 = vmatpush1.msra.mxu0 %v1249
    %1261 = vmatprep.subr.mxu0 %v1248
    %1262 = vmatpush1.msra.mxu0 %v1247
    %1263 = vmatprep.subr.mxu0 %v1246
    %1264 = vmatpush1.msra.mxu0 %v1245
    %1265 = vmatprep.subr.mxu0 %v1244
    %1266 = vmatpush1.msra.mxu0 %v1243
    %1267 = vmatprep.subr.mxu0 %v1242
    %1268 = vmatpush1.msra.mxu0 %v1241
    %1269 = vmatprep.subr.mxu0 %v1240
    %1270 = vmatpush1.msra.mxu0 %v1239
    %1271 = vmatprep.subr.mxu0 %v1238
    %1272 = vmatpush1.msra.mxu0 %v1237
    %1273 = vmatprep.subr.mxu0 %v1236
    %1274 = vmatpush1.msra.mxu0 %v1235
    %1275 = vmatprep.subr.mxu0 %v1234
    %1276 = vmatpush1.msra.mxu0 %v1233
    %1277 = vmatprep.subr.mxu0 %v1232
    %1278 = vmatpush1.msra.mxu0 %v1231
    %1279 = vmatprep.subr.mxu0 %v1230
    %1280 = vmatpush1.msra.mxu0 %v1229
    %1281 = vmatprep.subr.mxu0 %v1228
    %1282 = vmatpush1.msra.mxu0 %v1227
    %1283 = vmatprep.subr.mxu0 %v1226
    %1284 = vmatpush1.msra.mxu0 %v1225
    %1285 = vmatprep.subr.mxu0 %v1224
    %1286 = vmatpush1.msra.mxu0 %v1223
    %1287 = vmatprep.subr.mxu0 0.0
    %1288 = vmatpush2.msra.mxu0 0.0
    %1289 = vmatprep.subr.mxu0 0.0
    %1290 = vmatpush2.msra.mxu0 0.0
    %1291 = vmatprep.subr.mxu0 0.0
    %1292 = vmatpush2.msra.mxu0 0.0
    %1293 = vmatprep.subr.mxu0 0.0
    %1294 = vmatpush2.msra.mxu0 0.0
    %1295 = vmatprep.subr.mxu0 0.0
    %1296 = vmatpush2.msra.mxu0 0.0
    %1297 = vmatprep.subr.mxu0 0.0
    %1298 = vmatpush2.msra.mxu0 0.0
    %1299 = vmatprep.subr.mxu0 0.0
    %1300 = vmatpush2.msra.mxu0 0.0
    %1301 = vmatprep.subr.mxu0 0.0
    %1302 = vmatpush2.msra.mxu0 0.0
    %1303 = vmatprep.subr.mxu0 0.0
    %1304 = vmatpush2.msra.mxu0 0.0
    %1305 = vmatprep.subr.mxu0 0.0
    %1306 = vmatpush2.msra.mxu0 0.0
    %1307 = vmatprep.subr.mxu0 0.0
    %1308 = vmatpush2.msra.mxu0 0.0
    %1309 = vmatprep.subr.mxu0 0.0
    %1310 = vmatpush2.msra.mxu0 0.0
    %1311 = vmatprep.subr.mxu0 0.0
    %1312 = vmatpush2.msra.mxu0 0.0
    %1313 = vmatprep.subr.mxu0 0.0
    %1314 = vmatpush2.msra.mxu0 0.0
    %1315 = vmatprep.subr.mxu0 0.0
    %1316 = vmatpush2.msra.mxu0 0.0
    %1317 = vmatprep.subr.mxu0 0.0
    %1318 = vmatpush2.msra.mxu0 0.0
    %1319 = vmatprep.mubr.f32.mxu0 0.0
    %1320 = vmatmul.mubr.f32.gmra.mxu0 %v1116
    %v1321 = vpop.f32.mrf.mxu0
    %v1322 = vadd.f32 0.0, %v1321
    %v1323 = vpop.f32.mrf.mxu0
    %v1324 = vadd.f32 0.0, %v1323
    %1325 = vdwg.mxu0
    %v1327 = vsel %vm190, %v1218, 0
    %1329 = vmatprep.subr.mxu0 0.0
    %1330 = vmatpush1.msra.mxu0 0.0
    %1331 = vmatprep.subr.mxu0 0.0
    %1332 = vmatpush1.msra.mxu0 0.0
    %1333 = vmatprep.subr.mxu0 0.0
    %1334 = vmatpush1.msra.mxu0 0.0
    %1335 = vmatprep.subr.mxu0 0.0
    %1336 = vmatpush1.msra.mxu0 0.0
    %1337 = vmatprep.subr.mxu0 0.0
    %1338 = vmatpush1.msra.mxu0 0.0
    %1339 = vmatprep.subr.mxu0 0.0
    %1340 = vmatpush1.msra.mxu0 0.0
    %1341 = vmatprep.subr.mxu0 0.0
    %1342 = vmatpush1.msra.mxu0 0.0
    %1343 = vmatprep.subr.mxu0 0.0
    %1344 = vmatpush1.msra.mxu0 0.0
    %1345 = vmatprep.subr.mxu0 0.0
    %1346 = vmatpush1.msra.mxu0 0.0
    %1347 = vmatprep.subr.mxu0 0.0
    %1348 = vmatpush1.msra.mxu0 0.0
    %1349 = vmatprep.subr.mxu0 0.0
    %1350 = vmatpush1.msra.mxu0 0.0
    %1351 = vmatprep.subr.mxu0 0.0
    %1352 = vmatpush1.msra.mxu0 0.0
    %1353 = vmatprep.subr.mxu0 0.0
    %1354 = vmatpush1.msra.mxu0 0.0
    %1355 = vmatprep.subr.mxu0 0.0
    %1356 = vmatpush1.msra.mxu0 0.0
    %1357 = vmatprep.subr.mxu0 %v1222
    %1358 = vmatpush1.msra.mxu0 %v1221
    %1359 = vmatprep.subr.mxu0 %v1220
    %1360 = vmatpush1.msra.mxu0 %v1219
    %1361 = vmatprep.subr.mxu0 0.0
    %1362 = vmatpush2.msra.mxu0 0.0
    %1363 = vmatprep.subr.mxu0 0.0
    %1364 = vmatpush2.msra.mxu0 0.0
    %1365 = vmatprep.subr.mxu0 0.0
    %1366 = vmatpush2.msra.mxu0 0.0
    %1367 = vmatprep.subr.mxu0 0.0
    %1368 = vmatpush2.msra.mxu0 0.0
    %1369 = vmatprep.subr.mxu0 0.0
    %1370 = vmatpush2.msra.mxu0 0.0
    %1371 = vmatprep.subr.mxu0 0.0
    %1372 = vmatpush2.msra.mxu0 0.0
    %1373 = vmatprep.subr.mxu0 0.0
    %1374 = vmatpush2.msra.mxu0 0.0
    %1375 = vmatprep.subr.mxu0 0.0
    %1376 = vmatpush2.msra.mxu0 0.0
    %1377 = vmatprep.subr.mxu0 0.0
    %1378 = vmatpush2.msra.mxu0 0.0
    %1379 = vmatprep.subr.mxu0 0.0
    %1380 = vmatpush2.msra.mxu0 0.0
    %1381 = vmatprep.subr.mxu0 0.0
    %1382 = vmatpush2.msra.mxu0 0.0
    %1383 = vmatprep.subr.mxu0 0.0
    %1384 = vmatpush2.msra.mxu0 0.0
    %1385 = vmatprep.subr.mxu0 0.0
    %1386 = vmatpush2.msra.mxu0 0.0
    %1387 = vmatprep.subr.mxu0 0.0
    %1388 = vmatpush2.msra.mxu0 0.0
    %1389 = vmatprep.subr.mxu0 0.0
    %1390 = vmatpush2.msra.mxu0 0.0
    %1391 = vmatprep.subr.mxu0 0.0
    %1392 = vmatpush2.msra.mxu0 0.0
    %1393 = vmatprep.mubr.f32.mxu0 0.0
    %1394 = vmatmul.mubr.f32.gmra.mxu0 %v1327
    %v1395 = vpop.f32.mrf.mxu0
    %v1396 = vadd.f32 %v1322, %v1395
    %v1397 = vpop.f32.mrf.mxu0
    %v1398 = vadd.f32 %v1324, %v1397
    %1399 = vdwg.mxu0
    %v1400 = vadd.f32 %v1396, %v67
    %v1401 = vadd.f32 %v1398, %v71
    %v1402 = vld [vmem:[#allocation4] sm:$0xff]
    %v1403 = vld [vmem:[#allocation4 + $0x8] sm:$0xff]
    %v1404 = vld [vmem:[#allocation4 + $0x10] sm:$0xff]
    %v1405 = vld [vmem:[#allocation4 + $0x18] sm:$0xff]
    %v1406 = vld [vmem:[#allocation4 + $0x20] sm:$0xff]
    %v1407 = vld [vmem:[#allocation4 + $0x28] sm:$0xff]
    %v1408 = vld [vmem:[#allocation4 + $0x30] sm:$0xff]
    %v1409 = vld [vmem:[#allocation4 + $0x38] sm:$0xff]
    %v1410 = vld [vmem:[#allocation4 + $0x40] sm:$0xff]
    %v1411 = vld [vmem:[#allocation4 + $0x48] sm:$0xff]
    %v1412 = vld [vmem:[#allocation4 + $0x50] sm:$0xff]
    %v1413 = vld [vmem:[#allocation4 + $0x58] sm:$0xff]
    %v1414 = vld [vmem:[#allocation4 + $0x60] sm:$0xff]
    %v1415 = vld [vmem:[#allocation4 + $0x68] sm:$0xff]
    %v1416 = vld [vmem:[#allocation4 + $0x70] sm:$0xff]
    %v1417 = vld [vmem:[#allocation4 + $0x78] sm:$0xff]
    %1418 = vmatprep.subr.mxu0 0.0
    %1419 = vmatpush1.msra.mxu0 %v1417
    %1420 = vmatprep.subr.mxu0 0.0
    %1421 = vmatpush1.msra.mxu0 %v1416
    %1422 = vmatprep.subr.mxu0 0.0
    %1423 = vmatpush1.msra.mxu0 %v1415
    %1424 = vmatprep.subr.mxu0 0.0
    %1425 = vmatpush1.msra.mxu0 %v1414
    %1426 = vmatprep.subr.mxu0 0.0
    %1427 = vmatpush1.msra.mxu0 %v1413
    %1428 = vmatprep.subr.mxu0 0.0
    %1429 = vmatpush1.msra.mxu0 %v1412
    %1430 = vmatprep.subr.mxu0 0.0
    %1431 = vmatpush1.msra.mxu0 %v1411
    %1432 = vmatprep.subr.mxu0 0.0
    %1433 = vmatpush1.msra.mxu0 %v1410
    %1434 = vmatprep.subr.mxu0 0.0
    %1435 = vmatpush1.msra.mxu0 %v1409
    %1436 = vmatprep.subr.mxu0 0.0
    %1437 = vmatpush1.msra.mxu0 %v1408
    %1438 = vmatprep.subr.mxu0 0.0
    %1439 = vmatpush1.msra.mxu0 %v1407
    %1440 = vmatprep.subr.mxu0 0.0
    %1441 = vmatpush1.msra.mxu0 %v1406
    %1442 = vmatprep.subr.mxu0 0.0
    %1443 = vmatpush1.msra.mxu0 %v1405
    %1444 = vmatprep.subr.mxu0 0.0
    %1445 = vmatpush1.msra.mxu0 %v1404
    %1446 = vmatprep.subr.mxu0 0.0
    %1447 = vmatpush1.msra.mxu0 %v1403
    %1448 = vmatprep.subr.mxu0 0.0
    %1449 = vmatpush1.msra.mxu0 %v1402
    %1450 = vmatprep.subr.mxu0 0.0
    %1451 = vmatpush2.msra.mxu0 0.0
    %1452 = vmatprep.subr.mxu0 0.0
    %1453 = vmatpush2.msra.mxu0 0.0
    %1454 = vmatprep.subr.mxu0 0.0
    %1455 = vmatpush2.msra.mxu0 0.0
    %1456 = vmatprep.subr.mxu0 0.0
    %1457 = vmatpush2.msra.mxu0 0.0
    %1458 = vmatprep.subr.mxu0 0.0
    %1459 = vmatpush2.msra.mxu0 0.0
    %1460 = vmatprep.subr.mxu0 0.0
    %1461 = vmatpush2.msra.mxu0 0.0
    %1462 = vmatprep.subr.mxu0 0.0
    %1463 = vmatpush2.msra.mxu0 0.0
    %1464 = vmatprep.subr.mxu0 0.0
    %1465 = vmatpush2.msra.mxu0 0.0
    %1466 = vmatprep.subr.mxu0 0.0
    %1467 = vmatpush2.msra.mxu0 0.0
    %1468 = vmatprep.subr.mxu0 0.0
    %1469 = vmatpush2.msra.mxu0 0.0
    %1470 = vmatprep.subr.mxu0 0.0
    %1471 = vmatpush2.msra.mxu0 0.0
    %1472 = vmatprep.subr.mxu0 0.0
    %1473 = vmatpush2.msra.mxu0 0.0
    %1474 = vmatprep.subr.mxu0 0.0
    %1475 = vmatpush2.msra.mxu0 0.0
    %1476 = vmatprep.subr.mxu0 0.0
    %1477 = vmatpush2.msra.mxu0 0.0
    %1478 = vmatprep.subr.mxu0 0.0
    %1479 = vmatpush2.msra.mxu0 0.0
    %1480 = vmatprep.subr.mxu0 0.0
    %1481 = vmatpush2.msra.mxu0 0.0
    %1482 = vmatprep.mubr.f32.mxu0 0.0
    %1483 = vmatmul.mubr.f32.gmra.mxu0 %v1401
    %v1484 = vpop.f32.mrf.mxu0
    %v1485 = vadd.f32 %v79, %v1484
    %v1486 = vpop.f32.mrf.mxu0
    %1487 = vdwg.mxu0
    %1488 = vmax.xlane.f32.xlu0 %v1485
    %v1489 = vpop.xlane.xlu0 %1488
    %v1490 = vsub.f32 %v1485, %v1489
    %v1491 = vmul.f32 %v1490, 1.442695
    %v1492 = vpow.pop %v1491
    %1493 = vadd.xlane.f32.xlu0 %v1492
    %v1494 = vpop.xlane.xlu0 %1493
    %v1495 = vlog2.pop %v1494
    %v1496 = vmul.f32 %v1495, 0.6931472
    %v1497 = vadd.f32 %v1496, %v1489
    %v1498 = vsub.f32 %v1485, %v1497
    %s1499 = scalar_lea.vmem %s7, 32
    %1500 = vst [vmem:[%s1499] sm:$0xff] %v1498
    %s1501 = scalar_lea.vmem %s0, 40
    %v1502 = vld [vmem:[%s1501] sm:$0xff]
    %v1503 = vld [vmem:[%s2] sm:$0xff]
    %v1504 = vld [vmem:[%s2 + $0x8] sm:$0xff]
    %v1505 = vld [vmem:[%s2 + $0x10] sm:$0xff]
    %v1506 = vld [vmem:[%s2 + $0x18] sm:$0xff]
    %v1507 = vld [vmem:[#allocation2] sm:$0xff]
    %v1508 = vld [vmem:[#allocation2 + $0x8] sm:$0xff]
    %v1509 = vld [vmem:[#allocation2 + $0x10] sm:$0xff]
    %v1510 = vld [vmem:[#allocation2 + $0x18] sm:$0xff]
    %v1511 = vld [vmem:[#allocation2 + $0x20] sm:$0xff]
    %v1512 = vld [vmem:[#allocation2 + $0x28] sm:$0xff]
    %v1513 = vld [vmem:[#allocation2 + $0x30] sm:$0xff]
    %v1514 = vld [vmem:[#allocation2 + $0x38] sm:$0xff]
    %v1515 = vld [vmem:[#allocation2 + $0x40] sm:$0xff]
    %v1516 = vld [vmem:[#allocation2 + $0x48] sm:$0xff]
    %v1517 = vld [vmem:[#allocation2 + $0x50] sm:$0xff]
    %v1518 = vld [vmem:[#allocation2 + $0x58] sm:$0xff]
    %v1519 = vld [vmem:[#allocation2 + $0x60] sm:$0xff]
    %v1520 = vld [vmem:[#allocation2 + $0x68] sm:$0xff]
    %v1521 = vld [vmem:[#allocation2 + $0x70] sm:$0xff]
    %v1522 = vld [vmem:[#allocation2 + $0x78] sm:$0xff]
    %v1523 = vld [vmem:[#allocation2 + $0x80] sm:$0xff]
    %v1524 = vld [vmem:[#allocation2 + $0x88] sm:$0xff]
    %v1525 = vld [vmem:[#allocation2 + $0x90] sm:$0xff]
    %v1526 = vld [vmem:[#allocation2 + $0x98] sm:$0xff]
    %v1527 = vld [vmem:[#allocation2 + $0xa0] sm:$0xff]
    %v1528 = vld [vmem:[#allocation2 + $0xa8] sm:$0xff]
    %v1529 = vld [vmem:[#allocation2 + $0xb0] sm:$0xff]
    %v1530 = vld [vmem:[#allocation2 + $0xb8] sm:$0xff]
    %v1531 = vld [vmem:[#allocation2 + $0xc0] sm:$0xff]
    %v1532 = vld [vmem:[#allocation2 + $0xc8] sm:$0xff]
    %v1533 = vld [vmem:[#allocation2 + $0xd0] sm:$0xff]
    %v1534 = vld [vmem:[#allocation2 + $0xd8] sm:$0xff]
    %v1535 = vld [vmem:[#allocation2 + $0xe0] sm:$0xff]
    %v1536 = vld [vmem:[#allocation2 + $0xe8] sm:$0xff]
    %v1537 = vld [vmem:[#allocation2 + $0xf0] sm:$0xff]
    %v1538 = vld [vmem:[#allocation2 + $0xf8] sm:$0xff]
    %1539 = vmatprep.subr.mxu0 %v1538
    %1540 = vmatpush1.msra.mxu0 %v1537
    %1541 = vmatprep.subr.mxu0 %v1536
    %1542 = vmatpush1.msra.mxu0 %v1535
    %1543 = vmatprep.subr.mxu0 %v1534
    %1544 = vmatpush1.msra.mxu0 %v1533
    %1545 = vmatprep.subr.mxu0 %v1532
    %1546 = vmatpush1.msra.mxu0 %v1531
    %1547 = vmatprep.subr.mxu0 %v1530
    %1548 = vmatpush1.msra.mxu0 %v1529
    %1549 = vmatprep.subr.mxu0 %v1528
    %1550 = vmatpush1.msra.mxu0 %v1527
    %1551 = vmatprep.subr.mxu0 %v1526
    %1552 = vmatpush1.msra.mxu0 %v1525
    %1553 = vmatprep.subr.mxu0 %v1524
    %1554 = vmatpush1.msra.mxu0 %v1523
    %1555 = vmatprep.subr.mxu0 %v1522
    %1556 = vmatpush1.msra.mxu0 %v1521
    %1557 = vmatprep.subr.mxu0 %v1520
    %1558 = vmatpush1.msra.mxu0 %v1519
    %1559 = vmatprep.subr.mxu0 %v1518
    %1560 = vmatpush1.msra.mxu0 %v1517
    %1561 = vmatprep.subr.mxu0 %v1516
    %1562 = vmatpush1.msra.mxu0 %v1515
    %1563 = vmatprep.subr.mxu0 %v1514
    %1564 = vmatpush1.msra.mxu0 %v1513
    %1565 = vmatprep.subr.mxu0 %v1512
    %1566 = vmatpush1.msra.mxu0 %v1511
    %1567 = vmatprep.subr.mxu0 %v1510
    %1568 = vmatpush1.msra.mxu0 %v1509
    %1569 = vmatprep.subr.mxu0 %v1508
    %1570 = vmatpush1.msra.mxu0 %v1507
    %1571 = vmatprep.subr.mxu0 0.0
    %1572 = vmatpush2.msra.mxu0 0.0
    %1573 = vmatprep.subr.mxu0 0.0
    %1574 = vmatpush2.msra.mxu0 0.0
    %1575 = vmatprep.subr.mxu0 0.0
    %1576 = vmatpush2.msra.mxu0 0.0
    %1577 = vmatprep.subr.mxu0 0.0
    %1578 = vmatpush2.msra.mxu0 0.0
    %1579 = vmatprep.subr.mxu0 0.0
    %1580 = vmatpush2.msra.mxu0 0.0
    %1581 = vmatprep.subr.mxu0 0.0
    %1582 = vmatpush2.msra.mxu0 0.0
    %1583 = vmatprep.subr.mxu0 0.0
    %1584 = vmatpush2.msra.mxu0 0.0
    %1585 = vmatprep.subr.mxu0 0.0
    %1586 = vmatpush2.msra.mxu0 0.0
    %1587 = vmatprep.subr.mxu0 0.0
    %1588 = vmatpush2.msra.mxu0 0.0
    %1589 = vmatprep.subr.mxu0 0.0
    %1590 = vmatpush2.msra.mxu0 0.0
    %1591 = vmatprep.subr.mxu0 0.0
    %1592 = vmatpush2.msra.mxu0 0.0
    %1593 = vmatprep.subr.mxu0 0.0
    %1594 = vmatpush2.msra.mxu0 0.0
    %1595 = vmatprep.subr.mxu0 0.0
    %1596 = vmatpush2.msra.mxu0 0.0
    %1597 = vmatprep.subr.mxu0 0.0
    %1598 = vmatpush2.msra.mxu0 0.0
    %1599 = vmatprep.subr.mxu0 0.0
    %1600 = vmatpush2.msra.mxu0 0.0
    %1601 = vmatprep.subr.mxu0 0.0
    %1602 = vmatpush2.msra.mxu0 0.0
    %1603 = vmatprep.mubr.f32.mxu0 0.0
    %1604 = vmatmul.mubr.f32.gmra.mxu0 %v1400
    %v1605 = vpop.f32.mrf.mxu0
    %v1606 = vadd.f32 0.0, %v1605
    %v1607 = vpop.f32.mrf.mxu0
    %v1608 = vadd.f32 0.0, %v1607
    %1609 = vdwg.mxu0
    %v1611 = vsel %vm190, %v1502, 0
    %1613 = vmatprep.subr.mxu0 0.0
    %1614 = vmatpush1.msra.mxu0 0.0
    %1615 = vmatprep.subr.mxu0 0.0
    %1616 = vmatpush1.msra.mxu0 0.0
    %1617 = vmatprep.subr.mxu0 0.0
    %1618 = vmatpush1.msra.mxu0 0.0
    %1619 = vmatprep.subr.mxu0 0.0
    %1620 = vmatpush1.msra.mxu0 0.0
    %1621 = vmatprep.subr.mxu0 0.0
    %1622 = vmatpush1.msra.mxu0 0.0
    %1623 = vmatprep.subr.mxu0 0.0
    %1624 = vmatpush1.msra.mxu0 0.0
    %1625 = vmatprep.subr.mxu0 0.0
    %1626 = vmatpush1.msra.mxu0 0.0
    %1627 = vmatprep.subr.mxu0 0.0
    %1628 = vmatpush1.msra.mxu0 0.0
    %1629 = vmatprep.subr.mxu0 0.0
    %1630 = vmatpush1.msra.mxu0 0.0
    %1631 = vmatprep.subr.mxu0 0.0
    %1632 = vmatpush1.msra.mxu0 0.0
    %1633 = vmatprep.subr.mxu0 0.0
    %1634 = vmatpush1.msra.mxu0 0.0
    %1635 = vmatprep.subr.mxu0 0.0
    %1636 = vmatpush1.msra.mxu0 0.0
    %1637 = vmatprep.subr.mxu0 0.0
    %1638 = vmatpush1.msra.mxu0 0.0
    %1639 = vmatprep.subr.mxu0 0.0
    %1640 = vmatpush1.msra.mxu0 0.0
    %1641 = vmatprep.subr.mxu0 %v1506
    %1642 = vmatpush1.msra.mxu0 %v1505
    %1643 = vmatprep.subr.mxu0 %v1504
    %1644 = vmatpush1.msra.mxu0 %v1503
    %1645 = vmatprep.subr.mxu0 0.0
    %1646 = vmatpush2.msra.mxu0 0.0
    %1647 = vmatprep.subr.mxu0 0.0
    %1648 = vmatpush2.msra.mxu0 0.0
    %1649 = vmatprep.subr.mxu0 0.0
    %1650 = vmatpush2.msra.mxu0 0.0
    %1651 = vmatprep.subr.mxu0 0.0
    %1652 = vmatpush2.msra.mxu0 0.0
    %1653 = vmatprep.subr.mxu0 0.0
    %1654 = vmatpush2.msra.mxu0 0.0
    %1655 = vmatprep.subr.mxu0 0.0
    %1656 = vmatpush2.msra.mxu0 0.0
    %1657 = vmatprep.subr.mxu0 0.0
    %1658 = vmatpush2.msra.mxu0 0.0
    %1659 = vmatprep.subr.mxu0 0.0
    %1660 = vmatpush2.msra.mxu0 0.0
    %1661 = vmatprep.subr.mxu0 0.0
    %1662 = vmatpush2.msra.mxu0 0.0
    %1663 = vmatprep.subr.mxu0 0.0
    %1664 = vmatpush2.msra.mxu0 0.0
    %1665 = vmatprep.subr.mxu0 0.0
    %1666 = vmatpush2.msra.mxu0 0.0
    %1667 = vmatprep.subr.mxu0 0.0
    %1668 = vmatpush2.msra.mxu0 0.0
    %1669 = vmatprep.subr.mxu0 0.0
    %1670 = vmatpush2.msra.mxu0 0.0
    %1671 = vmatprep.subr.mxu0 0.0
    %1672 = vmatpush2.msra.mxu0 0.0
    %1673 = vmatprep.subr.mxu0 0.0
    %1674 = vmatpush2.msra.mxu0 0.0
    %1675 = vmatprep.subr.mxu0 0.0
    %1676 = vmatpush2.msra.mxu0 0.0
    %1677 = vmatprep.mubr.f32.mxu0 0.0
    %1678 = vmatmul.mubr.f32.gmra.mxu0 %v1611
    %v1679 = vpop.f32.mrf.mxu0
    %v1680 = vadd.f32 %v1606, %v1679
    %v1681 = vpop.f32.mrf.mxu0
    %v1682 = vadd.f32 %v1608, %v1681
    %1683 = vdwg.mxu0
    %v1684 = vadd.f32 %v1680, %v67
    %v1685 = vadd.f32 %v1682, %v71
    %v1686 = vld [vmem:[#allocation4] sm:$0xff]
    %v1687 = vld [vmem:[#allocation4 + $0x8] sm:$0xff]
    %v1688 = vld [vmem:[#allocation4 + $0x10] sm:$0xff]
    %v1689 = vld [vmem:[#allocation4 + $0x18] sm:$0xff]
    %v1690 = vld [vmem:[#allocation4 + $0x20] sm:$0xff]
    %v1691 = vld [vmem:[#allocation4 + $0x28] sm:$0xff]
    %v1692 = vld [vmem:[#allocation4 + $0x30] sm:$0xff]
    %v1693 = vld [vmem:[#allocation4 + $0x38] sm:$0xff]
    %v1694 = vld [vmem:[#allocation4 + $0x40] sm:$0xff]
    %v1695 = vld [vmem:[#allocation4 + $0x48] sm:$0xff]
    %v1696 = vld [vmem:[#allocation4 + $0x50] sm:$0xff]
    %v1697 = vld [vmem:[#allocation4 + $0x58] sm:$0xff]
    %v1698 = vld [vmem:[#allocation4 + $0x60] sm:$0xff]
    %v1699 = vld [vmem:[#allocation4 + $0x68] sm:$0xff]
    %v1700 = vld [vmem:[#allocation4 + $0x70] sm:$0xff]
    %v1701 = vld [vmem:[#allocation4 + $0x78] sm:$0xff]
    %1702 = vmatprep.subr.mxu0 0.0
    %1703 = vmatpush1.msra.mxu0 %v1701
    %1704 = vmatprep.subr.mxu0 0.0
    %1705 = vmatpush1.msra.mxu0 %v1700
    %1706 = vmatprep.subr.mxu0 0.0
    %1707 = vmatpush1.msra.mxu0 %v1699
    %1708 = vmatprep.subr.mxu0 0.0
    %1709 = vmatpush1.msra.mxu0 %v1698
    %1710 = vmatprep.subr.mxu0 0.0
    %1711 = vmatpush1.msra.mxu0 %v1697
    %1712 = vmatprep.subr.mxu0 0.0
    %1713 = vmatpush1.msra.mxu0 %v1696
    %1714 = vmatprep.subr.mxu0 0.0
    %1715 = vmatpush1.msra.mxu0 %v1695
    %1716 = vmatprep.subr.mxu0 0.0
    %1717 = vmatpush1.msra.mxu0 %v1694
    %1718 = vmatprep.subr.mxu0 0.0
    %1719 = vmatpush1.msra.mxu0 %v1693
    %1720 = vmatprep.subr.mxu0 0.0
    %1721 = vmatpush1.msra.mxu0 %v1692
    %1722 = vmatprep.subr.mxu0 0.0
    %1723 = vmatpush1.msra.mxu0 %v1691
    %1724 = vmatprep.subr.mxu0 0.0
    %1725 = vmatpush1.msra.mxu0 %v1690
    %1726 = vmatprep.subr.mxu0 0.0
    %1727 = vmatpush1.msra.mxu0 %v1689
    %1728 = vmatprep.subr.mxu0 0.0
    %1729 = vmatpush1.msra.mxu0 %v1688
    %1730 = vmatprep.subr.mxu0 0.0
    %1731 = vmatpush1.msra.mxu0 %v1687
    %1732 = vmatprep.subr.mxu0 0.0
    %1733 = vmatpush1.msra.mxu0 %v1686
    %1734 = vmatprep.subr.mxu0 0.0
    %1735 = vmatpush2.msra.mxu0 0.0
    %1736 = vmatprep.subr.mxu0 0.0
    %1737 = vmatpush2.msra.mxu0 0.0
    %1738 = vmatprep.subr.mxu0 0.0
    %1739 = vmatpush2.msra.mxu0 0.0
    %1740 = vmatprep.subr.mxu0 0.0
    %1741 = vmatpush2.msra.mxu0 0.0
    %1742 = vmatprep.subr.mxu0 0.0
    %1743 = vmatpush2.msra.mxu0 0.0
    %1744 = vmatprep.subr.mxu0 0.0
    %1745 = vmatpush2.msra.mxu0 0.0
    %1746 = vmatprep.subr.mxu0 0.0
    %1747 = vmatpush2.msra.mxu0 0.0
    %1748 = vmatprep.subr.mxu0 0.0
    %1749 = vmatpush2.msra.mxu0 0.0
    %1750 = vmatprep.subr.mxu0 0.0
    %1751 = vmatpush2.msra.mxu0 0.0
    %1752 = vmatprep.subr.mxu0 0.0
    %1753 = vmatpush2.msra.mxu0 0.0
    %1754 = vmatprep.subr.mxu0 0.0
    %1755 = vmatpush2.msra.mxu0 0.0
    %1756 = vmatprep.subr.mxu0 0.0
    %1757 = vmatpush2.msra.mxu0 0.0
    %1758 = vmatprep.subr.mxu0 0.0
    %1759 = vmatpush2.msra.mxu0 0.0
    %1760 = vmatprep.subr.mxu0 0.0
    %1761 = vmatpush2.msra.mxu0 0.0
    %1762 = vmatprep.subr.mxu0 0.0
    %1763 = vmatpush2.msra.mxu0 0.0
    %1764 = vmatprep.subr.mxu0 0.0
    %1765 = vmatpush2.msra.mxu0 0.0
    %1766 = vmatprep.mubr.f32.mxu0 0.0
    %1767 = vmatmul.mubr.f32.gmra.mxu0 %v1685
    %v1768 = vpop.f32.mrf.mxu0
    %v1769 = vadd.f32 %v79, %v1768
    %v1770 = vpop.f32.mrf.mxu0
    %1771 = vdwg.mxu0
    %1772 = vmax.xlane.f32.xlu0 %v1769
    %v1773 = vpop.xlane.xlu0 %1772
    %v1774 = vsub.f32 %v1769, %v1773
    %v1775 = vmul.f32 %v1774, 1.442695
    %v1776 = vpow.pop %v1775
    %1777 = vadd.xlane.f32.xlu0 %v1776
    %v1778 = vpop.xlane.xlu0 %1777
    %v1779 = vlog2.pop %v1778
    %v1780 = vmul.f32 %v1779, 0.6931472
    %v1781 = vadd.f32 %v1780, %v1773
    %v1782 = vsub.f32 %v1769, %v1781
    %s1783 = scalar_lea.vmem %s7, 40
    %1784 = vst [vmem:[%s1783] sm:$0xff] %v1782
    %s1785 = scalar_lea.vmem %s0, 48
    %v1786 = vld [vmem:[%s1785] sm:$0xff]
    %v1787 = vld [vmem:[%s2] sm:$0xff]
    %v1788 = vld [vmem:[%s2 + $0x8] sm:$0xff]
    %v1789 = vld [vmem:[%s2 + $0x10] sm:$0xff]
    %v1790 = vld [vmem:[%s2 + $0x18] sm:$0xff]
    %v1791 = vld [vmem:[#allocation2] sm:$0xff]
    %v1792 = vld [vmem:[#allocation2 + $0x8] sm:$0xff]
    %v1793 = vld [vmem:[#allocation2 + $0x10] sm:$0xff]
    %v1794 = vld [vmem:[#allocation2 + $0x18] sm:$0xff]
    %v1795 = vld [vmem:[#allocation2 + $0x20] sm:$0xff]
    %v1796 = vld [vmem:[#allocation2 + $0x28] sm:$0xff]
    %v1797 = vld [vmem:[#allocation2 + $0x30] sm:$0xff]
    %v1798 = vld [vmem:[#allocation2 + $0x38] sm:$0xff]
    %v1799 = vld [vmem:[#allocation2 + $0x40] sm:$0xff]
    %v1800 = vld [vmem:[#allocation2 + $0x48] sm:$0xff]
    %v1801 = vld [vmem:[#allocation2 + $0x50] sm:$0xff]
    %v1802 = vld [vmem:[#allocation2 + $0x58] sm:$0xff]
    %v1803 = vld [vmem:[#allocation2 + $0x60] sm:$0xff]
    %v1804 = vld [vmem:[#allocation2 + $0x68] sm:$0xff]
    %v1805 = vld [vmem:[#allocation2 + $0x70] sm:$0xff]
    %v1806 = vld [vmem:[#allocation2 + $0x78] sm:$0xff]
    %v1807 = vld [vmem:[#allocation2 + $0x80] sm:$0xff]
    %v1808 = vld [vmem:[#allocation2 + $0x88] sm:$0xff]
    %v1809 = vld [vmem:[#allocation2 + $0x90] sm:$0xff]
    %v1810 = vld [vmem:[#allocation2 + $0x98] sm:$0xff]
    %v1811 = vld [vmem:[#allocation2 + $0xa0] sm:$0xff]
    %v1812 = vld [vmem:[#allocation2 + $0xa8] sm:$0xff]
    %v1813 = vld [vmem:[#allocation2 + $0xb0] sm:$0xff]
    %v1814 = vld [vmem:[#allocation2 + $0xb8] sm:$0xff]
    %v1815 = vld [vmem:[#allocation2 + $0xc0] sm:$0xff]
    %v1816 = vld [vmem:[#allocation2 + $0xc8] sm:$0xff]
    %v1817 = vld [vmem:[#allocation2 + $0xd0] sm:$0xff]
    %v1818 = vld [vmem:[#allocation2 + $0xd8] sm:$0xff]
    %v1819 = vld [vmem:[#allocation2 + $0xe0] sm:$0xff]
    %v1820 = vld [vmem:[#allocation2 + $0xe8] sm:$0xff]
    %v1821 = vld [vmem:[#allocation2 + $0xf0] sm:$0xff]
    %v1822 = vld [vmem:[#allocation2 + $0xf8] sm:$0xff]
    %1823 = vmatprep.subr.mxu0 %v1822
    %1824 = vmatpush1.msra.mxu0 %v1821
    %1825 = vmatprep.subr.mxu0 %v1820
    %1826 = vmatpush1.msra.mxu0 %v1819
    %1827 = vmatprep.subr.mxu0 %v1818
    %1828 = vmatpush1.msra.mxu0 %v1817
    %1829 = vmatprep.subr.mxu0 %v1816
    %1830 = vmatpush1.msra.mxu0 %v1815
    %1831 = vmatprep.subr.mxu0 %v1814
    %1832 = vmatpush1.msra.mxu0 %v1813
    %1833 = vmatprep.subr.mxu0 %v1812
    %1834 = vmatpush1.msra.mxu0 %v1811
    %1835 = vmatprep.subr.mxu0 %v1810
    %1836 = vmatpush1.msra.mxu0 %v1809
    %1837 = vmatprep.subr.mxu0 %v1808
    %1838 = vmatpush1.msra.mxu0 %v1807
    %1839 = vmatprep.subr.mxu0 %v1806
    %1840 = vmatpush1.msra.mxu0 %v1805
    %1841 = vmatprep.subr.mxu0 %v1804
    %1842 = vmatpush1.msra.mxu0 %v1803
    %1843 = vmatprep.subr.mxu0 %v1802
    %1844 = vmatpush1.msra.mxu0 %v1801
    %1845 = vmatprep.subr.mxu0 %v1800
    %1846 = vmatpush1.msra.mxu0 %v1799
    %1847 = vmatprep.subr.mxu0 %v1798
    %1848 = vmatpush1.msra.mxu0 %v1797
    %1849 = vmatprep.subr.mxu0 %v1796
    %1850 = vmatpush1.msra.mxu0 %v1795
    %1851 = vmatprep.subr.mxu0 %v1794
    %1852 = vmatpush1.msra.mxu0 %v1793
    %1853 = vmatprep.subr.mxu0 %v1792
    %1854 = vmatpush1.msra.mxu0 %v1791
    %1855 = vmatprep.subr.mxu0 0.0
    %1856 = vmatpush2.msra.mxu0 0.0
    %1857 = vmatprep.subr.mxu0 0.0
    %1858 = vmatpush2.msra.mxu0 0.0
    %1859 = vmatprep.subr.mxu0 0.0
    %1860 = vmatpush2.msra.mxu0 0.0
    %1861 = vmatprep.subr.mxu0 0.0
    %1862 = vmatpush2.msra.mxu0 0.0
    %1863 = vmatprep.subr.mxu0 0.0
    %1864 = vmatpush2.msra.mxu0 0.0
    %1865 = vmatprep.subr.mxu0 0.0
    %1866 = vmatpush2.msra.mxu0 0.0
    %1867 = vmatprep.subr.mxu0 0.0
    %1868 = vmatpush2.msra.mxu0 0.0
    %1869 = vmatprep.subr.mxu0 0.0
    %1870 = vmatpush2.msra.mxu0 0.0
    %1871 = vmatprep.subr.mxu0 0.0
    %1872 = vmatpush2.msra.mxu0 0.0
    %1873 = vmatprep.subr.mxu0 0.0
    %1874 = vmatpush2.msra.mxu0 0.0
    %1875 = vmatprep.subr.mxu0 0.0
    %1876 = vmatpush2.msra.mxu0 0.0
    %1877 = vmatprep.subr.mxu0 0.0
    %1878 = vmatpush2.msra.mxu0 0.0
    %1879 = vmatprep.subr.mxu0 0.0
    %1880 = vmatpush2.msra.mxu0 0.0
    %1881 = vmatprep.subr.mxu0 0.0
    %1882 = vmatpush2.msra.mxu0 0.0
    %1883 = vmatprep.subr.mxu0 0.0
    %1884 = vmatpush2.msra.mxu0 0.0
    %1885 = vmatprep.subr.mxu0 0.0
    %1886 = vmatpush2.msra.mxu0 0.0
    %1887 = vmatprep.mubr.f32.mxu0 0.0
    %1888 = vmatmul.mubr.f32.gmra.mxu0 %v1684
    %v1889 = vpop.f32.mrf.mxu0
    %v1890 = vadd.f32 0.0, %v1889
    %v1891 = vpop.f32.mrf.mxu0
    %v1892 = vadd.f32 0.0, %v1891
    %1893 = vdwg.mxu0
    %v1895 = vsel %vm190, %v1786, 0
    %1897 = vmatprep.subr.mxu0 0.0
    %1898 = vmatpush1.msra.mxu0 0.0
    %1899 = vmatprep.subr.mxu0 0.0
    %1900 = vmatpush1.msra.mxu0 0.0
    %1901 = vmatprep.subr.mxu0 0.0
    %1902 = vmatpush1.msra.mxu0 0.0
    %1903 = vmatprep.subr.mxu0 0.0
    %1904 = vmatpush1.msra.mxu0 0.0
    %1905 = vmatprep.subr.mxu0 0.0
    %1906 = vmatpush1.msra.mxu0 0.0
    %1907 = vmatprep.subr.mxu0 0.0
    %1908 = vmatpush1.msra.mxu0 0.0
    %1909 = vmatprep.subr.mxu0 0.0
    %1910 = vmatpush1.msra.mxu0 0.0
    %1911 = vmatprep.subr.mxu0 0.0
    %1912 = vmatpush1.msra.mxu0 0.0
    %1913 = vmatprep.subr.mxu0 0.0
    %1914 = vmatpush1.msra.mxu0 0.0
    %1915 = vmatprep.subr.mxu0 0.0
    %1916 = vmatpush1.msra.mxu0 0.0
    %1917 = vmatprep.subr.mxu0 0.0
    %1918 = vmatpush1.msra.mxu0 0.0
    %1919 = vmatprep.subr.mxu0 0.0
    %1920 = vmatpush1.msra.mxu0 0.0
    %1921 = vmatprep.subr.mxu0 0.0
    %1922 = vmatpush1.msra.mxu0 0.0
    %1923 = vmatprep.subr.mxu0 0.0
    %1924 = vmatpush1.msra.mxu0 0.0
    %1925 = vmatprep.subr.mxu0 %v1790
    %1926 = vmatpush1.msra.mxu0 %v1789
    %1927 = vmatprep.subr.mxu0 %v1788
    %1928 = vmatpush1.msra.mxu0 %v1787
    %1929 = vmatprep.subr.mxu0 0.0
    %1930 = vmatpush2.msra.mxu0 0.0
    %1931 = vmatprep.subr.mxu0 0.0
    %1932 = vmatpush2.msra.mxu0 0.0
    %1933 = vmatprep.subr.mxu0 0.0
    %1934 = vmatpush2.msra.mxu0 0.0
    %1935 = vmatprep.subr.mxu0 0.0
    %1936 = vmatpush2.msra.mxu0 0.0
    %1937 = vmatprep.subr.mxu0 0.0
    %1938 = vmatpush2.msra.mxu0 0.0
    %1939 = vmatprep.subr.mxu0 0.0
    %1940 = vmatpush2.msra.mxu0 0.0
    %1941 = vmatprep.subr.mxu0 0.0
    %1942 = vmatpush2.msra.mxu0 0.0
    %1943 = vmatprep.subr.mxu0 0.0
    %1944 = vmatpush2.msra.mxu0 0.0
    %1945 = vmatprep.subr.mxu0 0.0
    %1946 = vmatpush2.msra.mxu0 0.0
    %1947 = vmatprep.subr.mxu0 0.0
    %1948 = vmatpush2.msra.mxu0 0.0
    %1949 = vmatprep.subr.mxu0 0.0
    %1950 = vmatpush2.msra.mxu0 0.0
    %1951 = vmatprep.subr.mxu0 0.0
    %1952 = vmatpush2.msra.mxu0 0.0
    %1953 = vmatprep.subr.mxu0 0.0
    %1954 = vmatpush2.msra.mxu0 0.0
    %1955 = vmatprep.subr.mxu0 0.0
    %1956 = vmatpush2.msra.mxu0 0.0
    %1957 = vmatprep.subr.mxu0 0.0
    %1958 = vmatpush2.msra.mxu0 0.0
    %1959 = vmatprep.subr.mxu0 0.0
    %1960 = vmatpush2.msra.mxu0 0.0
    %1961 = vmatprep.mubr.f32.mxu0 0.0
    %1962 = vmatmul.mubr.f32.gmra.mxu0 %v1895
    %v1963 = vpop.f32.mrf.mxu0
    %v1964 = vadd.f32 %v1890, %v1963
    %v1965 = vpop.f32.mrf.mxu0
    %v1966 = vadd.f32 %v1892, %v1965
    %1967 = vdwg.mxu0
    %v1968 = vadd.f32 %v1964, %v67
    %v1969 = vadd.f32 %v1966, %v71
    %v1970 = vld [vmem:[#allocation4] sm:$0xff]
    %v1971 = vld [vmem:[#allocation4 + $0x8] sm:$0xff]
    %v1972 = vld [vmem:[#allocation4 + $0x10] sm:$0xff]
    %v1973 = vld [vmem:[#allocation4 + $0x18] sm:$0xff]
    %v1974 = vld [vmem:[#allocation4 + $0x20] sm:$0xff]
    %v1975 = vld [vmem:[#allocation4 + $0x28] sm:$0xff]
    %v1976 = vld [vmem:[#allocation4 + $0x30] sm:$0xff]
    %v1977 = vld [vmem:[#allocation4 + $0x38] sm:$0xff]
    %v1978 = vld [vmem:[#allocation4 + $0x40] sm:$0xff]
    %v1979 = vld [vmem:[#allocation4 + $0x48] sm:$0xff]
    %v1980 = vld [vmem:[#allocation4 + $0x50] sm:$0xff]
    %v1981 = vld [vmem:[#allocation4 + $0x58] sm:$0xff]
    %v1982 = vld [vmem:[#allocation4 + $0x60] sm:$0xff]
    %v1983 = vld [vmem:[#allocation4 + $0x68] sm:$0xff]
    %v1984 = vld [vmem:[#allocation4 + $0x70] sm:$0xff]
    %v1985 = vld [vmem:[#allocation4 + $0x78] sm:$0xff]
    %1986 = vmatprep.subr.mxu0 0.0
    %1987 = vmatpush1.msra.mxu0 %v1985
    %1988 = vmatprep.subr.mxu0 0.0
    %1989 = vmatpush1.msra.mxu0 %v1984
    %1990 = vmatprep.subr.mxu0 0.0
    %1991 = vmatpush1.msra.mxu0 %v1983
    %1992 = vmatprep.subr.mxu0 0.0
    %1993 = vmatpush1.msra.mxu0 %v1982
    %1994 = vmatprep.subr.mxu0 0.0
    %1995 = vmatpush1.msra.mxu0 %v1981
    %1996 = vmatprep.subr.mxu0 0.0
    %1997 = vmatpush1.msra.mxu0 %v1980
    %1998 = vmatprep.subr.mxu0 0.0
    %1999 = vmatpush1.msra.mxu0 %v1979
    %2000 = vmatprep.subr.mxu0 0.0
    %2001 = vmatpush1.msra.mxu0 %v1978
    %2002 = vmatprep.subr.mxu0 0.0
    %2003 = vmatpush1.msra.mxu0 %v1977
    %2004 = vmatprep.subr.mxu0 0.0
    %2005 = vmatpush1.msra.mxu0 %v1976
    %2006 = vmatprep.subr.mxu0 0.0
    %2007 = vmatpush1.msra.mxu0 %v1975
    %2008 = vmatprep.subr.mxu0 0.0
    %2009 = vmatpush1.msra.mxu0 %v1974
    %2010 = vmatprep.subr.mxu0 0.0
    %2011 = vmatpush1.msra.mxu0 %v1973
    %2012 = vmatprep.subr.mxu0 0.0
    %2013 = vmatpush1.msra.mxu0 %v1972
    %2014 = vmatprep.subr.mxu0 0.0
    %2015 = vmatpush1.msra.mxu0 %v1971
    %2016 = vmatprep.subr.mxu0 0.0
    %2017 = vmatpush1.msra.mxu0 %v1970
    %2018 = vmatprep.subr.mxu0 0.0
    %2019 = vmatpush2.msra.mxu0 0.0
    %2020 = vmatprep.subr.mxu0 0.0
    %2021 = vmatpush2.msra.mxu0 0.0
    %2022 = vmatprep.subr.mxu0 0.0
    %2023 = vmatpush2.msra.mxu0 0.0
    %2024 = vmatprep.subr.mxu0 0.0
    %2025 = vmatpush2.msra.mxu0 0.0
    %2026 = vmatprep.subr.mxu0 0.0
    %2027 = vmatpush2.msra.mxu0 0.0
    %2028 = vmatprep.subr.mxu0 0.0
    %2029 = vmatpush2.msra.mxu0 0.0
    %2030 = vmatprep.subr.mxu0 0.0
    %2031 = vmatpush2.msra.mxu0 0.0
    %2032 = vmatprep.subr.mxu0 0.0
    %2033 = vmatpush2.msra.mxu0 0.0
    %2034 = vmatprep.subr.mxu0 0.0
    %2035 = vmatpush2.msra.mxu0 0.0
    %2036 = vmatprep.subr.mxu0 0.0
    %2037 = vmatpush2.msra.mxu0 0.0
    %2038 = vmatprep.subr.mxu0 0.0
    %2039 = vmatpush2.msra.mxu0 0.0
    %2040 = vmatprep.subr.mxu0 0.0
    %2041 = vmatpush2.msra.mxu0 0.0
    %2042 = vmatprep.subr.mxu0 0.0
    %2043 = vmatpush2.msra.mxu0 0.0
    %2044 = vmatprep.subr.mxu0 0.0
    %2045 = vmatpush2.msra.mxu0 0.0
    %2046 = vmatprep.subr.mxu0 0.0
    %2047 = vmatpush2.msra.mxu0 0.0
    %2048 = vmatprep.subr.mxu0 0.0
    %2049 = vmatpush2.msra.mxu0 0.0
    %2050 = vmatprep.mubr.f32.mxu0 0.0
    %2051 = vmatmul.mubr.f32.gmra.mxu0 %v1969
    %v2052 = vpop.f32.mrf.mxu0
    %v2053 = vadd.f32 %v79, %v2052
    %v2054 = vpop.f32.mrf.mxu0
    %2055 = vdwg.mxu0
    %2056 = vmax.xlane.f32.xlu0 %v2053
    %v2057 = vpop.xlane.xlu0 %2056
    %v2058 = vsub.f32 %v2053, %v2057
    %v2059 = vmul.f32 %v2058, 1.442695
    %v2060 = vpow.pop %v2059
    %2061 = vadd.xlane.f32.xlu0 %v2060
    %v2062 = vpop.xlane.xlu0 %2061
    %v2063 = vlog2.pop %v2062
    %v2064 = vmul.f32 %v2063, 0.6931472
    %v2065 = vadd.f32 %v2064, %v2057
    %v2066 = vsub.f32 %v2053, %v2065
    %s2067 = scalar_lea.vmem %s7, 48
    %2068 = vst [vmem:[%s2067] sm:$0xff] %v2066
    %s2069 = scalar_lea.vmem %s0, 56
    %v2070 = vld [vmem:[%s2069] sm:$0xff]
    %v2071 = vld [vmem:[%s2] sm:$0xff]
    %v2072 = vld [vmem:[%s2 + $0x8] sm:$0xff]
    %v2073 = vld [vmem:[%s2 + $0x10] sm:$0xff]
    %v2074 = vld [vmem:[%s2 + $0x18] sm:$0xff]
    %v2075 = vld [vmem:[#allocation2] sm:$0xff]
    %v2076 = vld [vmem:[#allocation2 + $0x8] sm:$0xff]
    %v2077 = vld [vmem:[#allocation2 + $0x10] sm:$0xff]
    %v2078 = vld [vmem:[#allocation2 + $0x18] sm:$0xff]
    %v2079 = vld [vmem:[#allocation2 + $0x20] sm:$0xff]
    %v2080 = vld [vmem:[#allocation2 + $0x28] sm:$0xff]
    %v2081 = vld [vmem:[#allocation2 + $0x30] sm:$0xff]
    %v2082 = vld [vmem:[#allocation2 + $0x38] sm:$0xff]
    %v2083 = vld [vmem:[#allocation2 + $0x40] sm:$0xff]
    %v2084 = vld [vmem:[#allocation2 + $0x48] sm:$0xff]
    %v2085 = vld [vmem:[#allocation2 + $0x50] sm:$0xff]
    %v2086 = vld [vmem:[#allocation2 + $0x58] sm:$0xff]
    %v2087 = vld [vmem:[#allocation2 + $0x60] sm:$0xff]
    %v2088 = vld [vmem:[#allocation2 + $0x68] sm:$0xff]
    %v2089 = vld [vmem:[#allocation2 + $0x70] sm:$0xff]
    %v2090 = vld [vmem:[#allocation2 + $0x78] sm:$0xff]
    %v2091 = vld [vmem:[#allocation2 + $0x80] sm:$0xff]
    %v2092 = vld [vmem:[#allocation2 + $0x88] sm:$0xff]
    %v2093 = vld [vmem:[#allocation2 + $0x90] sm:$0xff]
    %v2094 = vld [vmem:[#allocation2 + $0x98] sm:$0xff]
    %v2095 = vld [vmem:[#allocation2 + $0xa0] sm:$0xff]
    %v2096 = vld [vmem:[#allocation2 + $0xa8] sm:$0xff]
    %v2097 = vld [vmem:[#allocation2 + $0xb0] sm:$0xff]
    %v2098 = vld [vmem:[#allocation2 + $0xb8] sm:$0xff]
    %v2099 = vld [vmem:[#allocation2 + $0xc0] sm:$0xff]
    %v2100 = vld [vmem:[#allocation2 + $0xc8] sm:$0xff]
    %v2101 = vld [vmem:[#allocation2 + $0xd0] sm:$0xff]
    %v2102 = vld [vmem:[#allocation2 + $0xd8] sm:$0xff]
    %v2103 = vld [vmem:[#allocation2 + $0xe0] sm:$0xff]
    %v2104 = vld [vmem:[#allocation2 + $0xe8] sm:$0xff]
    %v2105 = vld [vmem:[#allocation2 + $0xf0] sm:$0xff]
    %v2106 = vld [vmem:[#allocation2 + $0xf8] sm:$0xff]
    %2107 = vmatprep.subr.mxu0 %v2106
    %2108 = vmatpush1.msra.mxu0 %v2105
    %2109 = vmatprep.subr.mxu0 %v2104
    %2110 = vmatpush1.msra.mxu0 %v2103
    %2111 = vmatprep.subr.mxu0 %v2102
    %2112 = vmatpush1.msra.mxu0 %v2101
    %2113 = vmatprep.subr.mxu0 %v2100
    %2114 = vmatpush1.msra.mxu0 %v2099
    %2115 = vmatprep.subr.mxu0 %v2098
    %2116 = vmatpush1.msra.mxu0 %v2097
    %2117 = vmatprep.subr.mxu0 %v2096
    %2118 = vmatpush1.msra.mxu0 %v2095
    %2119 = vmatprep.subr.mxu0 %v2094
    %2120 = vmatpush1.msra.mxu0 %v2093
    %2121 = vmatprep.subr.mxu0 %v2092
    %2122 = vmatpush1.msra.mxu0 %v2091
    %2123 = vmatprep.subr.mxu0 %v2090
    %2124 = vmatpush1.msra.mxu0 %v2089
    %2125 = vmatprep.subr.mxu0 %v2088
    %2126 = vmatpush1.msra.mxu0 %v2087
    %2127 = vmatprep.subr.mxu0 %v2086
    %2128 = vmatpush1.msra.mxu0 %v2085
    %2129 = vmatprep.subr.mxu0 %v2084
    %2130 = vmatpush1.msra.mxu0 %v2083
    %2131 = vmatprep.subr.mxu0 %v2082
    %2132 = vmatpush1.msra.mxu0 %v2081
    %2133 = vmatprep.subr.mxu0 %v2080
    %2134 = vmatpush1.msra.mxu0 %v2079
    %2135 = vmatprep.subr.mxu0 %v2078
    %2136 = vmatpush1.msra.mxu0 %v2077
    %2137 = vmatprep.subr.mxu0 %v2076
    %2138 = vmatpush1.msra.mxu0 %v2075
    %2139 = vmatprep.subr.mxu0 0.0
    %2140 = vmatpush2.msra.mxu0 0.0
    %2141 = vmatprep.subr.mxu0 0.0
    %2142 = vmatpush2.msra.mxu0 0.0
    %2143 = vmatprep.subr.mxu0 0.0
    %2144 = vmatpush2.msra.mxu0 0.0
    %2145 = vmatprep.subr.mxu0 0.0
    %2146 = vmatpush2.msra.mxu0 0.0
    %2147 = vmatprep.subr.mxu0 0.0
    %2148 = vmatpush2.msra.mxu0 0.0
    %2149 = vmatprep.subr.mxu0 0.0
    %2150 = vmatpush2.msra.mxu0 0.0
    %2151 = vmatprep.subr.mxu0 0.0
    %2152 = vmatpush2.msra.mxu0 0.0
    %2153 = vmatprep.subr.mxu0 0.0
    %2154 = vmatpush2.msra.mxu0 0.0
    %2155 = vmatprep.subr.mxu0 0.0
    %2156 = vmatpush2.msra.mxu0 0.0
    %2157 = vmatprep.subr.mxu0 0.0
    %2158 = vmatpush2.msra.mxu0 0.0
    %2159 = vmatprep.subr.mxu0 0.0
    %2160 = vmatpush2.msra.mxu0 0.0
    %2161 = vmatprep.subr.mxu0 0.0
    %2162 = vmatpush2.msra.mxu0 0.0
    %2163 = vmatprep.subr.mxu0 0.0
    %2164 = vmatpush2.msra.mxu0 0.0
    %2165 = vmatprep.subr.mxu0 0.0
    %2166 = vmatpush2.msra.mxu0 0.0
    %2167 = vmatprep.subr.mxu0 0.0
    %2168 = vmatpush2.msra.mxu0 0.0
    %2169 = vmatprep.subr.mxu0 0.0
    %2170 = vmatpush2.msra.mxu0 0.0
    %2171 = vmatprep.mubr.f32.mxu0 0.0
    %2172 = vmatmul.mubr.f32.gmra.mxu0 %v1968
    %v2173 = vpop.f32.mrf.mxu0
    %v2174 = vadd.f32 0.0, %v2173
    %v2175 = vpop.f32.mrf.mxu0
    %v2176 = vadd.f32 0.0, %v2175
    %2177 = vdwg.mxu0
    %v2179 = vsel %vm190, %v2070, 0
    %2181 = vmatprep.subr.mxu0 0.0
    %2182 = vmatpush1.msra.mxu0 0.0
    %2183 = vmatprep.subr.mxu0 0.0
    %2184 = vmatpush1.msra.mxu0 0.0
    %2185 = vmatprep.subr.mxu0 0.0
    %2186 = vmatpush1.msra.mxu0 0.0
    %2187 = vmatprep.subr.mxu0 0.0
    %2188 = vmatpush1.msra.mxu0 0.0
    %2189 = vmatprep.subr.mxu0 0.0
    %2190 = vmatpush1.msra.mxu0 0.0
    %2191 = vmatprep.subr.mxu0 0.0
    %2192 = vmatpush1.msra.mxu0 0.0
    %2193 = vmatprep.subr.mxu0 0.0
    %2194 = vmatpush1.msra.mxu0 0.0
    %2195 = vmatprep.subr.mxu0 0.0
    %2196 = vmatpush1.msra.mxu0 0.0
    %2197 = vmatprep.subr.mxu0 0.0
    %2198 = vmatpush1.msra.mxu0 0.0
    %2199 = vmatprep.subr.mxu0 0.0
    %2200 = vmatpush1.msra.mxu0 0.0
    %2201 = vmatprep.subr.mxu0 0.0
    %2202 = vmatpush1.msra.mxu0 0.0
    %2203 = vmatprep.subr.mxu0 0.0
    %2204 = vmatpush1.msra.mxu0 0.0
    %2205 = vmatprep.subr.mxu0 0.0
    %2206 = vmatpush1.msra.mxu0 0.0
    %2207 = vmatprep.subr.mxu0 0.0
    %2208 = vmatpush1.msra.mxu0 0.0
    %2209 = vmatprep.subr.mxu0 %v2074
    %2210 = vmatpush1.msra.mxu0 %v2073
    %2211 = vmatprep.subr.mxu0 %v2072
    %2212 = vmatpush1.msra.mxu0 %v2071
    %2213 = vmatprep.subr.mxu0 0.0
    %2214 = vmatpush2.msra.mxu0 0.0
    %2215 = vmatprep.subr.mxu0 0.0
    %2216 = vmatpush2.msra.mxu0 0.0
    %2217 = vmatprep.subr.mxu0 0.0
    %2218 = vmatpush2.msra.mxu0 0.0
    %2219 = vmatprep.subr.mxu0 0.0
    %2220 = vmatpush2.msra.mxu0 0.0
    %2221 = vmatprep.subr.mxu0 0.0
    %2222 = vmatpush2.msra.mxu0 0.0
    %2223 = vmatprep.subr.mxu0 0.0
    %2224 = vmatpush2.msra.mxu0 0.0
    %2225 = vmatprep.subr.mxu0 0.0
    %2226 = vmatpush2.msra.mxu0 0.0
    %2227 = vmatprep.subr.mxu0 0.0
    %2228 = vmatpush2.msra.mxu0 0.0
    %2229 = vmatprep.subr.mxu0 0.0
    %2230 = vmatpush2.msra.mxu0 0.0
    %2231 = vmatprep.subr.mxu0 0.0
    %2232 = vmatpush2.msra.mxu0 0.0
    %2233 = vmatprep.subr.mxu0 0.0
    %2234 = vmatpush2.msra.mxu0 0.0
    %2235 = vmatprep.subr.mxu0 0.0
    %2236 = vmatpush2.msra.mxu0 0.0
    %2237 = vmatprep.subr.mxu0 0.0
    %2238 = vmatpush2.msra.mxu0 0.0
    %2239 = vmatprep.subr.mxu0 0.0
    %2240 = vmatpush2.msra.mxu0 0.0
    %2241 = vmatprep.subr.mxu0 0.0
    %2242 = vmatpush2.msra.mxu0 0.0
    %2243 = vmatprep.subr.mxu0 0.0
    %2244 = vmatpush2.msra.mxu0 0.0
    %2245 = vmatprep.mubr.f32.mxu0 0.0
    %2246 = vmatmul.mubr.f32.gmra.mxu0 %v2179
    %v2247 = vpop.f32.mrf.mxu0
    %v2248 = vadd.f32 %v2174, %v2247
    %v2249 = vpop.f32.mrf.mxu0
    %v2250 = vadd.f32 %v2176, %v2249
    %2251 = vdwg.mxu0
    %v2252 = vadd.f32 %v2248, %v67
    %v2253 = vadd.f32 %v2250, %v71
    %v2254 = vld [vmem:[#allocation4] sm:$0xff]
    %v2255 = vld [vmem:[#allocation4 + $0x8] sm:$0xff]
    %v2256 = vld [vmem:[#allocation4 + $0x10] sm:$0xff]
    %v2257 = vld [vmem:[#allocation4 + $0x18] sm:$0xff]
    %v2258 = vld [vmem:[#allocation4 + $0x20] sm:$0xff]
    %v2259 = vld [vmem:[#allocation4 + $0x28] sm:$0xff]
    %v2260 = vld [vmem:[#allocation4 + $0x30] sm:$0xff]
    %v2261 = vld [vmem:[#allocation4 + $0x38] sm:$0xff]
    %v2262 = vld [vmem:[#allocation4 + $0x40] sm:$0xff]
    %v2263 = vld [vmem:[#allocation4 + $0x48] sm:$0xff]
    %v2264 = vld [vmem:[#allocation4 + $0x50] sm:$0xff]
    %v2265 = vld [vmem:[#allocation4 + $0x58] sm:$0xff]
    %v2266 = vld [vmem:[#allocation4 + $0x60] sm:$0xff]
    %v2267 = vld [vmem:[#allocation4 + $0x68] sm:$0xff]
    %v2268 = vld [vmem:[#allocation4 + $0x70] sm:$0xff]
    %v2269 = vld [vmem:[#allocation4 + $0x78] sm:$0xff]
    %2270 = vmatprep.subr.mxu0 0.0
    %2271 = vmatpush1.msra.mxu0 %v2269
    %2272 = vmatprep.subr.mxu0 0.0
    %2273 = vmatpush1.msra.mxu0 %v2268
    %2274 = vmatprep.subr.mxu0 0.0
    %2275 = vmatpush1.msra.mxu0 %v2267
    %2276 = vmatprep.subr.mxu0 0.0
    %2277 = vmatpush1.msra.mxu0 %v2266
    %2278 = vmatprep.subr.mxu0 0.0
    %2279 = vmatpush1.msra.mxu0 %v2265
    %2280 = vmatprep.subr.mxu0 0.0
    %2281 = vmatpush1.msra.mxu0 %v2264
    %2282 = vmatprep.subr.mxu0 0.0
    %2283 = vmatpush1.msra.mxu0 %v2263
    %2284 = vmatprep.subr.mxu0 0.0
    %2285 = vmatpush1.msra.mxu0 %v2262
    %2286 = vmatprep.subr.mxu0 0.0
    %2287 = vmatpush1.msra.mxu0 %v2261
    %2288 = vmatprep.subr.mxu0 0.0
    %2289 = vmatpush1.msra.mxu0 %v2260
    %2290 = vmatprep.subr.mxu0 0.0
    %2291 = vmatpush1.msra.mxu0 %v2259
    %2292 = vmatprep.subr.mxu0 0.0
    %2293 = vmatpush1.msra.mxu0 %v2258
    %2294 = vmatprep.subr.mxu0 0.0
    %2295 = vmatpush1.msra.mxu0 %v2257
    %2296 = vmatprep.subr.mxu0 0.0
    %2297 = vmatpush1.msra.mxu0 %v2256
    %2298 = vmatprep.subr.mxu0 0.0
    %2299 = vmatpush1.msra.mxu0 %v2255
    %2300 = vmatprep.subr.mxu0 0.0
    %2301 = vmatpush1.msra.mxu0 %v2254
    %2302 = vmatprep.subr.mxu0 0.0
    %2303 = vmatpush2.msra.mxu0 0.0
    %2304 = vmatprep.subr.mxu0 0.0
    %2305 = vmatpush2.msra.mxu0 0.0
    %2306 = vmatprep.subr.mxu0 0.0
    %2307 = vmatpush2.msra.mxu0 0.0
    %2308 = vmatprep.subr.mxu0 0.0
    %2309 = vmatpush2.msra.mxu0 0.0
    %2310 = vmatprep.subr.mxu0 0.0
    %2311 = vmatpush2.msra.mxu0 0.0
    %2312 = vmatprep.subr.mxu0 0.0
    %2313 = vmatpush2.msra.mxu0 0.0
    %2314 = vmatprep.subr.mxu0 0.0
    %2315 = vmatpush2.msra.mxu0 0.0
    %2316 = vmatprep.subr.mxu0 0.0
    %2317 = vmatpush2.msra.mxu0 0.0
    %2318 = vmatprep.subr.mxu0 0.0
    %2319 = vmatpush2.msra.mxu0 0.0
    %2320 = vmatprep.subr.mxu0 0.0
    %2321 = vmatpush2.msra.mxu0 0.0
    %2322 = vmatprep.subr.mxu0 0.0
    %2323 = vmatpush2.msra.mxu0 0.0
    %2324 = vmatprep.subr.mxu0 0.0
    %2325 = vmatpush2.msra.mxu0 0.0
    %2326 = vmatprep.subr.mxu0 0.0
    %2327 = vmatpush2.msra.mxu0 0.0
    %2328 = vmatprep.subr.mxu0 0.0
    %2329 = vmatpush2.msra.mxu0 0.0
    %2330 = vmatprep.subr.mxu0 0.0
    %2331 = vmatpush2.msra.mxu0 0.0
    %2332 = vmatprep.subr.mxu0 0.0
    %2333 = vmatpush2.msra.mxu0 0.0
    %2334 = vmatprep.mubr.f32.mxu0 0.0
    %2335 = vmatmul.mubr.f32.gmra.mxu0 %v2253
    %v2336 = vpop.f32.mrf.mxu0
    %v2337 = vadd.f32 %v79, %v2336
    %v2338 = vpop.f32.mrf.mxu0
    %2339 = vdwg.mxu0
    %2340 = vmax.xlane.f32.xlu0 %v2337
    %v2341 = vpop.xlane.xlu0 %2340
    %v2342 = vsub.f32 %v2337, %v2341
    %v2343 = vmul.f32 %v2342, 1.442695
    %v2344 = vpow.pop %v2343
    %2345 = vadd.xlane.f32.xlu0 %v2344
    %v2346 = vpop.xlane.xlu0 %2345
    %v2347 = vlog2.pop %v2346
    %v2348 = vmul.f32 %v2347, 0.6931472
    %v2349 = vadd.f32 %v2348, %v2341
    %v2350 = vsub.f32 %v2337, %v2349
    %s2351 = scalar_lea.vmem %s7, 56
    %2352 = vst [vmem:[%s2351] sm:$0xff] %v2350
    %2353 = vst [vmem:[%s8] sm:$0xff] %v2252
    // Predicated region
    $region42: #{rnn_multi_1layer_sequence.1} parent=1 // pred_check
      _
    $region43: #{rnn_multi_1layer_sequence.1} parent=1 // pred_check_branch
      %2355 = sbr.rel (0) target = $region45
    $region44: #{rnn_multi_1layer_sequence.1} parent=1 // pred_region
      _
    $region45: #{rnn_multi_1layer_sequence.1} parent=1 // pred_fallthru
      _
    // Predicated region
    $region46: #{rnn_multi_1layer_sequence.1} parent=1 // pred_check
      _
    $region47: #{rnn_multi_1layer_sequence.1} parent=1 // pred_check_branch
      %2357 = sbr.rel (0) target = $region49
    $region48: #{rnn_multi_1layer_sequence.1} parent=1 // pred_region
      _
    $region49: #{rnn_multi_1layer_sequence.1} parent=1 // pred_fallthru
      _
    // Predicated region
    $region50: #{rnn_multi_1layer_sequence.1} parent=1 // pred_check
      _
    $region51: #{rnn_multi_1layer_sequence.1} parent=1 // pred_check_branch
      %2359 = sbr.rel (0) target = $region53
    $region52: #{rnn_multi_1layer_sequence.1} parent=1 // pred_region
      _
    $region53: #{rnn_multi_1layer_sequence.1} parent=1 // pred_fallthru
      _
    // Predicated region
    $region54: #{rnn_multi_1layer_sequence.1} parent=1 // pred_check
      _
    $region55: #{rnn_multi_1layer_sequence.1} parent=1 // pred_check_branch
      %2361 = sbr.rel (0) target = $region57
    $region56: #{rnn_multi_1layer_sequence.1} parent=1 // pred_region
      _
    $region57: #{rnn_multi_1layer_sequence.1} parent=1 // pred_fallthru
      _
    %2362 = vsyncpa [#allocation3], 1
    %2363 = vsyncpa [#allocation5], 1

</llo_original>
